<compile_context>
chip_gen: v7x
topology: tpu7x:2x2x1
jax: 0.10.0
libtpu: 0.0.40
codegen_flags: <defaults>
</compile_context>

<pallas_src>
import jax
import jax.numpy as jnp
from jax import lax
from jax.experimental import pallas as pl
from jax.experimental.pallas import tpu as pltpu

EPS = 1e-3
LANE = 128


def _round_up(x, m):
    return (x + m - 1) // m * m


def _pick_spatial_tile(P, max_tile=128):
    """Largest divisor of P that is <= max_tile and sublane-aligned, else P."""
    if P <= max_tile:
        return P
    for d in range(max_tile, 0, -1):
        if P % d == 0 and d % 8 == 0:
            return d
    return P


# ---------------------------------------------------------------------------
# Pallas kernels
# ---------------------------------------------------------------------------
def _matmul_bias_relu_kernel(a_ref, w_ref, b_ref, o_ref):
    """Fused conv tile: out = relu(A @ W + b), taps folded into contraction.

    a_ref: (1, TP, Kc)   bf16  im2col activations (Kc = K*K*Cin)
    w_ref: (Kc, TCo)     bf16  BN-scale-folded weights
    b_ref: (1, TCo)      f32   BN bias
    o_ref: (1, TP, TCo)  f32
    """
    acc = jnp.dot(a_ref[0], w_ref[...], preferred_element_type=jnp.float32)
    o_ref[0] = jnp.maximum(acc + b_ref[...], 0.0).astype(o_ref.dtype)


def _make_maxpool_kernel(k, s):
    """k x k / stride-s max pool over stride-parity planes (read input once)."""
    def kernel(xq_ref, o_ref):
        # xq_ref: (1, s*s, Hq, Wq, C)   -inf padded parity planes
        # o_ref : (1, Ho, Wo, C)
        Ho, Wo = o_ref.shape[1], o_ref.shape[2]
        m = None
        for kh in range(k):
            for kw in range(k):
                pi = (kh % s) * s + (kw % s)
                v = xq_ref[0, pi,
                           kh // s:kh // s + Ho,
                           kw // s:kw // s + Wo, :]
                m = v if m is None else jnp.maximum(m, v)
        o_ref[0] = m
    return kernel


# ---------------------------------------------------------------------------
# Wrapper-side layout helpers (pure slicing / reshaping, no compute)
# ---------------------------------------------------------------------------
def _im2col(x, k, s, p, Ho, Wo):
    """(N,H,W,C) -> (N, Ho*Wo, k*k*C); columns ordered (kh, kw, c)."""
    # TODO(synk): move tap extraction in-kernel (parity-plane slices + a VMEM
    # scratch im2col buffer) to avoid the k*k-duplicated operand in HBM.
    N, H, W, C = x.shape
    if k == 1 and s == 1 and p == 0:
        return x.reshape(N, H * W, C)
    xp = jnp.pad(x, ((0, 0), (p, p), (p, p), (0, 0)))
    cols = []
    for kh in range(k):
        for kw in range(k):
            v = lax.slice(xp, (0, kh, kw, 0),
                          (N, kh + s * (Ho - 1) + 1, kw + s * (Wo - 1) + 1, C),
                          (1, s, s, 1))
            cols.append(v.reshape(N, Ho * Wo, C))
    return jnp.concatenate(cols, axis=-1)


# ---------------------------------------------------------------------------
# pallas_call wrappers
# ---------------------------------------------------------------------------
def conv_bn_relu(x, prm, k, s, p):
    """BasicConv2d: conv(no bias) + BN(eps=1e-3, inference) + ReLU. x is NHWC."""
    w, gamma, beta, mean, var = (prm["w"], prm["gamma"], prm["beta"],
                                 prm["mean"], prm["var"])
    N, H, W, Cin = x.shape
    Cout = w.shape[0]
    Ho = (H + 2 * p - k) // s + 1
    Wo = (W + 2 * p - k) // s + 1
    Kc = k * k * Cin
    P = Ho * Wo

    # Fold BN into the weights (scale) and a bias vector.
    scale = gamma * lax.rsqrt(var + EPS)                            # (Cout,)
    bias = beta - mean * scale                                      # (Cout,)
    wk = jnp.transpose(w, (2, 3, 1, 0)).reshape(Kc, Cout) * scale[None, :]

    # Pad Cout to a lane multiple so the kernel's output stores are lane-dense.
    Cop = _round_up(Cout, LANE)
    if Cop != Cout:
        wk = jnp.pad(wk, ((0, 0), (0, Cop - Cout)))
        bias = jnp.pad(bias, (0, Cop - Cout))

    a = _im2col(x, k, s, p, Ho, Wo).astype(jnp.bfloat16)            # (N, P, Kc)
    wk = wk.astype(jnp.bfloat16)                                    # (Kc, Cop)
    bias = bias.reshape(1, Cop).astype(jnp.float32)

    TP = _pick_spatial_tile(P)          # spatial tile (divides P)
    TCo = LANE                          # output-channel tile (Cop % 128 == 0)
    grid = (N, P // TP, Cop // TCo)

    out = pl.pallas_call(
        _matmul_bias_relu_kernel,
        out_shape=jax.ShapeDtypeStruct((N, P, Cop), jnp.float32),
        grid=grid,
        in_specs=[
            pl.BlockSpec((1, TP, Kc), lambda n, pt, ct: (n, pt, 0)),
            pl.BlockSpec((Kc, TCo), lambda n, pt, ct: (0, ct)),
            pl.BlockSpec((1, TCo), lambda n, pt, ct: (0, ct)),
        ],
        out_specs=pl.BlockSpec((1, TP, TCo), lambda n, pt, ct: (n, pt, ct)),
        compiler_params=pltpu.CompilerParams(
            dimension_semantics=("parallel", "parallel", "parallel")),
    )(a, wk, bias)
    return out.reshape(N, Ho, Wo, Cop)[..., :Cout]


def maxpool3x3(x, s):
    """F.max_pool2d(x, kernel_size=3, stride=s, padding=1) in NHWC."""
    N, H, W, C = x.shape
    k, p = 3, 1
    Ho = (H + 2 * p - k) // s + 1
    Wo = (W + 2 * p - k) // s + 1
    Hq = (k - 1) // s + Ho
    Wq = (k - 1) // s + Wo

    xp = jnp.pad(x, ((0, 0), (p, p), (p, p), (0, 0)),
                 constant_values=-jnp.inf)
    # Stride-parity planes: total bytes == input bytes (no 9x tap duplication).
    planes = []
    for a in range(s):
        for b in range(s):
            v = xp[:, a::s, b::s, :][:, :Hq, :Wq, :]
            ph, pw = Hq - v.shape[1], Wq - v.shape[2]
            if ph or pw:
                v = jnp.pad(v, ((0, 0), (0, ph), (0, pw), (0, 0)),
                            constant_values=-jnp.inf)
            planes.append(v)
    xq = jnp.stack(planes, axis=1)                      # (N, s*s, Hq, Wq, C)

    out = pl.pallas_call(
        _make_maxpool_kernel(k, s),
        out_shape=jax.ShapeDtypeStruct((N, Ho, Wo, C), jnp.float32),
        grid=(N,),
        in_specs=[pl.BlockSpec((1, s * s, Hq, Wq, C),
                               lambda n: (n, 0, 0, 0, 0))],
        out_specs=pl.BlockSpec((1, Ho, Wo, C), lambda n: (n, 0, 0, 0)),
        compiler_params=pltpu.CompilerParams(dimension_semantics=("parallel",)),
    )(xq)
    return out


# ---------------------------------------------------------------------------
# InceptionB forward
# ---------------------------------------------------------------------------
def inception_b_forward(x_nchw, params, kernel_size=3, stride=2, padding=1):
    x = jnp.transpose(x_nchw, (0, 2, 3, 1)).astype(jnp.float32)   # NCHW -> NHWC
    branch3x3 = conv_bn_relu(x, params["branch3x3"], kernel_size, stride, padding)
    # TODO(synk): fuse dbl1->dbl2->dbl3 into one pallas_call keeping the 64/96
    # channel intermediates in VMEM, and write all branches directly into
    # channel slabs of the concatenated output instead of jnp.concatenate.
    d = conv_bn_relu(x, params["dbl1"], 1, 1, 0)
    d = conv_bn_relu(d, params["dbl2"], 3, 1, 1)
    d = conv_bn_relu(d, params["dbl3"], 3, stride, padding)
    branch_pool = maxpool3x3(x, stride)
    out = jnp.concatenate([branch3x3, d, branch_pool], axis=-1)    # channel cat
    return jnp.transpose(out, (0, 3, 1, 2))                        # NHWC -> NCHW


# ---------------------------------------------------------------------------
# Deterministic parameter init (BasicConv2d = conv(no bias) + BN(eps=1e-3))
# ---------------------------------------------------------------------------
def init_basic_conv(key, cin, cout, k):
    kw, kg, kb, km, kv = jax.random.split(key, 5)
    return dict(
        w=jax.random.normal(kw, (cout, cin, k, k), jnp.float32) * 0.1,
        gamma=1.0 + 0.1 * jax.random.normal(kg, (cout,), jnp.float32),
        beta=0.1 * jax.random.normal(kb, (cout,), jnp.float32),
        mean=0.1 * jax.random.normal(km, (cout,), jnp.float32),
        var=0.9 + 0.1 * jnp.abs(jax.random.normal(kv, (cout,), jnp.float32)),
    )


# ---------------------------------------------------------------------------
# Pure-JAX fp32 reference (for correctness check)
# ---------------------------------------------------------------------------
def ref_forward(x_nchw, params, kernel_size=3, stride=2, padding=1):
    def cbr(x, prm, s, p):
        y = lax.conv_general_dilated(
            x, jnp.transpose(prm["w"], (2, 3, 1, 0)),
            window_strides=(s, s), padding=[(p, p), (p, p)],
            dimension_numbers=("NHWC", "HWIO", "NHWC"))
        scale = prm["gamma"] * lax.rsqrt(prm["var"] + EPS)
        return jnp.maximum(y * scale + (prm["beta"] - prm["mean"] * scale), 0.0)

    x = jnp.transpose(x_nchw, (0, 2, 3, 1))
    b3 = cbr(x, params["branch3x3"], stride, padding)
    d = cbr(x, params["dbl1"], 1, 0)
    d = cbr(d, params["dbl2"], 1, 1)
    d = cbr(d, params["dbl3"], stride, padding)
    bp = lax.reduce_window(x, -jnp.inf, lax.max, (1, 3, 3, 1),
                           (1, stride, stride, 1),
                           padding=((0, 0), (1, 1), (1, 1), (0, 0)))
    out = jnp.concatenate([b3, d, bp], axis=-1)
    return jnp.transpose(out, (0, 3, 1, 2))


if __name__ == "__main__":
    key = jax.random.PRNGKey(0)
    kx, k1, k2, k3, k4 = jax.random.split(key, 5)

    in_channels = 4
    x = jax.random.normal(kx, (2, in_channels, 16, 16), jnp.float32)  # NCHW

    params = {
        "branch3x3": init_basic_conv(k1, in_channels, 384, 3),
        "dbl1": init_basic_conv(k2, in_channels, 64, 1),
        "dbl2": init_basic_conv(k3, 64, 96, 3),
        "dbl3": init_basic_conv(k4, 96, 96, 3),
    }

    fwd = jax.jit(inception_b_forward)
    out = jax.block_until_ready(fwd(x, params))
    assert out.shape == (2, 384 + 96 + in_channels, 8, 8), out.shape

    ref = jax.block_until_ready(ref_forward(x, params))
    max_err = float(jnp.max(jnp.abs(out - ref)))
    # bf16 matmul operands (fp32 accumulation, K up to 864): expected max abs
    # error is O(1e-2) vs the fp32 reference.
    assert max_err < 5e-2, f"max abs err {max_err}"

    print("KERNEL_OK")
</pallas_src>

<mosaic_0001>
module attributes {stable_mosaic.version = 11 : i64} {
  func.func @_matmul_bias_relu_kernel(%arg0: i32, %arg1: i32, %arg2: i32, %arg3: memref<1x128x4xbf16, #tpu.memory_space<vmem>>, %arg4: memref<4x128xbf16, #tpu.memory_space<vmem>>, %arg5: memref<1x128xf32, #tpu.memory_space<vmem>>, %arg6: memref<1x128x128xf32, #tpu.memory_space<vmem>>) attributes {dimension_semantics = [#tpu.dimension_semantics<parallel>, #tpu.dimension_semantics<parallel>, #tpu.dimension_semantics<parallel>], iteration_bounds = array<i64: 2, 2, 1>, scalar_prefetch = 0 : i64, scratch_operands = 0 : i64, tpu.core_type = #tpu.core_type<tc>, window_params = [{transform_indices = @transform_0, window_bounds = array<i64: 1, 128, 4>}, {transform_indices = @transform_1, window_bounds = array<i64: 4, 128>}, {transform_indices = @transform_2, window_bounds = array<i64: 1, 128>}, {transform_indices = @transform_3, window_bounds = array<i64: 1, 128, 128>}]} {
    %c0 = arith.constant 0 : index
    %c0_0 = arith.constant 0 : index
    %c0_1 = arith.constant 0 : index
    %0 = vector.load %arg3[%c0, %c0_0, %c0_1] : memref<1x128x4xbf16, #tpu.memory_space<vmem>>, vector<1x128x4xbf16>
    %1 = vector.shape_cast %0 : vector<1x128x4xbf16> to vector<128x4xbf16>
    %c0_2 = arith.constant 0 : index
    %c0_3 = arith.constant 0 : index
    %2 = vector.load %arg4[%c0_2, %c0_3] : memref<4x128xbf16, #tpu.memory_space<vmem>>, vector<4x128xbf16>
    %cst = arith.constant dense<0.000000e+00> : vector<128x128xf32>
    %3 = tpu.matmul %1, %2, %cst {dimension_numbers = #tpu.dot_dimension_numbers<[1], [0], [0], [1], [0, 0, 1, 1], [], []>} : vector<128x4xbf16>, vector<4x128xbf16>, vector<128x128xf32> -> vector<128x128xf32>
    %c0_4 = arith.constant 0 : index
    %c0_5 = arith.constant 0 : index
    %4 = vector.load %arg5[%c0_4, %c0_5] : memref<1x128xf32, #tpu.memory_space<vmem>>, vector<1x128xf32>
    %5 = vector.broadcast %4 : vector<1x128xf32> to vector<128x128xf32>
    %6 = arith.addf %3, %5 : vector<128x128xf32>
    %cst_6 = arith.constant 0.000000e+00 : f32
    %7 = vector.broadcast %cst_6 : f32 to vector<128x128xf32>
    %8 = arith.maximumf %6, %7 : vector<128x128xf32>
    %c0_7 = arith.constant 0 : index
    %c0_8 = arith.constant 0 : index
    %c0_9 = arith.constant 0 : index
    %9 = vector.load %arg6[%c0_7, %c0_8, %c0_9] : memref<1x128x128xf32, #tpu.memory_space<vmem>>, vector<1x128x128xf32>
    %10 = vector.shape_cast %9 : vector<1x128x128xf32> to vector<128x128xf32>
    %11 = vector.shape_cast %8 : vector<128x128xf32> to vector<1x128x128xf32>
    tpu.vector_store %arg6[%c0_7, %c0_8, %c0_9], %11 {strides = array<i32>} : memref<1x128x128xf32, #tpu.memory_space<vmem>>, vector<1x128x128xf32>,
    return
  }
  func.func @transform_0(%arg0: i32, %arg1: i32, %arg2: i32) -> (i32, i32, i32) {
    %c0_i32 = arith.constant 0 : i32
    %c0_i32_0 = arith.constant 0 : i32
    return %arg0, %arg1, %c0_i32 : i32, i32, i32
  }
  func.func @transform_1(%arg0: i32, %arg1: i32, %arg2: i32) -> (i32, i32) {
    %c0_i32 = arith.constant 0 : i32
    %c0_i32_0 = arith.constant 0 : i32
    return %c0_i32, %arg2 : i32, i32
  }
  func.func @transform_2(%arg0: i32, %arg1: i32, %arg2: i32) -> (i32, i32) {
    %c0_i32 = arith.constant 0 : i32
    %c0_i32_0 = arith.constant 0 : i32
    return %c0_i32, %arg2 : i32, i32
  }
  func.func @transform_3(%arg0: i32, %arg1: i32, %arg2: i32) -> (i32, i32, i32) {
    %c0_i32 = arith.constant 0 : i32
    return %arg0, %arg1, %arg2 : i32, i32, i32
  }
}

module attributes {stable_mosaic.version = 11 : i64} {
  func.func @_matmul_bias_relu_kernel(%arg0: i32, %arg1: i32, %arg2: i32, %arg3: memref<1x128x576xbf16, #tpu.memory_space<vmem>>, %arg4: memref<576x128xbf16, #tpu.memory_space<vmem>>, %arg5: memref<1x128xf32, #tpu.memory_space<vmem>>, %arg6: memref<1x128x128xf32, #tpu.memory_space<vmem>>) attributes {dimension_semantics = [#tpu.dimension_semantics<parallel>, #tpu.dimension_semantics<parallel>, #tpu.dimension_semantics<parallel>], iteration_bounds = array<i64: 2, 2, 1>, scalar_prefetch = 0 : i64, scratch_operands = 0 : i64, tpu.core_type = #tpu.core_type<tc>, window_params = [{transform_indices = @transform_0, window_bounds = array<i64: 1, 128, 576>}, {transform_indices = @transform_1, window_bounds = array<i64: 576, 128>}, {transform_indices = @transform_2, window_bounds = array<i64: 1, 128>}, {transform_indices = @transform_3, window_bounds = array<i64: 1, 128, 128>}]} {
    %c0 = arith.constant 0 : index
    %c0_0 = arith.constant 0 : index
    %c0_1 = arith.constant 0 : index
    %0 = vector.load %arg3[%c0, %c0_0, %c0_1] : memref<1x128x576xbf16, #tpu.memory_space<vmem>>, vector<1x128x576xbf16>
    %1 = vector.shape_cast %0 : vector<1x128x576xbf16> to vector<128x576xbf16>
    %c0_2 = arith.constant 0 : index
    %c0_3 = arith.constant 0 : index
    %2 = vector.load %arg4[%c0_2, %c0_3] : memref<576x128xbf16, #tpu.memory_space<vmem>>, vector<576x128xbf16>
    %cst = arith.constant dense<0.000000e+00> : vector<128x128xf32>
    %3 = tpu.matmul %1, %2, %cst {dimension_numbers = #tpu.dot_dimension_numbers<[1], [0], [0], [1], [0, 0, 1, 1], [], []>} : vector<128x576xbf16>, vector<576x128xbf16>, vector<128x128xf32> -> vector<128x128xf32>
    %c0_4 = arith.constant 0 : index
    %c0_5 = arith.constant 0 : index
    %4 = vector.load %arg5[%c0_4, %c0_5] : memref<1x128xf32, #tpu.memory_space<vmem>>, vector<1x128xf32>
    %5 = vector.broadcast %4 : vector<1x128xf32> to vector<128x128xf32>
    %6 = arith.addf %3, %5 : vector<128x128xf32>
    %cst_6 = arith.constant 0.000000e+00 : f32
    %7 = vector.broadcast %cst_6 : f32 to vector<128x128xf32>
    %8 = arith.maximumf %6, %7 : vector<128x128xf32>
    %c0_7 = arith.constant 0 : index
    %c0_8 = arith.constant 0 : index
    %c0_9 = arith.constant 0 : index
    %9 = vector.load %arg6[%c0_7, %c0_8, %c0_9] : memref<1x128x128xf32, #tpu.memory_space<vmem>>, vector<1x128x128xf32>
    %10 = vector.shape_cast %9 : vector<1x128x128xf32> to vector<128x128xf32>
    %11 = vector.shape_cast %8 : vector<128x128xf32> to vector<1x128x128xf32>
    tpu.vector_store %arg6[%c0_7, %c0_8, %c0_9], %11 {strides = array<i32>} : memref<1x128x128xf32, #tpu.memory_space<vmem>>, vector<1x128x128xf32>,
    return
  }
  func.func @transform_0(%arg0: i32, %arg1: i32, %arg2: i32) -> (i32, i32, i32) {
    %c0_i32 = arith.constant 0 : i32
    %c0_i32_0 = arith.constant 0 : i32
    return %arg0, %arg1, %c0_i32 : i32, i32, i32
  }
  func.func @transform_1(%arg0: i32, %arg1: i32, %arg2: i32) -> (i32, i32) {
    %c0_i32 = arith.constant 0 : i32
    %c0_i32_0 = arith.constant 0 : i32
    return %c0_i32, %arg2 : i32, i32
  }
  func.func @transform_2(%arg0: i32, %arg1: i32, %arg2: i32) -> (i32, i32) {
    %c0_i32 = arith.constant 0 : i32
    %c0_i32_0 = arith.constant 0 : i32
    return %c0_i32, %arg2 : i32, i32
  }
  func.func @transform_3(%arg0: i32, %arg1: i32, %arg2: i32) -> (i32, i32, i32) {
    %c0_i32 = arith.constant 0 : i32
    return %arg0, %arg1, %arg2 : i32, i32, i32
  }
}

module attributes {stable_mosaic.version = 11 : i64} {
  func.func @_matmul_bias_relu_kernel(%arg0: i32, %arg1: i32, %arg2: i32, %arg3: memref<1x64x864xbf16, #tpu.memory_space<vmem>>, %arg4: memref<864x128xbf16, #tpu.memory_space<vmem>>, %arg5: memref<1x128xf32, #tpu.memory_space<vmem>>, %arg6: memref<1x64x128xf32, #tpu.memory_space<vmem>>) attributes {dimension_semantics = [#tpu.dimension_semantics<parallel>, #tpu.dimension_semantics<parallel>, #tpu.dimension_semantics<parallel>], iteration_bounds = array<i64: 2, 1, 1>, scalar_prefetch = 0 : i64, scratch_operands = 0 : i64, tpu.core_type = #tpu.core_type<tc>, window_params = [{transform_indices = @transform_0, window_bounds = array<i64: 1, 64, 864>}, {transform_indices = @transform_1, window_bounds = array<i64: 864, 128>}, {transform_indices = @transform_2, window_bounds = array<i64: 1, 128>}, {transform_indices = @transform_3, window_bounds = array<i64: 1, 64, 128>}]} {
    %c0 = arith.constant 0 : index
    %c0_0 = arith.constant 0 : index
    %c0_1 = arith.constant 0 : index
    %0 = vector.load %arg3[%c0, %c0_0, %c0_1] : memref<1x64x864xbf16, #tpu.memory_space<vmem>>, vector<1x64x864xbf16>
    %1 = vector.shape_cast %0 : vector<1x64x864xbf16> to vector<64x864xbf16>
    %c0_2 = arith.constant 0 : index
    %c0_3 = arith.constant 0 : index
    %2 = vector.load %arg4[%c0_2, %c0_3] : memref<864x128xbf16, #tpu.memory_space<vmem>>, vector<864x128xbf16>
    %cst = arith.constant dense<0.000000e+00> : vector<64x128xf32>
    %3 = tpu.matmul %1, %2, %cst {dimension_numbers = #tpu.dot_dimension_numbers<[1], [0], [0], [1], [0, 0, 1, 1], [], []>} : vector<64x864xbf16>, vector<864x128xbf16>, vector<64x128xf32> -> vector<64x128xf32>
    %c0_4 = arith.constant 0 : index
    %c0_5 = arith.constant 0 : index
    %4 = vector.load %arg5[%c0_4, %c0_5] : memref<1x128xf32, #tpu.memory_space<vmem>>, vector<1x128xf32>
    %5 = vector.broadcast %4 : vector<1x128xf32> to vector<64x128xf32>
    %6 = arith.addf %3, %5 : vector<64x128xf32>
    %cst_6 = arith.constant 0.000000e+00 : f32
    %7 = vector.broadcast %cst_6 : f32 to vector<64x128xf32>
    %8 = arith.maximumf %6, %7 : vector<64x128xf32>
    %c0_7 = arith.constant 0 : index
    %c0_8 = arith.constant 0 : index
    %c0_9 = arith.constant 0 : index
    %9 = vector.load %arg6[%c0_7, %c0_8, %c0_9] : memref<1x64x128xf32, #tpu.memory_space<vmem>>, vector<1x64x128xf32>
    %10 = vector.shape_cast %9 : vector<1x64x128xf32> to vector<64x128xf32>
    %11 = vector.shape_cast %8 : vector<64x128xf32> to vector<1x64x128xf32>
    tpu.vector_store %arg6[%c0_7, %c0_8, %c0_9], %11 {strides = array<i32>} : memref<1x64x128xf32, #tpu.memory_space<vmem>>, vector<1x64x128xf32>,
    return
  }
  func.func @transform_0(%arg0: i32, %arg1: i32, %arg2: i32) -> (i32, i32, i32) {
    %c0_i32 = arith.constant 0 : i32
    %c0_i32_0 = arith.constant 0 : i32
    return %arg0, %arg1, %c0_i32 : i32, i32, i32
  }
  func.func @transform_1(%arg0: i32, %arg1: i32, %arg2: i32) -> (i32, i32) {
    %c0_i32 = arith.constant 0 : i32
    %c0_i32_0 = arith.constant 0 : i32
    return %c0_i32, %arg2 : i32, i32
  }
  func.func @transform_2(%arg0: i32, %arg1: i32, %arg2: i32) -> (i32, i32) {
    %c0_i32 = arith.constant 0 : i32
    %c0_i32_0 = arith.constant 0 : i32
    return %c0_i32, %arg2 : i32, i32
  }
  func.func @transform_3(%arg0: i32, %arg1: i32, %arg2: i32) -> (i32, i32, i32) {
    %c0_i32 = arith.constant 0 : i32
    return %arg0, %arg1, %arg2 : i32, i32, i32
  }
}

module attributes {stable_mosaic.version = 11 : i64} {
  func.func @_matmul_bias_relu_kernel(%arg0: i32, %arg1: i32, %arg2: i32, %arg3: memref<1x64x36xbf16, #tpu.memory_space<vmem>>, %arg4: memref<36x128xbf16, #tpu.memory_space<vmem>>, %arg5: memref<1x128xf32, #tpu.memory_space<vmem>>, %arg6: memref<1x64x128xf32, #tpu.memory_space<vmem>>) attributes {dimension_semantics = [#tpu.dimension_semantics<parallel>, #tpu.dimension_semantics<parallel>, #tpu.dimension_semantics<parallel>], iteration_bounds = array<i64: 2, 1, 3>, scalar_prefetch = 0 : i64, scratch_operands = 0 : i64, tpu.core_type = #tpu.core_type<tc>, window_params = [{transform_indices = @transform_0, window_bounds = array<i64: 1, 64, 36>}, {transform_indices = @transform_1, window_bounds = array<i64: 36, 128>}, {transform_indices = @transform_2, window_bounds = array<i64: 1, 128>}, {transform_indices = @transform_3, window_bounds = array<i64: 1, 64, 128>}]} {
    %c0 = arith.constant 0 : index
    %c0_0 = arith.constant 0 : index
    %c0_1 = arith.constant 0 : index
    %0 = vector.load %arg3[%c0, %c0_0, %c0_1] : memref<1x64x36xbf16, #tpu.memory_space<vmem>>, vector<1x64x36xbf16>
    %1 = vector.shape_cast %0 : vector<1x64x36xbf16> to vector<64x36xbf16>
    %c0_2 = arith.constant 0 : index
    %c0_3 = arith.constant 0 : index
    %2 = vector.load %arg4[%c0_2, %c0_3] : memref<36x128xbf16, #tpu.memory_space<vmem>>, vector<36x128xbf16>
    %cst = arith.constant dense<0.000000e+00> : vector<64x128xf32>
    %3 = tpu.matmul %1, %2, %cst {dimension_numbers = #tpu.dot_dimension_numbers<[1], [0], [0], [1], [0, 0, 1, 1], [], []>} : vector<64x36xbf16>, vector<36x128xbf16>, vector<64x128xf32> -> vector<64x128xf32>
    %c0_4 = arith.constant 0 : index
    %c0_5 = arith.constant 0 : index
    %4 = vector.load %arg5[%c0_4, %c0_5] : memref<1x128xf32, #tpu.memory_space<vmem>>, vector<1x128xf32>
    %5 = vector.broadcast %4 : vector<1x128xf32> to vector<64x128xf32>
    %6 = arith.addf %3, %5 : vector<64x128xf32>
    %cst_6 = arith.constant 0.000000e+00 : f32
    %7 = vector.broadcast %cst_6 : f32 to vector<64x128xf32>
    %8 = arith.maximumf %6, %7 : vector<64x128xf32>
    %c0_7 = arith.constant 0 : index
    %c0_8 = arith.constant 0 : index
    %c0_9 = arith.constant 0 : index
    %9 = vector.load %arg6[%c0_7, %c0_8, %c0_9] : memref<1x64x128xf32, #tpu.memory_space<vmem>>, vector<1x64x128xf32>
    %10 = vector.shape_cast %9 : vector<1x64x128xf32> to vector<64x128xf32>
    %11 = vector.shape_cast %8 : vector<64x128xf32> to vector<1x64x128xf32>
    tpu.vector_store %arg6[%c0_7, %c0_8, %c0_9], %11 {strides = array<i32>} : memref<1x64x128xf32, #tpu.memory_space<vmem>>, vector<1x64x128xf32>,
    return
  }
  func.func @transform_0(%arg0: i32, %arg1: i32, %arg2: i32) -> (i32, i32, i32) {
    %c0_i32 = arith.constant 0 : i32
    %c0_i32_0 = arith.constant 0 : i32
    return %arg0, %arg1, %c0_i32 : i32, i32, i32
  }
  func.func @transform_1(%arg0: i32, %arg1: i32, %arg2: i32) -> (i32, i32) {
    %c0_i32 = arith.constant 0 : i32
    %c0_i32_0 = arith.constant 0 : i32
    return %c0_i32, %arg2 : i32, i32
  }
  func.func @transform_2(%arg0: i32, %arg1: i32, %arg2: i32) -> (i32, i32) {
    %c0_i32 = arith.constant 0 : i32
    %c0_i32_0 = arith.constant 0 : i32
    return %c0_i32, %arg2 : i32, i32
  }
  func.func @transform_3(%arg0: i32, %arg1: i32, %arg2: i32) -> (i32, i32, i32) {
    %c0_i32 = arith.constant 0 : i32
    return %arg0, %arg1, %arg2 : i32, i32, i32
  }
}

module attributes {stable_mosaic.version = 11 : i64} {
  func.func @kernel(%arg0: i32, %arg1: memref<1x4x9x9x4xf32, #tpu.memory_space<vmem>>, %arg2: memref<1x8x8x4xf32, #tpu.memory_space<vmem>>) attributes {dimension_semantics = [#tpu.dimension_semantics<parallel>], iteration_bounds = array<i64: 2>, scalar_prefetch = 0 : i64, scratch_operands = 0 : i64, tpu.core_type = #tpu.core_type<tc>, window_params = [{transform_indices = @transform_0, window_bounds = array<i64: 1, 4, 9, 9, 4>}, {transform_indices = @transform_1, window_bounds = array<i64: 1, 8, 8, 4>}]} {
    %c0 = arith.constant 0 : index
    %c0_0 = arith.constant 0 : index
    %c0_1 = arith.constant 0 : index
    %c0_2 = arith.constant 0 : index
    %c0_3 = arith.constant 0 : index
    %0 = vector.load %arg1[%c0, %c0_0, %c0_1, %c0_2, %c0_3] : memref<1x4x9x9x4xf32, #tpu.memory_space<vmem>>, vector<1x1x8x8x4xf32>
    %1 = vector.shape_cast %0 : vector<1x1x8x8x4xf32> to vector<8x8x4xf32>
    %c0_4 = arith.constant 0 : index
    %c1 = arith.constant 1 : index
    %c0_5 = arith.constant 0 : index
    %c0_6 = arith.constant 0 : index
    %c0_7 = arith.constant 0 : index
    %2 = vector.load %arg1[%c0_4, %c1, %c0_5, %c0_6, %c0_7] : memref<1x4x9x9x4xf32, #tpu.memory_space<vmem>>, vector<1x1x8x8x4xf32>
    %3 = vector.shape_cast %2 : vector<1x1x8x8x4xf32> to vector<8x8x4xf32>
    %4 = arith.maximumf %1, %3 : vector<8x8x4xf32>
    %c0_8 = arith.constant 0 : index
    %c0_9 = arith.constant 0 : index
    %c0_10 = arith.constant 0 : index
    %c1_11 = arith.constant 1 : index
    %c0_12 = arith.constant 0 : index
    %5 = vector.load %arg1[%c0_8, %c0_9, %c0_10, %c1_11, %c0_12] : memref<1x4x9x9x4xf32, #tpu.memory_space<vmem>>, vector<1x1x8x8x4xf32>
    %6 = vector.shape_cast %5 : vector<1x1x8x8x4xf32> to vector<8x8x4xf32>
    %7 = arith.maximumf %4, %6 : vector<8x8x4xf32>
    %c0_13 = arith.constant 0 : index
    %c2 = arith.constant 2 : index
    %c0_14 = arith.constant 0 : index
    %c0_15 = arith.constant 0 : index
    %c0_16 = arith.constant 0 : index
    %8 = vector.load %arg1[%c0_13, %c2, %c0_14, %c0_15, %c0_16] : memref<1x4x9x9x4xf32, #tpu.memory_space<vmem>>, vector<1x1x8x8x4xf32>
    %9 = vector.shape_cast %8 : vector<1x1x8x8x4xf32> to vector<8x8x4xf32>
    %10 = arith.maximumf %7, %9 : vector<8x8x4xf32>
    %c0_17 = arith.constant 0 : index
    %c3 = arith.constant 3 : index
    %c0_18 = arith.constant 0 : index
    %c0_19 = arith.constant 0 : index
    %c0_20 = arith.constant 0 : index
    %11 = vector.load %arg1[%c0_17, %c3, %c0_18, %c0_19, %c0_20] : memref<1x4x9x9x4xf32, #tpu.memory_space<vmem>>, vector<1x1x8x8x4xf32>
    %12 = vector.shape_cast %11 : vector<1x1x8x8x4xf32> to vector<8x8x4xf32>
    %13 = arith.maximumf %10, %12 : vector<8x8x4xf32>
    %c0_21 = arith.constant 0 : index
    %c2_22 = arith.constant 2 : index
    %c0_23 = arith.constant 0 : index
    %c1_24 = arith.constant 1 : index
    %c0_25 = arith.constant 0 : index
    %14 = vector.load %arg1[%c0_21, %c2_22, %c0_23, %c1_24, %c0_25] : memref<1x4x9x9x4xf32, #tpu.memory_space<vmem>>, vector<1x1x8x8x4xf32>
    %15 = vector.shape_cast %14 : vector<1x1x8x8x4xf32> to vector<8x8x4xf32>
    %16 = arith.maximumf %13, %15 : vector<8x8x4xf32>
    %c0_26 = arith.constant 0 : index
    %c0_27 = arith.constant 0 : index
    %c1_28 = arith.constant 1 : index
    %c0_29 = arith.constant 0 : index
    %c0_30 = arith.constant 0 : index
    %17 = vector.load %arg1[%c0_26, %c0_27, %c1_28, %c0_29, %c0_30] : memref<1x4x9x9x4xf32, #tpu.memory_space<vmem>>, vector<1x1x8x8x4xf32>
    %18 = vector.shape_cast %17 : vector<1x1x8x8x4xf32> to vector<8x8x4xf32>
    %19 = arith.maximumf %16, %18 : vector<8x8x4xf32>
    %c0_31 = arith.constant 0 : index
    %c1_32 = arith.constant 1 : index
    %c1_33 = arith.constant 1 : index
    %c0_34 = arith.constant 0 : index
    %c0_35 = arith.constant 0 : index
    %20 = vector.load %arg1[%c0_31, %c1_32, %c1_33, %c0_34, %c0_35] : memref<1x4x9x9x4xf32, #tpu.memory_space<vmem>>, vector<1x1x8x8x4xf32>
    %21 = vector.shape_cast %20 : vector<1x1x8x8x4xf32> to vector<8x8x4xf32>
    %22 = arith.maximumf %19, %21 : vector<8x8x4xf32>
    %c0_36 = arith.constant 0 : index
    %c0_37 = arith.constant 0 : index
    %c1_38 = arith.constant 1 : index
    %c1_39 = arith.constant 1 : index
    %c0_40 = arith.constant 0 : index
    %23 = vector.load %arg1[%c0_36, %c0_37, %c1_38, %c1_39, %c0_40] : memref<1x4x9x9x4xf32, #tpu.memory_space<vmem>>, vector<1x1x8x8x4xf32>
    %24 = vector.shape_cast %23 : vector<1x1x8x8x4xf32> to vector<8x8x4xf32>
    %25 = arith.maximumf %22, %24 : vector<8x8x4xf32>
    %c0_41 = arith.constant 0 : index
    %c0_42 = arith.constant 0 : index
    %c0_43 = arith.constant 0 : index
    %c0_44 = arith.constant 0 : index
    %26 = vector.load %arg2[%c0_41, %c0_42, %c0_43, %c0_44] : memref<1x8x8x4xf32, #tpu.memory_space<vmem>>, vector<1x8x8x4xf32>
    %27 = vector.shape_cast %26 : vector<1x8x8x4xf32> to vector<8x8x4xf32>
    %28 = vector.shape_cast %25 : vector<8x8x4xf32> to vector<1x8x8x4xf32>
    tpu.vector_store %arg2[%c0_41, %c0_42, %c0_43, %c0_44], %28 {strides = array<i32>} : memref<1x8x8x4xf32, #tpu.memory_space<vmem>>, vector<1x8x8x4xf32>,
    return
  }
  func.func @transform_0(%arg0: i32) -> (i32, i32, i32, i32, i32) {
    %c0_i32 = arith.constant 0 : i32
    %c0_i32_0 = arith.constant 0 : i32
    %c0_i32_1 = arith.constant 0 : i32
    %c0_i32_2 = arith.constant 0 : i32
    %c0_i32_3 = arith.constant 0 : i32
    return %arg0, %c0_i32, %c0_i32_0, %c0_i32_1, %c0_i32_2 : i32, i32, i32, i32, i32
  }
  func.func @transform_1(%arg0: i32) -> (i32, i32, i32, i32) {
    %c0_i32 = arith.constant 0 : i32
    %c0_i32_0 = arith.constant 0 : i32
    %c0_i32_1 = arith.constant 0 : i32
    %c0_i32_2 = arith.constant 0 : i32
    return %arg0, %c0_i32, %c0_i32_0, %c0_i32_1 : i32, i32, i32, i32
  }
}

</mosaic_0001>

<llo_original>
// kernel: inception_b_forward.6
$region0: #{inception_b_forward.6}
  #allocation0 [shape = 'u32[]', space=smem, size = 0x4, offset = 0x4, fixed_abs, tag = 'smem constant byte address 0x4 - core index']
  #allocation1 [shape = 'u32[144,128]{1,0:T(1,128)}', space=vmem, size = 0x12000, scoped, tag = 'internal scratch']
  %s0 = inlined_call_operand.vmem [shape: bf16[2,256,4], index: 0, kind: input, shape index: {}]
  %s1 = inlined_call_operand.vmem [shape: bf16[4,128], index: 1, kind: input, shape index: {}]
  %s2 = inlined_call_operand.vmem [shape: f32[1,128], index: 2, kind: input, shape index: {}]
  %s3 = inlined_call_operand.vmem [shape: f32[2,256,128], index: 3, kind: output, shape index: {}]
  %s4 = sld [smem:[#allocation0]]
  $region45: #{inception_b_forward.6} parent=0
    _
  %s6 = ssub.s32 1, %s4
  %s7 = scalar_select 0, %s6, %s4
  loop: start=0, step=1, limit=6
  $region2: #{inception_b_forward.6} parent=0 // loop_pre_header
    _
  $region3: #{inception_b_forward.6} parent=0 // loop_header
    %s9 = sphi 0, %s13
    %p10 = scmp.ge.s32.totalorder %s9, 6
    %s16 = sphi 0, %s35
    %s17 = sphi 0, %s31
    %s18 = sphi 0, %s27
    %s19 = sphi 0, %s16
    %s20 = sphi 0, %s17
    %s21 = sphi 0, %s18
    %s22 = sphi 0, %s19
    %s23 = sphi 0, %s20
    %s24 = sphi 0, %s21
    %s40 = sphi 0, %s42
    %s43 = sphi 0, %s40
    %s44 = sphi 0, %s43
    %s60 = sphi 0, %s44
    %s66 = sphi 0, %s68
    %s69 = sphi 0, %s66
    %s70 = sphi 0, %s69
    %s86 = sphi 0, %s70
    %s92 = sphi 0, %s94
    %s95 = sphi 0, %s92
    %s96 = sphi 0, %s95
    %s112 = sphi 0, %s96
    %s122 = sphi 0, %s124
    %s125 = sphi 0, %s122
    %s126 = sphi 0, %s125
    %s142 = sphi 0, %s126
  $region4: #{inception_b_forward.6} parent=0 // loop_header_branch
    %12 = sbr.rel (%p10) target = $region8
  $region5: #{inception_b_forward.6} parent=0 // loop_body
    %s14 = ssub.s32 %s9, 1
    %s15 = ssub.s32 %s9, 2
    %s25 = sadd.s32 1, %s18
    %p26 = scmp.ge.s32.totalorder %s25, 1
    %s27 = scalar_select %p26, 0, %s25
    %s28 = sadd.s32 1, %s17
    %s29 = scalar_select %p26, %s28, %s17
    %p30 = scmp.ge.s32.totalorder %s29, 2
    %s31 = scalar_select %p30, 0, %s29
    %s32 = sadd.s32 1, %s16
    %s33 = scalar_select %p30, %s32, %s16
    %p34 = scmp.ge.s32.totalorder %s33, 2
    %s35 = scalar_select %p34, 0, %s33
    %s36 = ssub.s32 %s16, %s35
    %s37 = ssub.s32 %s17, %s31
    %s38 = sor.u32 %s36, %s37
    %p39 = scmp.eq.s32.totalorder %s38, 0
    %s41 = sadd.s32 %s40, 1
    %s42 = scalar_select %p39, %s40, %s41
    %p45 = pneg %p39
    %p46 = scmp.eq.s32.totalorder %s9, 3
    %p47 = por %p45, %p46
    %p48 = scmp.ne.s32.totalorder %s40, %s43
    %p49 = scmp.eq.s32.totalorder %s9, 0
    %p50 = por %p48, %p49
    %p51 = scmp.ne.s32.totalorder %s40, %s43
    %p52 = scmp.eq.s32.totalorder %s14, 3
    %p53 = por %p51, %p52
    %p54 = scmp.ne.s32.totalorder %s43, %s44
    %p55 = scmp.eq.s32.totalorder %s14, 0
    %p56 = por %p54, %p55
    %p57 = scmp.ne.s32.totalorder %s43, %s44
    %p58 = scmp.eq.s32.totalorder %s15, 3
    %p59 = por %p57, %p58
    %p61 = scmp.ne.s32.totalorder %s44, %s60
    %p62 = scmp.eq.s32.totalorder %s15, 0
    %p63 = por %p61, %p62
    %s64 = ssub.s32 %s18, %s27
    %p65 = scmp.eq.s32.totalorder %s64, 0
    %s67 = sadd.s32 %s66, 1
    %s68 = scalar_select %p65, %s66, %s67
    %p71 = pneg %p65
    %p72 = scmp.eq.s32.totalorder %s9, 3
    %p73 = por %p71, %p72
    %p74 = scmp.ne.s32.totalorder %s66, %s69
    %p75 = scmp.eq.s32.totalorder %s9, 0
    %p76 = por %p74, %p75
    %p77 = scmp.ne.s32.totalorder %s66, %s69
    %p78 = scmp.eq.s32.totalorder %s14, 3
    %p79 = por %p77, %p78
    %p80 = scmp.ne.s32.totalorder %s69, %s70
    %p81 = scmp.eq.s32.totalorder %s14, 0
    %p82 = por %p80, %p81
    %p83 = scmp.ne.s32.totalorder %s69, %s70
    %p84 = scmp.eq.s32.totalorder %s15, 3
    %p85 = por %p83, %p84
    %p87 = scmp.ne.s32.totalorder %s70, %s86
    %p88 = scmp.eq.s32.totalorder %s15, 0
    %p89 = por %p87, %p88
    %s90 = ssub.s32 %s18, %s27
    %p91 = scmp.eq.s32.totalorder %s90, 0
    %s93 = sadd.s32 %s92, 1
    %s94 = scalar_select %p91, %s92, %s93
    %p97 = pneg %p91
    %p98 = scmp.eq.s32.totalorder %s9, 3
    %p99 = por %p97, %p98
    %p100 = scmp.ne.s32.totalorder %s92, %s95
    %p101 = scmp.eq.s32.totalorder %s9, 0
    %p102 = por %p100, %p101
    %p103 = scmp.ne.s32.totalorder %s92, %s95
    %p104 = scmp.eq.s32.totalorder %s14, 3
    %p105 = por %p103, %p104
    %p106 = scmp.ne.s32.totalorder %s95, %s96
    %p107 = scmp.eq.s32.totalorder %s14, 0
    %p108 = por %p106, %p107
    %p109 = scmp.ne.s32.totalorder %s95, %s96
    %p110 = scmp.eq.s32.totalorder %s15, 3
    %p111 = por %p109, %p110
    %p113 = scmp.ne.s32.totalorder %s96, %s112
    %p114 = scmp.eq.s32.totalorder %s15, 0
    %p115 = por %p113, %p114
    %s116 = ssub.s32 %s16, %s35
    %s117 = ssub.s32 %s17, %s31
    %s118 = sor.u32 %s116, %s117
    %s119 = ssub.s32 %s18, %s27
    %s120 = sor.u32 %s118, %s119
    %p121 = scmp.eq.s32.totalorder %s120, 0
    %s123 = sadd.s32 %s122, 1
    %s124 = scalar_select %p121, %s122, %s123
    %p127 = pneg %p121
    %p128 = scmp.eq.s32.totalorder %s9, 3
    %p129 = por %p127, %p128
    %p130 = scmp.ne.s32.totalorder %s122, %s125
    %p131 = scmp.eq.s32.totalorder %s9, 0
    %p132 = por %p130, %p131
    %p133 = scmp.ne.s32.totalorder %s122, %s125
    %p134 = scmp.eq.s32.totalorder %s14, 3
    %p135 = por %p133, %p134
    %p136 = scmp.ne.s32.totalorder %s125, %s126
    %p137 = scmp.eq.s32.totalorder %s14, 0
    %p138 = por %p136, %p137
    %p139 = scmp.ne.s32.totalorder %s125, %s126
    %p140 = scmp.eq.s32.totalorder %s15, 3
    %p141 = por %p139, %p140
    %p143 = scmp.ne.s32.totalorder %s126, %s142
    %p144 = scmp.eq.s32.totalorder %s15, 0
    %p145 = por %p143, %p144
    %p146 = scmp.le.s32.totalorder 1, %s9
    %p147 = scmp.lt.s32.totalorder %s9, 5
    %p148 = pnand %p146, %p147
    %p149 = pneg %p148
    // Predicated region
    $region9: #{inception_b_forward.6} parent=5 // pred_check
      _
    $region10: #{inception_b_forward.6} parent=5 // pred_check_branch
      %151 = sbr.rel (%p148) target = $region12
    $region11: #{inception_b_forward.6} parent=5 // pred_region
      %s152 = ssub.s32 %s9, 1
      // Predicated region
      $region13: #{inception_b_forward.6} parent=11 // pred_check
        %p153 = pneg %p82
      $region14: #{inception_b_forward.6} parent=11 // pred_check_branch
        %155 = sbr.rel (%p153) target = $region16
      $region15: #{inception_b_forward.6} parent=11 // pred_region
        %p156 = scmp.lt.s32.totalorder %s21, 0
        %s157 = scalar_select %p156, %s21, 0
        %s158 = smul.addr %s157, 2
        %s159 = scalar_lea.vmem %s1, %s158
      $region16: #{inception_b_forward.6} parent=11 // pred_fallthru
        _
      // Predicated region
      $region17: #{inception_b_forward.6} parent=11 // pred_check
        %p160 = pneg %p108
      $region18: #{inception_b_forward.6} parent=11 // pred_check_branch
        %162 = sbr.rel (%p160) target = $region20
      $region19: #{inception_b_forward.6} parent=11 // pred_region
        %p163 = scmp.lt.s32.totalorder %s21, 0
        %s164 = scalar_select %p163, %s21, 0
        %s165 = scalar_lea.vmem %s2, %s164
      $region20: #{inception_b_forward.6} parent=11 // pred_fallthru
        _
    $region12: #{inception_b_forward.6} parent=5 // pred_fallthru
      _
    %p166 = scmp.lt.s32.totalorder %s9, 4
    // Predicated region
    $region21: #{inception_b_forward.6} parent=5 // pred_check
      %p167 = pneg %p166
    $region22: #{inception_b_forward.6} parent=5 // pred_check_branch
      %169 = sbr.rel (%p167) target = $region24
    $region23: #{inception_b_forward.6} parent=5 // pred_region
      // Predicated region
      $region25: #{inception_b_forward.6} parent=23 // pred_check
        %p170 = pneg %p50
      $region26: #{inception_b_forward.6} parent=23 // pred_check_branch
        %172 = sbr.rel (%p170) target = $region28
      $region27: #{inception_b_forward.6} parent=23 // pred_region
        %s173 = smul.u32 16, %s17
        %p174 = scmp.lt.s32.totalorder %s16, 1
        %s175 = scalar_select %p174, %s16, 1
        %p176 = scmp.lt.s32.totalorder %s173, 31
        %s177 = scalar_select %p176, %s173, 31
        %s178 = smul.addr %s175, 32
        %s179 = sadd.s32 %s177, %s178
        %s180 = smul.addr %s179, 4
        %s181 = scalar_lea.vmem %s0, %s180
        %s182 = smul.u32 16, %s17
      $region28: #{inception_b_forward.6} parent=23 // pred_fallthru
        _
    $region24: #{inception_b_forward.6} parent=5 // pred_fallthru
      _
    %p183 = scmp.le.s32.totalorder 1, %s9
    %p184 = scmp.lt.s32.totalorder %s9, 5
    %p185 = pnand %p183, %p184
    %p186 = pneg %p185
    // Predicated region
    $region29: #{inception_b_forward.6} parent=5 // pred_check
      _
    $region30: #{inception_b_forward.6} parent=5 // pred_check_branch
      %188 = sbr.rel (%p185) target = $region32
    $region31: #{inception_b_forward.6} parent=5 // pred_region
      %s189 = ssub.s32 %s9, 1
      %s190 = smul.u32 16, %s20
      %p191 = scmp.lt.s32.totalorder %s19, 1
      %s192 = scalar_select %p191, %s19, 1
      %p193 = scmp.lt.s32.totalorder %s190, 31
      %s194 = scalar_select %p193, %s190, 31
      %s195 = smul.addr %s192, 32
      %s196 = sadd.s32 %s194, %s195
      %s197 = smul.addr %s196, 4
      %s198 = scalar_lea.vmem %s0, %s197
      %p199 = pneg %p56
      %p200 = pneg %p53
      %p201 = scmp.lt.s32.totalorder %s21, 0
      %s202 = scalar_select %p201, %s21, 0
      %s203 = smul.addr %s202, 2
      %s204 = scalar_lea.vmem %s1, %s203
      %p205 = pneg %p82
      %p206 = pneg %p79
      %p207 = scmp.lt.s32.totalorder %s21, 0
      %s208 = scalar_select %p207, %s21, 0
      %s209 = scalar_lea.vmem %s2, %s208
      %p210 = pneg %p108
      %p211 = pneg %p105
      %p212 = pneg %p138
      %p213 = pneg %p135
      %s214 = smul.u32 16, %s20
      %p215 = scmp.lt.s32.totalorder %s19, 1
      %s216 = scalar_select %p215, %s19, 1
      %p217 = scmp.lt.s32.totalorder %s214, 31
      %s218 = scalar_select %p217, %s214, 31
      %p219 = scmp.lt.s32.totalorder %s21, 0
      %s220 = scalar_select %p219, %s21, 0
      %s221 = sadd.s32 %s220, %s218
      %s222 = smul.addr %s216, 32
      %s223 = sadd.s32 %s221, %s222
      %s224 = smul.addr %s223, 8
      %s225 = scalar_lea.vmem %s3, %s224
      %s226 = smul.u32 16, %s20
      %p227 = scmp.lt.s32.totalorder %s19, 1
      %s228 = scalar_select %p227, %s19, 1
      %p229 = scmp.lt.s32.totalorder %s226, 31
      %s230 = scalar_select %p229, %s226, 31
      %s231 = smul.addr %s228, 32
      %s232 = sadd.s32 %s230, %s231
      %s233 = smul.addr %s232, 4
      %s234 = scalar_lea.vmem %s0, %s233
      %s235 = smul.u32 16, %s20
      %p236 = scmp.lt.s32.totalorder %s21, 0
      %s237 = scalar_select %p236, %s21, 0
      %s238 = smul.addr %s237, 2
      %s239 = scalar_lea.vmem %s1, %s238
      %p240 = scmp.lt.s32.totalorder %s21, 0
      %s241 = scalar_select %p240, %s21, 0
      %s242 = scalar_lea.vmem %s2, %s241
      %s243 = smul.u32 16, %s20
      %p244 = scmp.lt.s32.totalorder %s19, 1
      %s245 = scalar_select %p244, %s19, 1
      %p246 = scmp.lt.s32.totalorder %s243, 31
      %s247 = scalar_select %p246, %s243, 31
      %p248 = scmp.lt.s32.totalorder %s21, 0
      %s249 = scalar_select %p248, %s21, 0
      %s250 = sadd.s32 %s249, %s247
      %s251 = smul.addr %s245, 32
      %s252 = sadd.s32 %s250, %s251
      %s253 = smul.addr %s252, 8
      %s254 = scalar_lea.vmem %s3, %s253
      %s255 = smul.u32 16, %s20
      %v257 = vld [vmem:[%s234] sm:$0xf]
      %v258 = vld [vmem:[%s234 + $0x4] sm:$0xf]
      %v259 = vld [vmem:[%s234 + $0x8] sm:$0xf]
      %v260 = vld [vmem:[%s234 + $0xc] sm:$0xf]
      %v261 = vld [vmem:[%s234 + $0x10] sm:$0xf]
      %v262 = vld [vmem:[%s234 + $0x14] sm:$0xf]
      %v263 = vld [vmem:[%s234 + $0x18] sm:$0xf]
      %v264 = vld [vmem:[%s234 + $0x1c] sm:$0xf]
      %v265 = vld [vmem:[%s234 + $0x20] sm:$0xf]
      %v266 = vld [vmem:[%s234 + $0x24] sm:$0xf]
      %v267 = vld [vmem:[%s234 + $0x28] sm:$0xf]
      %v268 = vld [vmem:[%s234 + $0x2c] sm:$0xf]
      %v269 = vld [vmem:[%s234 + $0x30] sm:$0xf]
      %v270 = vld [vmem:[%s234 + $0x34] sm:$0xf]
      %v271 = vld [vmem:[%s234 + $0x38] sm:$0xf]
      %v272 = vld [vmem:[%s234 + $0x3c] sm:$0xf]
      %v273 = vld [vmem:[%s239] sm:$0x3]
      %v274 = vld [vmem:[%s242] sm:$0x1]
      %v276 = vlaneseq
      %v277 = vshrl.u32 %v276, 7
      %v278 = vsub.s32 0, %v277
      %v279 = vrot.slane %v274, %v278
      %v297 = vunpack.c.l.b16 %v257
      %v298 = vunpack.c.l.b16 %v258
      %v299 = vunpack.c.l.b16 %v259
      %v300 = vunpack.c.l.b16 %v260
      %v301 = vunpack.c.l.b16 %v261
      %v302 = vunpack.c.l.b16 %v262
      %v303 = vunpack.c.l.b16 %v263
      %v304 = vunpack.c.l.b16 %v264
      %v305 = vunpack.c.l.b16 %v265
      %v306 = vunpack.c.l.b16 %v266
      %v307 = vunpack.c.l.b16 %v267
      %v308 = vunpack.c.l.b16 %v268
      %v309 = vunpack.c.l.b16 %v269
      %v310 = vunpack.c.l.b16 %v270
      %v311 = vunpack.c.l.b16 %v271
      %v312 = vunpack.c.l.b16 %v272
      %v313 = vpack.c.b16 %v298, %v297
      %v314 = vpack.c.b16 %v300, %v299
      %v315 = vpack.c.b16 %v302, %v301
      %v316 = vpack.c.b16 %v304, %v303
      %v317 = vpack.c.b16 %v306, %v305
      %v318 = vpack.c.b16 %v308, %v307
      %v319 = vpack.c.b16 %v310, %v309
      %v320 = vpack.c.b16 %v312, %v311
      %vm321 = vcmask 31744
      %v323 = vsel %vm321, %v313, 0
      %v326 = vsel %vm321, %v314, 0
      %v329 = vsel %vm321, %v315, 0
      %v332 = vsel %vm321, %v316, 0
      %v335 = vsel %vm321, %v317, 0
      %v338 = vsel %vm321, %v318, 0
      %v341 = vsel %vm321, %v319, 0
      %v344 = vsel %vm321, %v320, 0
      %vm346 = vcmask 1041408
      %v348 = vsel %vm346, %v273, 0
      %350 = vmatprep.subr.bf16.mxu0 0
      %351 = vmatpush1.bf16.msra.mxu0 %v348
      %352 = vmatprep.subr.bf16.mxu0 0
      %353 = vmatpush1.bf16.msra.mxu0 0
      %354 = vmatprep.subr.bf16.mxu0 0
      %355 = vmatpush1.bf16.msra.mxu0 0
      %356 = vmatprep.subr.bf16.mxu0 0
      %357 = vmatpush1.bf16.msra.mxu0 0
      %358 = vmatprep.subr.bf16.mxu0 0
      %359 = vmatpush1.bf16.msra.mxu0 0
      %360 = vmatprep.subr.bf16.mxu0 0
      %361 = vmatpush1.bf16.msra.mxu0 0
      %362 = vmatprep.subr.bf16.mxu0 0
      %363 = vmatpush1.bf16.msra.mxu0 0
      %364 = vmatprep.subr.bf16.mxu0 0
      %365 = vmatpush1.bf16.msra.mxu0 0
      %366 = vmatprep.subr.bf16.mxu0 0
      %367 = vmatpush1.bf16.msra.mxu0 0
      %368 = vmatprep.subr.bf16.mxu0 0
      %369 = vmatpush1.bf16.msra.mxu0 0
      %370 = vmatprep.subr.bf16.mxu0 0
      %371 = vmatpush1.bf16.msra.mxu0 0
      %372 = vmatprep.subr.bf16.mxu0 0
      %373 = vmatpush1.bf16.msra.mxu0 0
      %374 = vmatprep.subr.bf16.mxu0 0
      %375 = vmatpush1.bf16.msra.mxu0 0
      %376 = vmatprep.subr.bf16.mxu0 0
      %377 = vmatpush1.bf16.msra.mxu0 0
      %378 = vmatprep.subr.bf16.mxu0 0
      %379 = vmatpush1.bf16.msra.mxu0 0
      %380 = vmatprep.subr.bf16.mxu0 0
      %381 = vmatpush1.bf16.msra.mxu0 0
      %382 = vmatprep.mubr.bf16.mxu0 0
      %383 = vmatmul.mubr.bf16.gmra.mrb[0].mxu0 %v323
      %v384 = vpop.f32.mrb[0].mxu0
      %v385 = vadd.f32 %v279, %v384
      %v386 = vpop.f32.mrb[0].mxu0
      %v387 = vpop.f32.mrb[0].mxu0
      %v388 = vadd.f32 %v279, %v387
      %v389 = vpop.f32.mrb[0].mxu0
      %390 = vmatprep.mubr.bf16.mxu0 0
      %391 = vmatmul.mubr.bf16.gmra.mrb[0].mxu0 %v326
      %v392 = vpop.f32.mrb[0].mxu0
      %v393 = vadd.f32 %v279, %v392
      %v394 = vpop.f32.mrb[0].mxu0
      %v395 = vpop.f32.mrb[0].mxu0
      %v396 = vadd.f32 %v279, %v395
      %v397 = vpop.f32.mrb[0].mxu0
      %398 = vmatprep.mubr.bf16.mxu0 0
      %399 = vmatmul.mubr.bf16.gmra.mrb[0].mxu0 %v329
      %v400 = vpop.f32.mrb[0].mxu0
      %v401 = vadd.f32 %v279, %v400
      %v402 = vpop.f32.mrb[0].mxu0
      %v403 = vpop.f32.mrb[0].mxu0
      %v404 = vadd.f32 %v279, %v403
      %v405 = vpop.f32.mrb[0].mxu0
      %406 = vmatprep.mubr.bf16.mxu0 0
      %407 = vmatmul.mubr.bf16.gmra.mrb[0].mxu0 %v332
      %v408 = vpop.f32.mrb[0].mxu0
      %v409 = vadd.f32 %v279, %v408
      %v410 = vpop.f32.mrb[0].mxu0
      %v411 = vpop.f32.mrb[0].mxu0
      %v412 = vadd.f32 %v279, %v411
      %v413 = vpop.f32.mrb[0].mxu0
      %414 = vmatprep.mubr.bf16.mxu0 0
      %415 = vmatmul.mubr.bf16.gmra.mrb[0].mxu0 %v335
      %v416 = vpop.f32.mrb[0].mxu0
      %v417 = vadd.f32 %v279, %v416
      %v418 = vpop.f32.mrb[0].mxu0
      %v419 = vpop.f32.mrb[0].mxu0
      %v420 = vadd.f32 %v279, %v419
      %v421 = vpop.f32.mrb[0].mxu0
      %422 = vmatprep.mubr.bf16.mxu0 0
      %423 = vmatmul.mubr.bf16.gmra.mrb[0].mxu0 %v338
      %v424 = vpop.f32.mrb[0].mxu0
      %v425 = vadd.f32 %v279, %v424
      %v426 = vpop.f32.mrb[0].mxu0
      %v427 = vpop.f32.mrb[0].mxu0
      %v428 = vadd.f32 %v279, %v427
      %v429 = vpop.f32.mrb[0].mxu0
      %430 = vmatprep.mubr.bf16.mxu0 0
      %431 = vmatmul.mubr.bf16.gmra.mrb[0].mxu0 %v341
      %v432 = vpop.f32.mrb[0].mxu0
      %v433 = vadd.f32 %v279, %v432
      %v434 = vpop.f32.mrb[0].mxu0
      %v435 = vpop.f32.mrb[0].mxu0
      %v436 = vadd.f32 %v279, %v435
      %v437 = vpop.f32.mrb[0].mxu0
      %438 = vmatprep.mubr.bf16.mxu0 0
      %439 = vmatmul.mubr.bf16.gmra.mrb[0].mxu0 %v344
      %v440 = vpop.f32.mrb[0].mxu0
      %v441 = vadd.f32 %v279, %v440
      %v442 = vpop.f32.mrb[0].mxu0
      %v443 = vpop.f32.mrb[0].mxu0
      %v444 = vadd.f32 %v279, %v443
      %v445 = vpop.f32.mrb[0].mxu0
      %446 = vdwg.mxu0
      %v447 = vmax.f32 %v385, 0.0
      %v448 = vmax.f32 %v388, 0.0
      %v449 = vmax.f32 %v393, 0.0
      %v450 = vmax.f32 %v396, 0.0
      %v451 = vmax.f32 %v401, 0.0
      %v452 = vmax.f32 %v404, 0.0
      %v453 = vmax.f32 %v409, 0.0
      %v454 = vmax.f32 %v412, 0.0
      %v455 = vmax.f32 %v417, 0.0
      %v456 = vmax.f32 %v420, 0.0
      %v457 = vmax.f32 %v425, 0.0
      %v458 = vmax.f32 %v428, 0.0
      %v459 = vmax.f32 %v433, 0.0
      %v460 = vmax.f32 %v436, 0.0
      %v461 = vmax.f32 %v441, 0.0
      %v462 = vmax.f32 %v444, 0.0
      %463 = vst [vmem:[%s254] sm:$0xff] %v447
      %464 = vst [vmem:[%s254 + $0x8] sm:$0xff] %v448
      %465 = vst [vmem:[%s254 + $0x10] sm:$0xff] %v449
      %466 = vst [vmem:[%s254 + $0x18] sm:$0xff] %v450
      %467 = vst [vmem:[%s254 + $0x20] sm:$0xff] %v451
      %468 = vst [vmem:[%s254 + $0x28] sm:$0xff] %v452
      %469 = vst [vmem:[%s254 + $0x30] sm:$0xff] %v453
      %470 = vst [vmem:[%s254 + $0x38] sm:$0xff] %v454
      %471 = vst [vmem:[%s254 + $0x40] sm:$0xff] %v455
      %472 = vst [vmem:[%s254 + $0x48] sm:$0xff] %v456
      %473 = vst [vmem:[%s254 + $0x50] sm:$0xff] %v457
      %474 = vst [vmem:[%s254 + $0x58] sm:$0xff] %v458
      %475 = vst [vmem:[%s254 + $0x60] sm:$0xff] %v459
      %476 = vst [vmem:[%s254 + $0x68] sm:$0xff] %v460
      %477 = vst [vmem:[%s254 + $0x70] sm:$0xff] %v461
      %478 = vst [vmem:[%s254 + $0x78] sm:$0xff] %v462
      %s479 = smul.u32 16, %s20
      %p480 = scmp.lt.s32.totalorder %s19, 1
      %s481 = scalar_select %p480, %s19, 1
      %p482 = scmp.lt.s32.totalorder %s479, 31
      %s483 = scalar_select %p482, %s479, 31
      %p484 = scmp.lt.s32.totalorder %s21, 0
      %s485 = scalar_select %p484, %s21, 0
      %s486 = sadd.s32 %s485, %s483
      %s487 = smul.addr %s481, 32
      %s488 = sadd.s32 %s486, %s487
      %s489 = smul.addr %s488, 8
      %s490 = scalar_lea.vmem %s3, %s489
      // Predicated region
      $region33: #{inception_b_forward.6} parent=31 // pred_check
        %p491 = pneg %p135
      $region34: #{inception_b_forward.6} parent=31 // pred_check_branch
        %493 = sbr.rel (%p491) target = $region36
      $region35: #{inception_b_forward.6} parent=31 // pred_region
        %s494 = smul.u32 16, %s20
      $region36: #{inception_b_forward.6} parent=31 // pred_fallthru
        _
    $region32: #{inception_b_forward.6} parent=5 // pred_fallthru
      _
    %p495 = scmp.le.s32.totalorder 2, %s9
    // Predicated region
    $region37: #{inception_b_forward.6} parent=5 // pred_check
      %p496 = pneg %p495
    $region38: #{inception_b_forward.6} parent=5 // pred_check_branch
      %498 = sbr.rel (%p496) target = $region40
    $region39: #{inception_b_forward.6} parent=5 // pred_region
      %s499 = ssub.s32 %s9, 2
      // Predicated region
      $region41: #{inception_b_forward.6} parent=39 // pred_check
        %p500 = pneg %p141
      $region42: #{inception_b_forward.6} parent=39 // pred_check_branch
        %502 = sbr.rel (%p500) target = $region44
      $region43: #{inception_b_forward.6} parent=39 // pred_region
        %s503 = smul.u32 16, %s23
        %p504 = scmp.lt.s32.totalorder %s22, 1
        %s505 = scalar_select %p504, %s22, 1
        %p506 = scmp.lt.s32.totalorder %s503, 31
        %s507 = scalar_select %p506, %s503, 31
        %p508 = scmp.lt.s32.totalorder %s24, 0
        %s509 = scalar_select %p508, %s24, 0
        %s510 = sadd.s32 %s509, %s507
        %s511 = smul.addr %s505, 32
        %s512 = sadd.s32 %s510, %s511
        %s513 = smul.addr %s512, 8
        %s514 = scalar_lea.vmem %s3, %s513
      $region44: #{inception_b_forward.6} parent=39 // pred_fallthru
        _
    $region40: #{inception_b_forward.6} parent=5 // pred_fallthru
      _
  $region6: #{inception_b_forward.6} parent=0 // loop_footer
    %s13 = sadd.s32 1, %s9
  $region7: #{inception_b_forward.6} parent=0 // loop_footer_branch
    %8 = sbr.rel target = $region3
  $region8: #{inception_b_forward.6} parent=0 // loop_exit
    _

// kernel: inception_b_forward.7
$region0: #{inception_b_forward.7}
  #allocation0 [shape = 'u32[]', space=smem, size = 0x4, offset = 0x4, fixed_abs, tag = 'smem constant byte address 0x4 - core index']
  #allocation1 [shape = 'u32[144,128]{1,0:T(1,128)}', space=vmem, size = 0x12000, scoped, tag = 'internal scratch']
  %s0 = inlined_call_operand.vmem [shape: bf16[2,256,576], index: 0, kind: input, shape index: {}]
  %s1 = inlined_call_operand.vmem [shape: bf16[576,128], index: 1, kind: input, shape index: {}]
  %s2 = inlined_call_operand.vmem [shape: f32[1,128], index: 2, kind: input, shape index: {}]
  %s3 = inlined_call_operand.vmem [shape: f32[2,256,128], index: 3, kind: output, shape index: {}]
  %s4 = sld [smem:[#allocation0]]
  $region45: #{inception_b_forward.7} parent=0
    _
  %s6 = ssub.s32 1, %s4
  %s7 = scalar_select 0, %s6, %s4
  loop: start=0, step=1, limit=6
  $region2: #{inception_b_forward.7} parent=0 // loop_pre_header
    _
  $region3: #{inception_b_forward.7} parent=0 // loop_header
    %s9 = sphi 0, %s13
    %p10 = scmp.ge.s32.totalorder %s9, 6
    %s16 = sphi 0, %s35
    %s17 = sphi 0, %s31
    %s18 = sphi 0, %s27
    %s19 = sphi 0, %s16
    %s20 = sphi 0, %s17
    %s21 = sphi 0, %s18
    %s22 = sphi 0, %s19
    %s23 = sphi 0, %s20
    %s24 = sphi 0, %s21
    %s40 = sphi 0, %s42
    %s43 = sphi 0, %s40
    %s44 = sphi 0, %s43
    %s60 = sphi 0, %s44
    %s66 = sphi 0, %s68
    %s69 = sphi 0, %s66
    %s70 = sphi 0, %s69
    %s86 = sphi 0, %s70
    %s92 = sphi 0, %s94
    %s95 = sphi 0, %s92
    %s96 = sphi 0, %s95
    %s112 = sphi 0, %s96
    %s122 = sphi 0, %s124
    %s125 = sphi 0, %s122
    %s126 = sphi 0, %s125
    %s142 = sphi 0, %s126
  $region4: #{inception_b_forward.7} parent=0 // loop_header_branch
    %12 = sbr.rel (%p10) target = $region8
  $region5: #{inception_b_forward.7} parent=0 // loop_body
    %s14 = ssub.s32 %s9, 1
    %s15 = ssub.s32 %s9, 2
    %s25 = sadd.s32 1, %s18
    %p26 = scmp.ge.s32.totalorder %s25, 1
    %s27 = scalar_select %p26, 0, %s25
    %s28 = sadd.s32 1, %s17
    %s29 = scalar_select %p26, %s28, %s17
    %p30 = scmp.ge.s32.totalorder %s29, 2
    %s31 = scalar_select %p30, 0, %s29
    %s32 = sadd.s32 1, %s16
    %s33 = scalar_select %p30, %s32, %s16
    %p34 = scmp.ge.s32.totalorder %s33, 2
    %s35 = scalar_select %p34, 0, %s33
    %s36 = ssub.s32 %s16, %s35
    %s37 = ssub.s32 %s17, %s31
    %s38 = sor.u32 %s36, %s37
    %p39 = scmp.eq.s32.totalorder %s38, 0
    %s41 = sadd.s32 %s40, 1
    %s42 = scalar_select %p39, %s40, %s41
    %p45 = pneg %p39
    %p46 = scmp.eq.s32.totalorder %s9, 3
    %p47 = por %p45, %p46
    %p48 = scmp.ne.s32.totalorder %s40, %s43
    %p49 = scmp.eq.s32.totalorder %s9, 0
    %p50 = por %p48, %p49
    %p51 = scmp.ne.s32.totalorder %s40, %s43
    %p52 = scmp.eq.s32.totalorder %s14, 3
    %p53 = por %p51, %p52
    %p54 = scmp.ne.s32.totalorder %s43, %s44
    %p55 = scmp.eq.s32.totalorder %s14, 0
    %p56 = por %p54, %p55
    %p57 = scmp.ne.s32.totalorder %s43, %s44
    %p58 = scmp.eq.s32.totalorder %s15, 3
    %p59 = por %p57, %p58
    %p61 = scmp.ne.s32.totalorder %s44, %s60
    %p62 = scmp.eq.s32.totalorder %s15, 0
    %p63 = por %p61, %p62
    %s64 = ssub.s32 %s18, %s27
    %p65 = scmp.eq.s32.totalorder %s64, 0
    %s67 = sadd.s32 %s66, 1
    %s68 = scalar_select %p65, %s66, %s67
    %p71 = pneg %p65
    %p72 = scmp.eq.s32.totalorder %s9, 3
    %p73 = por %p71, %p72
    %p74 = scmp.ne.s32.totalorder %s66, %s69
    %p75 = scmp.eq.s32.totalorder %s9, 0
    %p76 = por %p74, %p75
    %p77 = scmp.ne.s32.totalorder %s66, %s69
    %p78 = scmp.eq.s32.totalorder %s14, 3
    %p79 = por %p77, %p78
    %p80 = scmp.ne.s32.totalorder %s69, %s70
    %p81 = scmp.eq.s32.totalorder %s14, 0
    %p82 = por %p80, %p81
    %p83 = scmp.ne.s32.totalorder %s69, %s70
    %p84 = scmp.eq.s32.totalorder %s15, 3
    %p85 = por %p83, %p84
    %p87 = scmp.ne.s32.totalorder %s70, %s86
    %p88 = scmp.eq.s32.totalorder %s15, 0
    %p89 = por %p87, %p88
    %s90 = ssub.s32 %s18, %s27
    %p91 = scmp.eq.s32.totalorder %s90, 0
    %s93 = sadd.s32 %s92, 1
    %s94 = scalar_select %p91, %s92, %s93
    %p97 = pneg %p91
    %p98 = scmp.eq.s32.totalorder %s9, 3
    %p99 = por %p97, %p98
    %p100 = scmp.ne.s32.totalorder %s92, %s95
    %p101 = scmp.eq.s32.totalorder %s9, 0
    %p102 = por %p100, %p101
    %p103 = scmp.ne.s32.totalorder %s92, %s95
    %p104 = scmp.eq.s32.totalorder %s14, 3
    %p105 = por %p103, %p104
    %p106 = scmp.ne.s32.totalorder %s95, %s96
    %p107 = scmp.eq.s32.totalorder %s14, 0
    %p108 = por %p106, %p107
    %p109 = scmp.ne.s32.totalorder %s95, %s96
    %p110 = scmp.eq.s32.totalorder %s15, 3
    %p111 = por %p109, %p110
    %p113 = scmp.ne.s32.totalorder %s96, %s112
    %p114 = scmp.eq.s32.totalorder %s15, 0
    %p115 = por %p113, %p114
    %s116 = ssub.s32 %s16, %s35
    %s117 = ssub.s32 %s17, %s31
    %s118 = sor.u32 %s116, %s117
    %s119 = ssub.s32 %s18, %s27
    %s120 = sor.u32 %s118, %s119
    %p121 = scmp.eq.s32.totalorder %s120, 0
    %s123 = sadd.s32 %s122, 1
    %s124 = scalar_select %p121, %s122, %s123
    %p127 = pneg %p121
    %p128 = scmp.eq.s32.totalorder %s9, 3
    %p129 = por %p127, %p128
    %p130 = scmp.ne.s32.totalorder %s122, %s125
    %p131 = scmp.eq.s32.totalorder %s9, 0
    %p132 = por %p130, %p131
    %p133 = scmp.ne.s32.totalorder %s122, %s125
    %p134 = scmp.eq.s32.totalorder %s14, 3
    %p135 = por %p133, %p134
    %p136 = scmp.ne.s32.totalorder %s125, %s126
    %p137 = scmp.eq.s32.totalorder %s14, 0
    %p138 = por %p136, %p137
    %p139 = scmp.ne.s32.totalorder %s125, %s126
    %p140 = scmp.eq.s32.totalorder %s15, 3
    %p141 = por %p139, %p140
    %p143 = scmp.ne.s32.totalorder %s126, %s142
    %p144 = scmp.eq.s32.totalorder %s15, 0
    %p145 = por %p143, %p144
    %p146 = scmp.le.s32.totalorder 1, %s9
    %p147 = scmp.lt.s32.totalorder %s9, 5
    %p148 = pnand %p146, %p147
    %p149 = pneg %p148
    // Predicated region
    $region9: #{inception_b_forward.7} parent=5 // pred_check
      _
    $region10: #{inception_b_forward.7} parent=5 // pred_check_branch
      %151 = sbr.rel (%p148) target = $region12
    $region11: #{inception_b_forward.7} parent=5 // pred_region
      %s152 = ssub.s32 %s9, 1
      // Predicated region
      $region13: #{inception_b_forward.7} parent=11 // pred_check
        %p153 = pneg %p82
      $region14: #{inception_b_forward.7} parent=11 // pred_check_branch
        %155 = sbr.rel (%p153) target = $region16
      $region15: #{inception_b_forward.7} parent=11 // pred_region
        %p156 = scmp.lt.s32.totalorder %s21, 0
        %s157 = scalar_select %p156, %s21, 0
        %s158 = smul.addr %s157, 4
        %s159 = scalar_lea.vmem %s1, %s158
      $region16: #{inception_b_forward.7} parent=11 // pred_fallthru
        _
      // Predicated region
      $region17: #{inception_b_forward.7} parent=11 // pred_check
        %p160 = pneg %p108
      $region18: #{inception_b_forward.7} parent=11 // pred_check_branch
        %162 = sbr.rel (%p160) target = $region20
      $region19: #{inception_b_forward.7} parent=11 // pred_region
        %p163 = scmp.lt.s32.totalorder %s21, 0
        %s164 = scalar_select %p163, %s21, 0
        %s165 = scalar_lea.vmem %s2, %s164
      $region20: #{inception_b_forward.7} parent=11 // pred_fallthru
        _
    $region12: #{inception_b_forward.7} parent=5 // pred_fallthru
      _
    %p166 = scmp.lt.s32.totalorder %s9, 4
    // Predicated region
    $region21: #{inception_b_forward.7} parent=5 // pred_check
      %p167 = pneg %p166
    $region22: #{inception_b_forward.7} parent=5 // pred_check_branch
      %169 = sbr.rel (%p167) target = $region24
    $region23: #{inception_b_forward.7} parent=5 // pred_region
      // Predicated region
      $region25: #{inception_b_forward.7} parent=23 // pred_check
        %p170 = pneg %p50
      $region26: #{inception_b_forward.7} parent=23 // pred_check_branch
        %172 = sbr.rel (%p170) target = $region28
      $region27: #{inception_b_forward.7} parent=23 // pred_region
        %s173 = smul.u32 16, %s17
        %p174 = scmp.lt.s32.totalorder %s16, 1
        %s175 = scalar_select %p174, %s16, 1
        %p176 = scmp.lt.s32.totalorder %s173, 31
        %s177 = scalar_select %p176, %s173, 31
        %s178 = smul.addr %s177, 5
        %s179 = smul.addr %s175, 160
        %s180 = sadd.s32 %s178, %s179
        %s181 = smul.addr %s180, 4
        %s182 = scalar_lea.vmem %s0, %s181
        %s183 = smul.u32 16, %s17
      $region28: #{inception_b_forward.7} parent=23 // pred_fallthru
        _
    $region24: #{inception_b_forward.7} parent=5 // pred_fallthru
      _
    %p184 = scmp.le.s32.totalorder 1, %s9
    %p185 = scmp.lt.s32.totalorder %s9, 5
    %p186 = pnand %p184, %p185
    %p187 = pneg %p186
    // Predicated region
    $region29: #{inception_b_forward.7} parent=5 // pred_check
      _
    $region30: #{inception_b_forward.7} parent=5 // pred_check_branch
      %189 = sbr.rel (%p186) target = $region32
    $region31: #{inception_b_forward.7} parent=5 // pred_region
      %s190 = ssub.s32 %s9, 1
      %s191 = smul.u32 16, %s20
      %p192 = scmp.lt.s32.totalorder %s19, 1
      %s193 = scalar_select %p192, %s19, 1
      %p194 = scmp.lt.s32.totalorder %s191, 31
      %s195 = scalar_select %p194, %s191, 31
      %s196 = smul.addr %s195, 5
      %s197 = smul.addr %s193, 160
      %s198 = sadd.s32 %s196, %s197
      %s199 = smul.addr %s198, 4
      %s200 = scalar_lea.vmem %s0, %s199
      %p201 = pneg %p56
      %p202 = pneg %p53
      %p203 = scmp.lt.s32.totalorder %s21, 0
      %s204 = scalar_select %p203, %s21, 0
      %s205 = smul.addr %s204, 4
      %s206 = scalar_lea.vmem %s1, %s205
      %p207 = pneg %p82
      %p208 = pneg %p79
      %p209 = scmp.lt.s32.totalorder %s21, 0
      %s210 = scalar_select %p209, %s21, 0
      %s211 = scalar_lea.vmem %s2, %s210
      %p212 = pneg %p108
      %p213 = pneg %p105
      %p214 = pneg %p138
      %p215 = pneg %p135
      %s216 = smul.u32 16, %s20
      %p217 = scmp.lt.s32.totalorder %s19, 1
      %s218 = scalar_select %p217, %s19, 1
      %p219 = scmp.lt.s32.totalorder %s216, 31
      %s220 = scalar_select %p219, %s216, 31
      %p221 = scmp.lt.s32.totalorder %s21, 0
      %s222 = scalar_select %p221, %s21, 0
      %s223 = sadd.s32 %s222, %s220
      %s224 = smul.addr %s218, 32
      %s225 = sadd.s32 %s223, %s224
      %s226 = smul.addr %s225, 8
      %s227 = scalar_lea.vmem %s3, %s226
      %s228 = smul.u32 16, %s20
      %p229 = scmp.lt.s32.totalorder %s19, 1
      %s230 = scalar_select %p229, %s19, 1
      %p231 = scmp.lt.s32.totalorder %s228, 31
      %s232 = scalar_select %p231, %s228, 31
      %s233 = smul.addr %s232, 5
      %s234 = smul.addr %s230, 160
      %s235 = sadd.s32 %s233, %s234
      %s236 = smul.addr %s235, 4
      %s237 = scalar_lea.vmem %s0, %s236
      %s238 = smul.u32 16, %s20
      %p239 = scmp.lt.s32.totalorder %s21, 0
      %s240 = scalar_select %p239, %s21, 0
      %s241 = smul.addr %s240, 4
      %s242 = scalar_lea.vmem %s1, %s241
      %p243 = scmp.lt.s32.totalorder %s21, 0
      %s244 = scalar_select %p243, %s21, 0
      %s245 = scalar_lea.vmem %s2, %s244
      %s246 = smul.u32 16, %s20
      %p247 = scmp.lt.s32.totalorder %s19, 1
      %s248 = scalar_select %p247, %s19, 1
      %p249 = scmp.lt.s32.totalorder %s246, 31
      %s250 = scalar_select %p249, %s246, 31
      %p251 = scmp.lt.s32.totalorder %s21, 0
      %s252 = scalar_select %p251, %s21, 0
      %s253 = sadd.s32 %s252, %s250
      %s254 = smul.addr %s248, 32
      %s255 = sadd.s32 %s253, %s254
      %s256 = smul.addr %s255, 8
      %s257 = scalar_lea.vmem %s3, %s256
      %s258 = smul.u32 16, %s20
      %v260 = vld [vmem:[%s237] sm:$0xff]
      %v261 = vld [vmem:[%s237 + $0x8] sm:$0xff]
      %v262 = vld [vmem:[%s237 + $0x10] sm:$0xf]
      %v263 = vld [vmem:[%s237 + $0x14] sm:$0xff]
      %v264 = vld [vmem:[%s237 + $0x1c] sm:$0xff]
      %v265 = vld [vmem:[%s237 + $0x24] sm:$0xf]
      %v266 = vld [vmem:[%s237 + $0x28] sm:$0xff]
      %v267 = vld [vmem:[%s237 + $0x30] sm:$0xff]
      %v268 = vld [vmem:[%s237 + $0x38] sm:$0xf]
      %v269 = vld [vmem:[%s237 + $0x3c] sm:$0xff]
      %v270 = vld [vmem:[%s237 + $0x44] sm:$0xff]
      %v271 = vld [vmem:[%s237 + $0x4c] sm:$0xf]
      %v272 = vld [vmem:[%s237 + $0x50] sm:$0xff]
      %v273 = vld [vmem:[%s237 + $0x58] sm:$0xff]
      %v274 = vld [vmem:[%s237 + $0x60] sm:$0xf]
      %v275 = vld [vmem:[%s237 + $0x64] sm:$0xff]
      %v276 = vld [vmem:[%s237 + $0x6c] sm:$0xff]
      %v277 = vld [vmem:[%s237 + $0x74] sm:$0xf]
      %v278 = vld [vmem:[%s237 + $0x78] sm:$0xff]
      %v279 = vld [vmem:[%s237 + $0x80] sm:$0xff]
      %v280 = vld [vmem:[%s237 + $0x88] sm:$0xf]
      %v281 = vld [vmem:[%s237 + $0x8c] sm:$0xff]
      %v282 = vld [vmem:[%s237 + $0x94] sm:$0xff]
      %v283 = vld [vmem:[%s237 + $0x9c] sm:$0xf]
      %v284 = vld [vmem:[%s237 + $0xa0] sm:$0xff]
      %v285 = vld [vmem:[%s237 + $0xa8] sm:$0xff]
      %v286 = vld [vmem:[%s237 + $0xb0] sm:$0xf]
      %v287 = vld [vmem:[%s237 + $0xb4] sm:$0xff]
      %v288 = vld [vmem:[%s237 + $0xbc] sm:$0xff]
      %v289 = vld [vmem:[%s237 + $0xc4] sm:$0xf]
      %v290 = vld [vmem:[%s237 + $0xc8] sm:$0xff]
      %v291 = vld [vmem:[%s237 + $0xd0] sm:$0xff]
      %v292 = vld [vmem:[%s237 + $0xd8] sm:$0xf]
      %v293 = vld [vmem:[%s237 + $0xdc] sm:$0xff]
      %v294 = vld [vmem:[%s237 + $0xe4] sm:$0xff]
      %v295 = vld [vmem:[%s237 + $0xec] sm:$0xf]
      %v296 = vld [vmem:[%s237 + $0xf0] sm:$0xff]
      %v297 = vld [vmem:[%s237 + $0xf8] sm:$0xff]
      %v298 = vld [vmem:[%s237 + $0x100] sm:$0xf]
      %v299 = vld [vmem:[%s237 + $0x104] sm:$0xff]
      %v300 = vld [vmem:[%s237 + $0x10c] sm:$0xff]
      %v301 = vld [vmem:[%s237 + $0x114] sm:$0xf]
      %v302 = vld [vmem:[%s237 + $0x118] sm:$0xff]
      %v303 = vld [vmem:[%s237 + $0x120] sm:$0xff]
      %v304 = vld [vmem:[%s237 + $0x128] sm:$0xf]
      %v305 = vld [vmem:[%s237 + $0x12c] sm:$0xff]
      %v306 = vld [vmem:[%s237 + $0x134] sm:$0xff]
      %v307 = vld [vmem:[%s237 + $0x13c] sm:$0xf]
      %v308 = vld [vmem:[%s242] sm:$0xf]
      %v309 = vld [vmem:[%s242 + $0x4] sm:$0xf]
      %v310 = vld [vmem:[%s242 + $0x8] sm:$0xf]
      %v311 = vld [vmem:[%s242 + $0xc] sm:$0xf]
      %v312 = vld [vmem:[%s242 + $0x10] sm:$0xf]
      %v313 = vld [vmem:[%s242 + $0x14] sm:$0xf]
      %v314 = vld [vmem:[%s242 + $0x18] sm:$0xf]
      %v315 = vld [vmem:[%s242 + $0x1c] sm:$0xf]
      %v316 = vld [vmem:[%s242 + $0x20] sm:$0xf]
      %v317 = vld [vmem:[%s242 + $0x24] sm:$0xf]
      %v318 = vld [vmem:[%s242 + $0x28] sm:$0xf]
      %v319 = vld [vmem:[%s242 + $0x2c] sm:$0xf]
      %v320 = vld [vmem:[%s242 + $0x30] sm:$0xf]
      %v321 = vld [vmem:[%s242 + $0x34] sm:$0xf]
      %v322 = vld [vmem:[%s242 + $0x38] sm:$0xf]
      %v323 = vld [vmem:[%s242 + $0x3c] sm:$0xf]
      %v324 = vld [vmem:[%s242 + $0x40] sm:$0xf]
      %v325 = vld [vmem:[%s242 + $0x44] sm:$0xf]
      %v326 = vld [vmem:[%s242 + $0x48] sm:$0xf]
      %v327 = vld [vmem:[%s242 + $0x4c] sm:$0xf]
      %v328 = vld [vmem:[%s242 + $0x50] sm:$0xf]
      %v329 = vld [vmem:[%s242 + $0x54] sm:$0xf]
      %v330 = vld [vmem:[%s242 + $0x58] sm:$0xf]
      %v331 = vld [vmem:[%s242 + $0x5c] sm:$0xf]
      %v332 = vld [vmem:[%s242 + $0x60] sm:$0xf]
      %v333 = vld [vmem:[%s242 + $0x64] sm:$0xf]
      %v334 = vld [vmem:[%s242 + $0x68] sm:$0xf]
      %v335 = vld [vmem:[%s242 + $0x6c] sm:$0xf]
      %v336 = vld [vmem:[%s242 + $0x70] sm:$0xf]
      %v337 = vld [vmem:[%s242 + $0x74] sm:$0xf]
      %v338 = vld [vmem:[%s242 + $0x78] sm:$0xf]
      %v339 = vld [vmem:[%s242 + $0x7c] sm:$0xf]
      %v340 = vld [vmem:[%s242 + $0x80] sm:$0xf]
      %v341 = vld [vmem:[%s242 + $0x84] sm:$0xf]
      %v342 = vld [vmem:[%s242 + $0x88] sm:$0xf]
      %v343 = vld [vmem:[%s242 + $0x8c] sm:$0xf]
      %v344 = vld [vmem:[%s242 + $0x90] sm:$0xf]
      %v345 = vld [vmem:[%s242 + $0x94] sm:$0xf]
      %v346 = vld [vmem:[%s242 + $0x98] sm:$0xf]
      %v347 = vld [vmem:[%s242 + $0x9c] sm:$0xf]
      %v348 = vld [vmem:[%s242 + $0xa0] sm:$0xf]
      %v349 = vld [vmem:[%s242 + $0xa4] sm:$0xf]
      %v350 = vld [vmem:[%s242 + $0xa8] sm:$0xf]
      %v351 = vld [vmem:[%s242 + $0xac] sm:$0xf]
      %v352 = vld [vmem:[%s242 + $0xb0] sm:$0xf]
      %v353 = vld [vmem:[%s242 + $0xb4] sm:$0xf]
      %v354 = vld [vmem:[%s242 + $0xb8] sm:$0xf]
      %v355 = vld [vmem:[%s242 + $0xbc] sm:$0xf]
      %v356 = vld [vmem:[%s242 + $0xc0] sm:$0xf]
      %v357 = vld [vmem:[%s242 + $0xc4] sm:$0xf]
      %v358 = vld [vmem:[%s242 + $0xc8] sm:$0xf]
      %v359 = vld [vmem:[%s242 + $0xcc] sm:$0xf]
      %v360 = vld [vmem:[%s242 + $0xd0] sm:$0xf]
      %v361 = vld [vmem:[%s242 + $0xd4] sm:$0xf]
      %v362 = vld [vmem:[%s242 + $0xd8] sm:$0xf]
      %v363 = vld [vmem:[%s242 + $0xdc] sm:$0xf]
      %v364 = vld [vmem:[%s242 + $0xe0] sm:$0xf]
      %v365 = vld [vmem:[%s242 + $0xe4] sm:$0xf]
      %v366 = vld [vmem:[%s242 + $0xe8] sm:$0xf]
      %v367 = vld [vmem:[%s242 + $0xec] sm:$0xf]
      %v368 = vld [vmem:[%s242 + $0xf0] sm:$0xf]
      %v369 = vld [vmem:[%s242 + $0xf4] sm:$0xf]
      %v370 = vld [vmem:[%s242 + $0xf8] sm:$0xf]
      %v371 = vld [vmem:[%s242 + $0xfc] sm:$0xf]
      %v372 = vld [vmem:[%s242 + $0x100] sm:$0xf]
      %v373 = vld [vmem:[%s242 + $0x104] sm:$0xf]
      %v374 = vld [vmem:[%s242 + $0x108] sm:$0xf]
      %v375 = vld [vmem:[%s242 + $0x10c] sm:$0xf]
      %v376 = vld [vmem:[%s242 + $0x110] sm:$0xf]
      %v377 = vld [vmem:[%s242 + $0x114] sm:$0xf]
      %v378 = vld [vmem:[%s242 + $0x118] sm:$0xf]
      %v379 = vld [vmem:[%s242 + $0x11c] sm:$0xf]
      %v380 = vld [vmem:[%s245] sm:$0x1]
      %v382 = vlaneseq
      %v383 = vshrl.u32 %v382, 7
      %v384 = vsub.s32 0, %v383
      %v385 = vrot.slane %v380, %v384
      %v435 = vunpack.c.l.b16 %v260
      %v436 = vunpack.c.h.b16 %v260
      %v437 = vunpack.c.l.b16 %v261
      %v438 = vunpack.c.h.b16 %v261
      %v439 = vunpack.c.l.b16 %v262
      %v440 = vunpack.c.l.b16 %v263
      %v441 = vunpack.c.h.b16 %v263
      %v442 = vunpack.c.l.b16 %v264
      %v443 = vunpack.c.h.b16 %v264
      %v444 = vunpack.c.l.b16 %v265
      %v445 = vunpack.c.l.b16 %v266
      %v446 = vunpack.c.h.b16 %v266
      %v447 = vunpack.c.l.b16 %v267
      %v448 = vunpack.c.h.b16 %v267
      %v449 = vunpack.c.l.b16 %v268
      %v450 = vunpack.c.l.b16 %v269
      %v451 = vunpack.c.h.b16 %v269
      %v452 = vunpack.c.l.b16 %v270
      %v453 = vunpack.c.h.b16 %v270
      %v454 = vunpack.c.l.b16 %v271
      %v455 = vunpack.c.l.b16 %v272
      %v456 = vunpack.c.h.b16 %v272
      %v457 = vunpack.c.l.b16 %v273
      %v458 = vunpack.c.h.b16 %v273
      %v459 = vunpack.c.l.b16 %v274
      %v460 = vunpack.c.l.b16 %v275
      %v461 = vunpack.c.h.b16 %v275
      %v462 = vunpack.c.l.b16 %v276
      %v463 = vunpack.c.h.b16 %v276
      %v464 = vunpack.c.l.b16 %v277
      %v465 = vunpack.c.l.b16 %v278
      %v466 = vunpack.c.h.b16 %v278
      %v467 = vunpack.c.l.b16 %v279
      %v468 = vunpack.c.h.b16 %v279
      %v469 = vunpack.c.l.b16 %v280
      %v470 = vunpack.c.l.b16 %v281
      %v471 = vunpack.c.h.b16 %v281
      %v472 = vunpack.c.l.b16 %v282
      %v473 = vunpack.c.h.b16 %v282
      %v474 = vunpack.c.l.b16 %v283
      %v475 = vunpack.c.l.b16 %v284
      %v476 = vunpack.c.h.b16 %v284
      %v477 = vunpack.c.l.b16 %v285
      %v478 = vunpack.c.h.b16 %v285
      %v479 = vunpack.c.l.b16 %v286
      %v480 = vunpack.c.l.b16 %v287
      %v481 = vunpack.c.h.b16 %v287
      %v482 = vunpack.c.l.b16 %v288
      %v483 = vunpack.c.h.b16 %v288
      %v484 = vunpack.c.l.b16 %v289
      %v485 = vunpack.c.l.b16 %v290
      %v486 = vunpack.c.h.b16 %v290
      %v487 = vunpack.c.l.b16 %v291
      %v488 = vunpack.c.h.b16 %v291
      %v489 = vunpack.c.l.b16 %v292
      %v490 = vunpack.c.l.b16 %v293
      %v491 = vunpack.c.h.b16 %v293
      %v492 = vunpack.c.l.b16 %v294
      %v493 = vunpack.c.h.b16 %v294
      %v494 = vunpack.c.l.b16 %v295
      %v495 = vunpack.c.l.b16 %v296
      %v496 = vunpack.c.h.b16 %v296
      %v497 = vunpack.c.l.b16 %v297
      %v498 = vunpack.c.h.b16 %v297
      %v499 = vunpack.c.l.b16 %v298
      %v500 = vunpack.c.l.b16 %v299
      %v501 = vunpack.c.h.b16 %v299
      %v502 = vunpack.c.l.b16 %v300
      %v503 = vunpack.c.h.b16 %v300
      %v504 = vunpack.c.l.b16 %v301
      %v505 = vunpack.c.l.b16 %v302
      %v506 = vunpack.c.h.b16 %v302
      %v507 = vunpack.c.l.b16 %v303
      %v508 = vunpack.c.h.b16 %v303
      %v509 = vunpack.c.l.b16 %v304
      %v510 = vunpack.c.l.b16 %v305
      %v511 = vunpack.c.h.b16 %v305
      %v512 = vunpack.c.l.b16 %v306
      %v513 = vunpack.c.h.b16 %v306
      %v514 = vunpack.c.l.b16 %v307
      %v515 = vpack.c.b16 %v440, %v435
      %v516 = vpack.c.b16 %v441, %v436
      %v517 = vpack.c.b16 %v442, %v437
      %v518 = vpack.c.b16 %v443, %v438
      %v519 = vpack.c.b16 %v444, %v439
      %v520 = vpack.c.b16 %v450, %v445
      %v521 = vpack.c.b16 %v451, %v446
      %v522 = vpack.c.b16 %v452, %v447
      %v523 = vpack.c.b16 %v453, %v448
      %v524 = vpack.c.b16 %v454, %v449
      %v525 = vpack.c.b16 %v460, %v455
      %v526 = vpack.c.b16 %v461, %v456
      %v527 = vpack.c.b16 %v462, %v457
      %v528 = vpack.c.b16 %v463, %v458
      %v529 = vpack.c.b16 %v464, %v459
      %v530 = vpack.c.b16 %v470, %v465
      %v531 = vpack.c.b16 %v471, %v466
      %v532 = vpack.c.b16 %v472, %v467
      %v533 = vpack.c.b16 %v473, %v468
      %v534 = vpack.c.b16 %v474, %v469
      %v535 = vpack.c.b16 %v480, %v475
      %v536 = vpack.c.b16 %v481, %v476
      %v537 = vpack.c.b16 %v482, %v477
      %v538 = vpack.c.b16 %v483, %v478
      %v539 = vpack.c.b16 %v484, %v479
      %v540 = vpack.c.b16 %v490, %v485
      %v541 = vpack.c.b16 %v491, %v486
      %v542 = vpack.c.b16 %v492, %v487
      %v543 = vpack.c.b16 %v493, %v488
      %v544 = vpack.c.b16 %v494, %v489
      %v545 = vpack.c.b16 %v500, %v495
      %v546 = vpack.c.b16 %v501, %v496
      %v547 = vpack.c.b16 %v502, %v497
      %v548 = vpack.c.b16 %v503, %v498
      %v549 = vpack.c.b16 %v504, %v499
      %v550 = vpack.c.b16 %v510, %v505
      %v551 = vpack.c.b16 %v511, %v506
      %v552 = vpack.c.b16 %v512, %v507
      %v553 = vpack.c.b16 %v513, %v508
      %v554 = vpack.c.b16 %v514, %v509
      %v659 = vunpack.c.l.b16 %v308
      %v660 = vunpack.c.l.b16 %v309
      %v661 = vunpack.c.l.b16 %v310
      %v662 = vunpack.c.l.b16 %v311
      %v663 = vunpack.c.l.b16 %v312
      %v664 = vunpack.c.l.b16 %v313
      %v665 = vunpack.c.l.b16 %v314
      %v666 = vunpack.c.l.b16 %v315
      %v667 = vunpack.c.l.b16 %v316
      %v668 = vunpack.c.l.b16 %v317
      %v669 = vunpack.c.l.b16 %v318
      %v670 = vunpack.c.l.b16 %v319
      %v671 = vunpack.c.l.b16 %v320
      %v672 = vunpack.c.l.b16 %v321
      %v673 = vunpack.c.l.b16 %v322
      %v674 = vunpack.c.l.b16 %v323
      %v675 = vunpack.c.l.b16 %v324
      %v676 = vunpack.c.l.b16 %v325
      %v677 = vunpack.c.l.b16 %v326
      %v678 = vunpack.c.l.b16 %v327
      %v679 = vunpack.c.l.b16 %v328
      %v680 = vunpack.c.l.b16 %v329
      %v681 = vunpack.c.l.b16 %v330
      %v682 = vunpack.c.l.b16 %v331
      %v683 = vunpack.c.l.b16 %v332
      %v684 = vunpack.c.l.b16 %v333
      %v685 = vunpack.c.l.b16 %v334
      %v686 = vunpack.c.l.b16 %v335
      %v687 = vunpack.c.l.b16 %v336
      %v688 = vunpack.c.l.b16 %v337
      %v689 = vunpack.c.l.b16 %v338
      %v690 = vunpack.c.l.b16 %v339
      %v691 = vunpack.c.l.b16 %v340
      %v692 = vunpack.c.l.b16 %v341
      %v693 = vunpack.c.l.b16 %v342
      %v694 = vunpack.c.l.b16 %v343
      %v695 = vunpack.c.l.b16 %v344
      %v696 = vunpack.c.l.b16 %v345
      %v697 = vunpack.c.l.b16 %v346
      %v698 = vunpack.c.l.b16 %v347
      %v699 = vunpack.c.l.b16 %v348
      %v700 = vunpack.c.l.b16 %v349
      %v701 = vunpack.c.l.b16 %v350
      %v702 = vunpack.c.l.b16 %v351
      %v703 = vunpack.c.l.b16 %v352
      %v704 = vunpack.c.l.b16 %v353
      %v705 = vunpack.c.l.b16 %v354
      %v706 = vunpack.c.l.b16 %v355
      %v707 = vunpack.c.l.b16 %v356
      %v708 = vunpack.c.l.b16 %v357
      %v709 = vunpack.c.l.b16 %v358
      %v710 = vunpack.c.l.b16 %v359
      %v711 = vunpack.c.l.b16 %v360
      %v712 = vunpack.c.l.b16 %v361
      %v713 = vunpack.c.l.b16 %v362
      %v714 = vunpack.c.l.b16 %v363
      %v715 = vunpack.c.l.b16 %v364
      %v716 = vunpack.c.l.b16 %v365
      %v717 = vunpack.c.l.b16 %v366
      %v718 = vunpack.c.l.b16 %v367
      %v719 = vunpack.c.l.b16 %v368
      %v720 = vunpack.c.l.b16 %v369
      %v721 = vunpack.c.l.b16 %v370
      %v722 = vunpack.c.l.b16 %v371
      %v723 = vunpack.c.l.b16 %v372
      %v724 = vunpack.c.l.b16 %v373
      %v725 = vunpack.c.l.b16 %v374
      %v726 = vunpack.c.l.b16 %v375
      %v727 = vunpack.c.l.b16 %v376
      %v728 = vunpack.c.l.b16 %v377
      %v729 = vunpack.c.l.b16 %v378
      %v730 = vunpack.c.l.b16 %v379
      %v731 = vpack.c.b16 %v660, %v659
      %v732 = vpack.c.b16 %v662, %v661
      %v733 = vpack.c.b16 %v664, %v663
      %v734 = vpack.c.b16 %v666, %v665
      %v735 = vpack.c.b16 %v668, %v667
      %v736 = vpack.c.b16 %v670, %v669
      %v737 = vpack.c.b16 %v672, %v671
      %v738 = vpack.c.b16 %v674, %v673
      %v739 = vpack.c.b16 %v676, %v675
      %v740 = vpack.c.b16 %v678, %v677
      %v741 = vpack.c.b16 %v680, %v679
      %v742 = vpack.c.b16 %v682, %v681
      %v743 = vpack.c.b16 %v684, %v683
      %v744 = vpack.c.b16 %v686, %v685
      %v745 = vpack.c.b16 %v688, %v687
      %v746 = vpack.c.b16 %v690, %v689
      %v747 = vpack.c.b16 %v692, %v691
      %v748 = vpack.c.b16 %v694, %v693
      %v749 = vpack.c.b16 %v696, %v695
      %v750 = vpack.c.b16 %v698, %v697
      %v751 = vpack.c.b16 %v700, %v699
      %v752 = vpack.c.b16 %v702, %v701
      %v753 = vpack.c.b16 %v704, %v703
      %v754 = vpack.c.b16 %v706, %v705
      %v755 = vpack.c.b16 %v708, %v707
      %v756 = vpack.c.b16 %v710, %v709
      %v757 = vpack.c.b16 %v712, %v711
      %v758 = vpack.c.b16 %v714, %v713
      %v759 = vpack.c.b16 %v716, %v715
      %v760 = vpack.c.b16 %v718, %v717
      %v761 = vpack.c.b16 %v720, %v719
      %v762 = vpack.c.b16 %v722, %v721
      %v763 = vpack.c.b16 %v724, %v723
      %v764 = vpack.c.b16 %v726, %v725
      %v765 = vpack.c.b16 %v728, %v727
      %v766 = vpack.c.b16 %v730, %v729
      %vm803 = vcmask 523264
      %v805 = vsel %vm803, %v519, 0
      %v808 = vsel %vm803, %v524, 0
      %v811 = vsel %vm803, %v529, 0
      %v814 = vsel %vm803, %v534, 0
      %v817 = vsel %vm803, %v539, 0
      %v820 = vsel %vm803, %v544, 0
      %v823 = vsel %vm803, %v549, 0
      %v826 = vsel %vm803, %v554, 0
      %828 = vmatprep.subr.bf16.mxu0 0
      %829 = vmatpush1.bf16.msra.mxu0 %v731
      %830 = vmatprep.subr.bf16.mxu0 0
      %831 = vmatpush1.bf16.msra.mxu0 %v732
      %832 = vmatprep.subr.bf16.mxu0 0
      %833 = vmatpush1.bf16.msra.mxu0 %v733
      %834 = vmatprep.subr.bf16.mxu0 0
      %835 = vmatpush1.bf16.msra.mxu0 %v734
      %836 = vmatprep.subr.bf16.mxu0 0
      %837 = vmatpush1.bf16.msra.mxu0 %v735
      %838 = vmatprep.subr.bf16.mxu0 0
      %839 = vmatpush1.bf16.msra.mxu0 %v736
      %840 = vmatprep.subr.bf16.mxu0 0
      %841 = vmatpush1.bf16.msra.mxu0 %v737
      %842 = vmatprep.subr.bf16.mxu0 0
      %843 = vmatpush1.bf16.msra.mxu0 %v738
      %844 = vmatprep.subr.bf16.mxu0 0
      %845 = vmatpush1.bf16.msra.mxu0 %v739
      %846 = vmatprep.subr.bf16.mxu0 0
      %847 = vmatpush1.bf16.msra.mxu0 %v740
      %848 = vmatprep.subr.bf16.mxu0 0
      %849 = vmatpush1.bf16.msra.mxu0 %v741
      %850 = vmatprep.subr.bf16.mxu0 0
      %851 = vmatpush1.bf16.msra.mxu0 %v742
      %852 = vmatprep.subr.bf16.mxu0 0
      %853 = vmatpush1.bf16.msra.mxu0 %v743
      %854 = vmatprep.subr.bf16.mxu0 0
      %855 = vmatpush1.bf16.msra.mxu0 %v744
      %856 = vmatprep.subr.bf16.mxu0 0
      %857 = vmatpush1.bf16.msra.mxu0 %v745
      %858 = vmatprep.subr.bf16.mxu0 0
      %859 = vmatpush1.bf16.msra.mxu0 %v746
      %860 = vmatprep.mubr.bf16.mxu0 %v516
      %861 = vmatmul.mubr.bf16.gmra.mrb[0].mxu0 %v515
      %v862 = vpop.f32.mrb[0].mxu0
      %v863 = vadd.f32 %v385, %v862
      %v864 = vpop.f32.mrb[0].mxu0
      %v865 = vpop.f32.mrb[0].mxu0
      %v866 = vadd.f32 %v385, %v865
      %v867 = vpop.f32.mrb[0].mxu0
      %868 = vmatprep.mubr.bf16.mxu0 %v521
      %869 = vmatmul.mubr.bf16.gmra.mrb[0].mxu0 %v520
      %v870 = vpop.f32.mrb[0].mxu0
      %v871 = vadd.f32 %v385, %v870
      %v872 = vpop.f32.mrb[0].mxu0
      %v873 = vpop.f32.mrb[0].mxu0
      %v874 = vadd.f32 %v385, %v873
      %v875 = vpop.f32.mrb[0].mxu0
      %876 = vmatprep.mubr.bf16.mxu0 %v526
      %877 = vmatmul.mubr.bf16.gmra.mrb[0].mxu0 %v525
      %v878 = vpop.f32.mrb[0].mxu0
      %v879 = vadd.f32 %v385, %v878
      %v880 = vpop.f32.mrb[0].mxu0
      %v881 = vpop.f32.mrb[0].mxu0
      %v882 = vadd.f32 %v385, %v881
      %v883 = vpop.f32.mrb[0].mxu0
      %884 = vmatprep.mubr.bf16.mxu0 %v531
      %885 = vmatmul.mubr.bf16.gmra.mrb[0].mxu0 %v530
      %v886 = vpop.f32.mrb[0].mxu0
      %v887 = vadd.f32 %v385, %v886
      %v888 = vpop.f32.mrb[0].mxu0
      %v889 = vpop.f32.mrb[0].mxu0
      %v890 = vadd.f32 %v385, %v889
      %v891 = vpop.f32.mrb[0].mxu0
      %892 = vmatprep.mubr.bf16.mxu0 %v536
      %893 = vmatmul.mubr.bf16.gmra.mrb[0].mxu0 %v535
      %v894 = vpop.f32.mrb[0].mxu0
      %v895 = vadd.f32 %v385, %v894
      %v896 = vpop.f32.mrb[0].mxu0
      %v897 = vpop.f32.mrb[0].mxu0
      %v898 = vadd.f32 %v385, %v897
      %v899 = vpop.f32.mrb[0].mxu0
      %900 = vmatprep.mubr.bf16.mxu0 %v541
      %901 = vmatmul.mubr.bf16.gmra.mrb[0].mxu0 %v540
      %v902 = vpop.f32.mrb[0].mxu0
      %v903 = vadd.f32 %v385, %v902
      %v904 = vpop.f32.mrb[0].mxu0
      %v905 = vpop.f32.mrb[0].mxu0
      %v906 = vadd.f32 %v385, %v905
      %v907 = vpop.f32.mrb[0].mxu0
      %908 = vmatprep.mubr.bf16.mxu0 %v546
      %909 = vmatmul.mubr.bf16.gmra.mrb[0].mxu0 %v545
      %v910 = vpop.f32.mrb[0].mxu0
      %v911 = vadd.f32 %v385, %v910
      %v912 = vpop.f32.mrb[0].mxu0
      %v913 = vpop.f32.mrb[0].mxu0
      %v914 = vadd.f32 %v385, %v913
      %v915 = vpop.f32.mrb[0].mxu0
      %916 = vmatprep.mubr.bf16.mxu0 %v551
      %917 = vmatmul.mubr.bf16.gmra.mrb[0].mxu0 %v550
      %v918 = vpop.f32.mrb[0].mxu0
      %v919 = vadd.f32 %v385, %v918
      %v920 = vpop.f32.mrb[0].mxu0
      %v921 = vpop.f32.mrb[0].mxu0
      %v922 = vadd.f32 %v385, %v921
      %v923 = vpop.f32.mrb[0].mxu0
      %924 = vdwg.mxu0
      %925 = vmatprep.subr.bf16.mxu0 0
      %926 = vmatpush1.bf16.msra.mxu0 %v747
      %927 = vmatprep.subr.bf16.mxu0 0
      %928 = vmatpush1.bf16.msra.mxu0 %v748
      %929 = vmatprep.subr.bf16.mxu0 0
      %930 = vmatpush1.bf16.msra.mxu0 %v749
      %931 = vmatprep.subr.bf16.mxu0 0
      %932 = vmatpush1.bf16.msra.mxu0 %v750
      %933 = vmatprep.subr.bf16.mxu0 0
      %934 = vmatpush1.bf16.msra.mxu0 %v751
      %935 = vmatprep.subr.bf16.mxu0 0
      %936 = vmatpush1.bf16.msra.mxu0 %v752
      %937 = vmatprep.subr.bf16.mxu0 0
      %938 = vmatpush1.bf16.msra.mxu0 %v753
      %939 = vmatprep.subr.bf16.mxu0 0
      %940 = vmatpush1.bf16.msra.mxu0 %v754
      %941 = vmatprep.subr.bf16.mxu0 0
      %942 = vmatpush1.bf16.msra.mxu0 %v755
      %943 = vmatprep.subr.bf16.mxu0 0
      %944 = vmatpush1.bf16.msra.mxu0 %v756
      %945 = vmatprep.subr.bf16.mxu0 0
      %946 = vmatpush1.bf16.msra.mxu0 %v757
      %947 = vmatprep.subr.bf16.mxu0 0
      %948 = vmatpush1.bf16.msra.mxu0 %v758
      %949 = vmatprep.subr.bf16.mxu0 0
      %950 = vmatpush1.bf16.msra.mxu0 %v759
      %951 = vmatprep.subr.bf16.mxu0 0
      %952 = vmatpush1.bf16.msra.mxu0 %v760
      %953 = vmatprep.subr.bf16.mxu0 0
      %954 = vmatpush1.bf16.msra.mxu0 %v761
      %955 = vmatprep.subr.bf16.mxu0 0
      %956 = vmatpush1.bf16.msra.mxu0 %v762
      %957 = vmatprep.mubr.bf16.mxu0 %v518
      %958 = vmatmul.mubr.bf16.gmra.mrb[0].mxu0 %v517
      %v959 = vpop.f32.mrb[0].mxu0
      %v960 = vadd.f32 %v863, %v959
      %v961 = vpop.f32.mrb[0].mxu0
      %v962 = vpop.f32.mrb[0].mxu0
      %v963 = vadd.f32 %v866, %v962
      %v964 = vpop.f32.mrb[0].mxu0
      %965 = vmatprep.mubr.bf16.mxu0 %v523
      %966 = vmatmul.mubr.bf16.gmra.mrb[0].mxu0 %v522
      %v967 = vpop.f32.mrb[0].mxu0
      %v968 = vadd.f32 %v871, %v967
      %v969 = vpop.f32.mrb[0].mxu0
      %v970 = vpop.f32.mrb[0].mxu0
      %v971 = vadd.f32 %v874, %v970
      %v972 = vpop.f32.mrb[0].mxu0
      %973 = vmatprep.mubr.bf16.mxu0 %v528
      %974 = vmatmul.mubr.bf16.gmra.mrb[0].mxu0 %v527
      %v975 = vpop.f32.mrb[0].mxu0
      %v976 = vadd.f32 %v879, %v975
      %v977 = vpop.f32.mrb[0].mxu0
      %v978 = vpop.f32.mrb[0].mxu0
      %v979 = vadd.f32 %v882, %v978
      %v980 = vpop.f32.mrb[0].mxu0
      %981 = vmatprep.mubr.bf16.mxu0 %v533
      %982 = vmatmul.mubr.bf16.gmra.mrb[0].mxu0 %v532
      %v983 = vpop.f32.mrb[0].mxu0
      %v984 = vadd.f32 %v887, %v983
      %v985 = vpop.f32.mrb[0].mxu0
      %v986 = vpop.f32.mrb[0].mxu0
      %v987 = vadd.f32 %v890, %v986
      %v988 = vpop.f32.mrb[0].mxu0
      %989 = vmatprep.mubr.bf16.mxu0 %v538
      %990 = vmatmul.mubr.bf16.gmra.mrb[0].mxu0 %v537
      %v991 = vpop.f32.mrb[0].mxu0
      %v992 = vadd.f32 %v895, %v991
      %v993 = vpop.f32.mrb[0].mxu0
      %v994 = vpop.f32.mrb[0].mxu0
      %v995 = vadd.f32 %v898, %v994
      %v996 = vpop.f32.mrb[0].mxu0
      %997 = vmatprep.mubr.bf16.mxu0 %v543
      %998 = vmatmul.mubr.bf16.gmra.mrb[0].mxu0 %v542
      %v999 = vpop.f32.mrb[0].mxu0
      %v1000 = vadd.f32 %v903, %v999
      %v1001 = vpop.f32.mrb[0].mxu0
      %v1002 = vpop.f32.mrb[0].mxu0
      %v1003 = vadd.f32 %v906, %v1002
      %v1004 = vpop.f32.mrb[0].mxu0
      %1005 = vmatprep.mubr.bf16.mxu0 %v548
      %1006 = vmatmul.mubr.bf16.gmra.mrb[0].mxu0 %v547
      %v1007 = vpop.f32.mrb[0].mxu0
      %v1008 = vadd.f32 %v911, %v1007
      %v1009 = vpop.f32.mrb[0].mxu0
      %v1010 = vpop.f32.mrb[0].mxu0
      %v1011 = vadd.f32 %v914, %v1010
      %v1012 = vpop.f32.mrb[0].mxu0
      %1013 = vmatprep.mubr.bf16.mxu0 %v553
      %1014 = vmatmul.mubr.bf16.gmra.mrb[0].mxu0 %v552
      %v1015 = vpop.f32.mrb[0].mxu0
      %v1016 = vadd.f32 %v919, %v1015
      %v1017 = vpop.f32.mrb[0].mxu0
      %v1018 = vpop.f32.mrb[0].mxu0
      %v1019 = vadd.f32 %v922, %v1018
      %v1020 = vpop.f32.mrb[0].mxu0
      %1021 = vdwg.mxu0
      %1022 = vmatprep.subr.bf16.mxu0 0
      %1023 = vmatpush1.bf16.msra.mxu0 %v763
      %1024 = vmatprep.subr.bf16.mxu0 0
      %1025 = vmatpush1.bf16.msra.mxu0 %v764
      %1026 = vmatprep.subr.bf16.mxu0 0
      %1027 = vmatpush1.bf16.msra.mxu0 %v765
      %1028 = vmatprep.subr.bf16.mxu0 0
      %1029 = vmatpush1.bf16.msra.mxu0 %v766
      %1030 = vmatprep.subr.bf16.mxu0 0
      %1031 = vmatpush1.bf16.msra.mxu0 0
      %1032 = vmatprep.subr.bf16.mxu0 0
      %1033 = vmatpush1.bf16.msra.mxu0 0
      %1034 = vmatprep.subr.bf16.mxu0 0
      %1035 = vmatpush1.bf16.msra.mxu0 0
      %1036 = vmatprep.subr.bf16.mxu0 0
      %1037 = vmatpush1.bf16.msra.mxu0 0
      %1038 = vmatprep.subr.bf16.mxu0 0
      %1039 = vmatpush1.bf16.msra.mxu0 0
      %1040 = vmatprep.subr.bf16.mxu0 0
      %1041 = vmatpush1.bf16.msra.mxu0 0
      %1042 = vmatprep.subr.bf16.mxu0 0
      %1043 = vmatpush1.bf16.msra.mxu0 0
      %1044 = vmatprep.subr.bf16.mxu0 0
      %1045 = vmatpush1.bf16.msra.mxu0 0
      %1046 = vmatprep.subr.bf16.mxu0 0
      %1047 = vmatpush1.bf16.msra.mxu0 0
      %1048 = vmatprep.subr.bf16.mxu0 0
      %1049 = vmatpush1.bf16.msra.mxu0 0
      %1050 = vmatprep.subr.bf16.mxu0 0
      %1051 = vmatpush1.bf16.msra.mxu0 0
      %1052 = vmatprep.subr.bf16.mxu0 0
      %1053 = vmatpush1.bf16.msra.mxu0 0
      %1054 = vmatprep.mubr.bf16.mxu0 0
      %1055 = vmatmul.mubr.bf16.gmra.mrb[0].mxu0 %v805
      %v1056 = vpop.f32.mrb[0].mxu0
      %v1057 = vadd.f32 %v960, %v1056
      %v1058 = vpop.f32.mrb[0].mxu0
      %v1059 = vpop.f32.mrb[0].mxu0
      %v1060 = vadd.f32 %v963, %v1059
      %v1061 = vpop.f32.mrb[0].mxu0
      %1062 = vmatprep.mubr.bf16.mxu0 0
      %1063 = vmatmul.mubr.bf16.gmra.mrb[0].mxu0 %v808
      %v1064 = vpop.f32.mrb[0].mxu0
      %v1065 = vadd.f32 %v968, %v1064
      %v1066 = vpop.f32.mrb[0].mxu0
      %v1067 = vpop.f32.mrb[0].mxu0
      %v1068 = vadd.f32 %v971, %v1067
      %v1069 = vpop.f32.mrb[0].mxu0
      %1070 = vmatprep.mubr.bf16.mxu0 0
      %1071 = vmatmul.mubr.bf16.gmra.mrb[0].mxu0 %v811
      %v1072 = vpop.f32.mrb[0].mxu0
      %v1073 = vadd.f32 %v976, %v1072
      %v1074 = vpop.f32.mrb[0].mxu0
      %v1075 = vpop.f32.mrb[0].mxu0
      %v1076 = vadd.f32 %v979, %v1075
      %v1077 = vpop.f32.mrb[0].mxu0
      %1078 = vmatprep.mubr.bf16.mxu0 0
      %1079 = vmatmul.mubr.bf16.gmra.mrb[0].mxu0 %v814
      %v1080 = vpop.f32.mrb[0].mxu0
      %v1081 = vadd.f32 %v984, %v1080
      %v1082 = vpop.f32.mrb[0].mxu0
      %v1083 = vpop.f32.mrb[0].mxu0
      %v1084 = vadd.f32 %v987, %v1083
      %v1085 = vpop.f32.mrb[0].mxu0
      %1086 = vmatprep.mubr.bf16.mxu0 0
      %1087 = vmatmul.mubr.bf16.gmra.mrb[0].mxu0 %v817
      %v1088 = vpop.f32.mrb[0].mxu0
      %v1089 = vadd.f32 %v992, %v1088
      %v1090 = vpop.f32.mrb[0].mxu0
      %v1091 = vpop.f32.mrb[0].mxu0
      %v1092 = vadd.f32 %v995, %v1091
      %v1093 = vpop.f32.mrb[0].mxu0
      %1094 = vmatprep.mubr.bf16.mxu0 0
      %1095 = vmatmul.mubr.bf16.gmra.mrb[0].mxu0 %v820
      %v1096 = vpop.f32.mrb[0].mxu0
      %v1097 = vadd.f32 %v1000, %v1096
      %v1098 = vpop.f32.mrb[0].mxu0
      %v1099 = vpop.f32.mrb[0].mxu0
      %v1100 = vadd.f32 %v1003, %v1099
      %v1101 = vpop.f32.mrb[0].mxu0
      %1102 = vmatprep.mubr.bf16.mxu0 0
      %1103 = vmatmul.mubr.bf16.gmra.mrb[0].mxu0 %v823
      %v1104 = vpop.f32.mrb[0].mxu0
      %v1105 = vadd.f32 %v1008, %v1104
      %v1106 = vpop.f32.mrb[0].mxu0
      %v1107 = vpop.f32.mrb[0].mxu0
      %v1108 = vadd.f32 %v1011, %v1107
      %v1109 = vpop.f32.mrb[0].mxu0
      %1110 = vmatprep.mubr.bf16.mxu0 0
      %1111 = vmatmul.mubr.bf16.gmra.mrb[0].mxu0 %v826
      %v1112 = vpop.f32.mrb[0].mxu0
      %v1113 = vadd.f32 %v1016, %v1112
      %v1114 = vpop.f32.mrb[0].mxu0
      %v1115 = vpop.f32.mrb[0].mxu0
      %v1116 = vadd.f32 %v1019, %v1115
      %v1117 = vpop.f32.mrb[0].mxu0
      %1118 = vdwg.mxu0
      %v1119 = vmax.f32 %v1057, 0.0
      %v1120 = vmax.f32 %v1060, 0.0
      %v1121 = vmax.f32 %v1065, 0.0
      %v1122 = vmax.f32 %v1068, 0.0
      %v1123 = vmax.f32 %v1073, 0.0
      %v1124 = vmax.f32 %v1076, 0.0
      %v1125 = vmax.f32 %v1081, 0.0
      %v1126 = vmax.f32 %v1084, 0.0
      %v1127 = vmax.f32 %v1089, 0.0
      %v1128 = vmax.f32 %v1092, 0.0
      %v1129 = vmax.f32 %v1097, 0.0
      %v1130 = vmax.f32 %v1100, 0.0
      %v1131 = vmax.f32 %v1105, 0.0
      %v1132 = vmax.f32 %v1108, 0.0
      %v1133 = vmax.f32 %v1113, 0.0
      %v1134 = vmax.f32 %v1116, 0.0
      %1135 = vst [vmem:[%s257] sm:$0xff] %v1119
      %1136 = vst [vmem:[%s257 + $0x8] sm:$0xff] %v1120
      %1137 = vst [vmem:[%s257 + $0x10] sm:$0xff] %v1121
      %1138 = vst [vmem:[%s257 + $0x18] sm:$0xff] %v1122
      %1139 = vst [vmem:[%s257 + $0x20] sm:$0xff] %v1123
      %1140 = vst [vmem:[%s257 + $0x28] sm:$0xff] %v1124
      %1141 = vst [vmem:[%s257 + $0x30] sm:$0xff] %v1125
      %1142 = vst [vmem:[%s257 + $0x38] sm:$0xff] %v1126
      %1143 = vst [vmem:[%s257 + $0x40] sm:$0xff] %v1127
      %1144 = vst [vmem:[%s257 + $0x48] sm:$0xff] %v1128
      %1145 = vst [vmem:[%s257 + $0x50] sm:$0xff] %v1129
      %1146 = vst [vmem:[%s257 + $0x58] sm:$0xff] %v1130
      %1147 = vst [vmem:[%s257 + $0x60] sm:$0xff] %v1131
      %1148 = vst [vmem:[%s257 + $0x68] sm:$0xff] %v1132
      %1149 = vst [vmem:[%s257 + $0x70] sm:$0xff] %v1133
      %1150 = vst [vmem:[%s257 + $0x78] sm:$0xff] %v1134
      %s1151 = smul.u32 16, %s20
      %p1152 = scmp.lt.s32.totalorder %s19, 1
      %s1153 = scalar_select %p1152, %s19, 1
      %p1154 = scmp.lt.s32.totalorder %s1151, 31
      %s1155 = scalar_select %p1154, %s1151, 31
      %p1156 = scmp.lt.s32.totalorder %s21, 0
      %s1157 = scalar_select %p1156, %s21, 0
      %s1158 = sadd.s32 %s1157, %s1155
      %s1159 = smul.addr %s1153, 32
      %s1160 = sadd.s32 %s1158, %s1159
      %s1161 = smul.addr %s1160, 8
      %s1162 = scalar_lea.vmem %s3, %s1161
      // Predicated region
      $region33: #{inception_b_forward.7} parent=31 // pred_check
        %p1163 = pneg %p135
      $region34: #{inception_b_forward.7} parent=31 // pred_check_branch
        %1165 = sbr.rel (%p1163) target = $region36
      $region35: #{inception_b_forward.7} parent=31 // pred_region
        %s1166 = smul.u32 16, %s20
      $region36: #{inception_b_forward.7} parent=31 // pred_fallthru
        _
    $region32: #{inception_b_forward.7} parent=5 // pred_fallthru
      _
    %p1167 = scmp.le.s32.totalorder 2, %s9
    // Predicated region
    $region37: #{inception_b_forward.7} parent=5 // pred_check
      %p1168 = pneg %p1167
    $region38: #{inception_b_forward.7} parent=5 // pred_check_branch
      %1170 = sbr.rel (%p1168) target = $region40
    $region39: #{inception_b_forward.7} parent=5 // pred_region
      %s1171 = ssub.s32 %s9, 2
      // Predicated region
      $region41: #{inception_b_forward.7} parent=39 // pred_check
        %p1172 = pneg %p141
      $region42: #{inception_b_forward.7} parent=39 // pred_check_branch
        %1174 = sbr.rel (%p1172) target = $region44
      $region43: #{inception_b_forward.7} parent=39 // pred_region
        %s1175 = smul.u32 16, %s23
        %p1176 = scmp.lt.s32.totalorder %s22, 1
        %s1177 = scalar_select %p1176, %s22, 1
        %p1178 = scmp.lt.s32.totalorder %s1175, 31
        %s1179 = scalar_select %p1178, %s1175, 31
        %p1180 = scmp.lt.s32.totalorder %s24, 0
        %s1181 = scalar_select %p1180, %s24, 0
        %s1182 = sadd.s32 %s1181, %s1179
        %s1183 = smul.addr %s1177, 32
        %s1184 = sadd.s32 %s1182, %s1183
        %s1185 = smul.addr %s1184, 8
        %s1186 = scalar_lea.vmem %s3, %s1185
      $region44: #{inception_b_forward.7} parent=39 // pred_fallthru
        _
    $region40: #{inception_b_forward.7} parent=5 // pred_fallthru
      _
  $region6: #{inception_b_forward.7} parent=0 // loop_footer
    %s13 = sadd.s32 1, %s9
  $region7: #{inception_b_forward.7} parent=0 // loop_footer_branch
    %8 = sbr.rel target = $region3
  $region8: #{inception_b_forward.7} parent=0 // loop_exit
    _

// kernel: inception_b_forward.8
$region0: #{inception_b_forward.8}
  #allocation0 [shape = 'u32[]', space=smem, size = 0x4, offset = 0x4, fixed_abs, tag = 'smem constant byte address 0x4 - core index']
  #allocation1 [shape = 'u32[144,128]{1,0:T(1,128)}', space=vmem, size = 0x12000, scoped, tag = 'internal scratch']
  %s0 = inlined_call_operand.vmem [shape: bf16[2,64,864], index: 0, kind: input, shape index: {}]
  %s1 = inlined_call_operand.vmem [shape: bf16[864,128], index: 1, kind: input, shape index: {}]
  %s2 = inlined_call_operand.vmem [shape: f32[1,128], index: 2, kind: input, shape index: {}]
  %s3 = inlined_call_operand.vmem [shape: f32[2,64,128], index: 3, kind: output, shape index: {}]
  %s4 = sld [smem:[#allocation0]]
  $region45: #{inception_b_forward.8} parent=0
    _
  %s6 = ssub.s32 1, %s4
  %s7 = scalar_select 0, %s6, %s4
  loop: start=0, step=1, limit=4
  $region2: #{inception_b_forward.8} parent=0 // loop_pre_header
    _
  $region3: #{inception_b_forward.8} parent=0 // loop_header
    %s9 = sphi 0, %s13
    %p10 = scmp.ge.s32.totalorder %s9, 4
    %s16 = sphi 0, %s35
    %s17 = sphi 0, %s31
    %s18 = sphi 0, %s27
    %s19 = sphi 0, %s16
    %s20 = sphi 0, %s17
    %s21 = sphi 0, %s18
    %s22 = sphi 0, %s19
    %s23 = sphi 0, %s20
    %s24 = sphi 0, %s21
    %s40 = sphi 0, %s42
    %s43 = sphi 0, %s40
    %s44 = sphi 0, %s43
    %s60 = sphi 0, %s44
    %s66 = sphi 0, %s68
    %s69 = sphi 0, %s66
    %s70 = sphi 0, %s69
    %s86 = sphi 0, %s70
    %s92 = sphi 0, %s94
    %s95 = sphi 0, %s92
    %s96 = sphi 0, %s95
    %s112 = sphi 0, %s96
    %s122 = sphi 0, %s124
    %s125 = sphi 0, %s122
    %s126 = sphi 0, %s125
    %s142 = sphi 0, %s126
  $region4: #{inception_b_forward.8} parent=0 // loop_header_branch
    %12 = sbr.rel (%p10) target = $region8
  $region5: #{inception_b_forward.8} parent=0 // loop_body
    %s14 = ssub.s32 %s9, 1
    %s15 = ssub.s32 %s9, 2
    %s25 = sadd.s32 1, %s18
    %p26 = scmp.ge.s32.totalorder %s25, 1
    %s27 = scalar_select %p26, 0, %s25
    %s28 = sadd.s32 1, %s17
    %s29 = scalar_select %p26, %s28, %s17
    %p30 = scmp.ge.s32.totalorder %s29, 1
    %s31 = scalar_select %p30, 0, %s29
    %s32 = sadd.s32 1, %s16
    %s33 = scalar_select %p30, %s32, %s16
    %p34 = scmp.ge.s32.totalorder %s33, 2
    %s35 = scalar_select %p34, 0, %s33
    %s36 = ssub.s32 %s16, %s35
    %s37 = ssub.s32 %s17, %s31
    %s38 = sor.u32 %s36, %s37
    %p39 = scmp.eq.s32.totalorder %s38, 0
    %s41 = sadd.s32 %s40, 1
    %s42 = scalar_select %p39, %s40, %s41
    %p45 = pneg %p39
    %p46 = scmp.eq.s32.totalorder %s9, 1
    %p47 = por %p45, %p46
    %p48 = scmp.ne.s32.totalorder %s40, %s43
    %p49 = scmp.eq.s32.totalorder %s9, 0
    %p50 = por %p48, %p49
    %p51 = scmp.ne.s32.totalorder %s40, %s43
    %p52 = scmp.eq.s32.totalorder %s14, 1
    %p53 = por %p51, %p52
    %p54 = scmp.ne.s32.totalorder %s43, %s44
    %p55 = scmp.eq.s32.totalorder %s14, 0
    %p56 = por %p54, %p55
    %p57 = scmp.ne.s32.totalorder %s43, %s44
    %p58 = scmp.eq.s32.totalorder %s15, 1
    %p59 = por %p57, %p58
    %p61 = scmp.ne.s32.totalorder %s44, %s60
    %p62 = scmp.eq.s32.totalorder %s15, 0
    %p63 = por %p61, %p62
    %s64 = ssub.s32 %s18, %s27
    %p65 = scmp.eq.s32.totalorder %s64, 0
    %s67 = sadd.s32 %s66, 1
    %s68 = scalar_select %p65, %s66, %s67
    %p71 = pneg %p65
    %p72 = scmp.eq.s32.totalorder %s9, 1
    %p73 = por %p71, %p72
    %p74 = scmp.ne.s32.totalorder %s66, %s69
    %p75 = scmp.eq.s32.totalorder %s9, 0
    %p76 = por %p74, %p75
    %p77 = scmp.ne.s32.totalorder %s66, %s69
    %p78 = scmp.eq.s32.totalorder %s14, 1
    %p79 = por %p77, %p78
    %p80 = scmp.ne.s32.totalorder %s69, %s70
    %p81 = scmp.eq.s32.totalorder %s14, 0
    %p82 = por %p80, %p81
    %p83 = scmp.ne.s32.totalorder %s69, %s70
    %p84 = scmp.eq.s32.totalorder %s15, 1
    %p85 = por %p83, %p84
    %p87 = scmp.ne.s32.totalorder %s70, %s86
    %p88 = scmp.eq.s32.totalorder %s15, 0
    %p89 = por %p87, %p88
    %s90 = ssub.s32 %s18, %s27
    %p91 = scmp.eq.s32.totalorder %s90, 0
    %s93 = sadd.s32 %s92, 1
    %s94 = scalar_select %p91, %s92, %s93
    %p97 = pneg %p91
    %p98 = scmp.eq.s32.totalorder %s9, 1
    %p99 = por %p97, %p98
    %p100 = scmp.ne.s32.totalorder %s92, %s95
    %p101 = scmp.eq.s32.totalorder %s9, 0
    %p102 = por %p100, %p101
    %p103 = scmp.ne.s32.totalorder %s92, %s95
    %p104 = scmp.eq.s32.totalorder %s14, 1
    %p105 = por %p103, %p104
    %p106 = scmp.ne.s32.totalorder %s95, %s96
    %p107 = scmp.eq.s32.totalorder %s14, 0
    %p108 = por %p106, %p107
    %p109 = scmp.ne.s32.totalorder %s95, %s96
    %p110 = scmp.eq.s32.totalorder %s15, 1
    %p111 = por %p109, %p110
    %p113 = scmp.ne.s32.totalorder %s96, %s112
    %p114 = scmp.eq.s32.totalorder %s15, 0
    %p115 = por %p113, %p114
    %s116 = ssub.s32 %s16, %s35
    %s117 = ssub.s32 %s17, %s31
    %s118 = sor.u32 %s116, %s117
    %s119 = ssub.s32 %s18, %s27
    %s120 = sor.u32 %s118, %s119
    %p121 = scmp.eq.s32.totalorder %s120, 0
    %s123 = sadd.s32 %s122, 1
    %s124 = scalar_select %p121, %s122, %s123
    %p127 = pneg %p121
    %p128 = scmp.eq.s32.totalorder %s9, 1
    %p129 = por %p127, %p128
    %p130 = scmp.ne.s32.totalorder %s122, %s125
    %p131 = scmp.eq.s32.totalorder %s9, 0
    %p132 = por %p130, %p131
    %p133 = scmp.ne.s32.totalorder %s122, %s125
    %p134 = scmp.eq.s32.totalorder %s14, 1
    %p135 = por %p133, %p134
    %p136 = scmp.ne.s32.totalorder %s125, %s126
    %p137 = scmp.eq.s32.totalorder %s14, 0
    %p138 = por %p136, %p137
    %p139 = scmp.ne.s32.totalorder %s125, %s126
    %p140 = scmp.eq.s32.totalorder %s15, 1
    %p141 = por %p139, %p140
    %p143 = scmp.ne.s32.totalorder %s126, %s142
    %p144 = scmp.eq.s32.totalorder %s15, 0
    %p145 = por %p143, %p144
    %p146 = scmp.le.s32.totalorder 1, %s9
    %p147 = scmp.lt.s32.totalorder %s9, 3
    %p148 = pnand %p146, %p147
    %p149 = pneg %p148
    // Predicated region
    $region9: #{inception_b_forward.8} parent=5 // pred_check
      _
    $region10: #{inception_b_forward.8} parent=5 // pred_check_branch
      %151 = sbr.rel (%p148) target = $region12
    $region11: #{inception_b_forward.8} parent=5 // pred_region
      %s152 = ssub.s32 %s9, 1
      // Predicated region
      $region13: #{inception_b_forward.8} parent=11 // pred_check
        %p153 = pneg %p82
      $region14: #{inception_b_forward.8} parent=11 // pred_check_branch
        %155 = sbr.rel (%p153) target = $region16
      $region15: #{inception_b_forward.8} parent=11 // pred_region
        %p156 = scmp.lt.s32.totalorder %s21, 0
        %s157 = scalar_select %p156, %s21, 0
        %s158 = smul.addr %s157, 4
        %s159 = scalar_lea.vmem %s1, %s158
      $region16: #{inception_b_forward.8} parent=11 // pred_fallthru
        _
      // Predicated region
      $region17: #{inception_b_forward.8} parent=11 // pred_check
        %p160 = pneg %p108
      $region18: #{inception_b_forward.8} parent=11 // pred_check_branch
        %162 = sbr.rel (%p160) target = $region20
      $region19: #{inception_b_forward.8} parent=11 // pred_region
        %p163 = scmp.lt.s32.totalorder %s21, 0
        %s164 = scalar_select %p163, %s21, 0
        %s165 = scalar_lea.vmem %s2, %s164
      $region20: #{inception_b_forward.8} parent=11 // pred_fallthru
        _
    $region12: #{inception_b_forward.8} parent=5 // pred_fallthru
      _
    %p166 = scmp.lt.s32.totalorder %s9, 2
    // Predicated region
    $region21: #{inception_b_forward.8} parent=5 // pred_check
      %p167 = pneg %p166
    $region22: #{inception_b_forward.8} parent=5 // pred_check_branch
      %169 = sbr.rel (%p167) target = $region24
    $region23: #{inception_b_forward.8} parent=5 // pred_region
      // Predicated region
      $region25: #{inception_b_forward.8} parent=23 // pred_check
        %p170 = pneg %p50
      $region26: #{inception_b_forward.8} parent=23 // pred_check_branch
        %172 = sbr.rel (%p170) target = $region28
      $region27: #{inception_b_forward.8} parent=23 // pred_region
        %s173 = smul.u32 8, %s17
        %p174 = scmp.lt.s32.totalorder %s16, 1
        %s175 = scalar_select %p174, %s16, 1
        %p176 = scmp.lt.s32.totalorder %s173, 7
        %s177 = scalar_select %p176, %s173, 7
        %s178 = smul.addr %s177, 7
        %s179 = smul.addr %s175, 56
        %s180 = sadd.s32 %s178, %s179
        %s181 = smul.addr %s180, 4
        %s182 = scalar_lea.vmem %s0, %s181
        %s183 = smul.u32 8, %s17
      $region28: #{inception_b_forward.8} parent=23 // pred_fallthru
        _
    $region24: #{inception_b_forward.8} parent=5 // pred_fallthru
      _
    %p184 = scmp.le.s32.totalorder 1, %s9
    %p185 = scmp.lt.s32.totalorder %s9, 3
    %p186 = pnand %p184, %p185
    %p187 = pneg %p186
    // Predicated region
    $region29: #{inception_b_forward.8} parent=5 // pred_check
      _
    $region30: #{inception_b_forward.8} parent=5 // pred_check_branch
      %189 = sbr.rel (%p186) target = $region32
    $region31: #{inception_b_forward.8} parent=5 // pred_region
      %s190 = ssub.s32 %s9, 1
      %s191 = smul.u32 8, %s20
      %p192 = scmp.lt.s32.totalorder %s19, 1
      %s193 = scalar_select %p192, %s19, 1
      %p194 = scmp.lt.s32.totalorder %s191, 7
      %s195 = scalar_select %p194, %s191, 7
      %s196 = smul.addr %s195, 7
      %s197 = smul.addr %s193, 56
      %s198 = sadd.s32 %s196, %s197
      %s199 = smul.addr %s198, 4
      %s200 = scalar_lea.vmem %s0, %s199
      %p201 = pneg %p56
      %p202 = pneg %p53
      %p203 = scmp.lt.s32.totalorder %s21, 0
      %s204 = scalar_select %p203, %s21, 0
      %s205 = smul.addr %s204, 4
      %s206 = scalar_lea.vmem %s1, %s205
      %p207 = pneg %p82
      %p208 = pneg %p79
      %p209 = scmp.lt.s32.totalorder %s21, 0
      %s210 = scalar_select %p209, %s21, 0
      %s211 = scalar_lea.vmem %s2, %s210
      %p212 = pneg %p108
      %p213 = pneg %p105
      %p214 = pneg %p138
      %p215 = pneg %p135
      %s216 = smul.u32 8, %s20
      %p217 = scmp.lt.s32.totalorder %s19, 1
      %s218 = scalar_select %p217, %s19, 1
      %p219 = scmp.lt.s32.totalorder %s216, 7
      %s220 = scalar_select %p219, %s216, 7
      %p221 = scmp.lt.s32.totalorder %s21, 0
      %s222 = scalar_select %p221, %s21, 0
      %s223 = sadd.s32 %s222, %s220
      %s224 = smul.addr %s218, 8
      %s225 = sadd.s32 %s223, %s224
      %s226 = smul.addr %s225, 8
      %s227 = scalar_lea.vmem %s3, %s226
      %s228 = smul.u32 8, %s20
      %p229 = scmp.lt.s32.totalorder %s19, 1
      %s230 = scalar_select %p229, %s19, 1
      %p231 = scmp.lt.s32.totalorder %s228, 7
      %s232 = scalar_select %p231, %s228, 7
      %s233 = smul.addr %s232, 7
      %s234 = smul.addr %s230, 56
      %s235 = sadd.s32 %s233, %s234
      %s236 = smul.addr %s235, 4
      %s237 = scalar_lea.vmem %s0, %s236
      %s238 = smul.u32 8, %s20
      %p239 = scmp.lt.s32.totalorder %s21, 0
      %s240 = scalar_select %p239, %s21, 0
      %s241 = smul.addr %s240, 4
      %s242 = scalar_lea.vmem %s1, %s241
      %p243 = scmp.lt.s32.totalorder %s21, 0
      %s244 = scalar_select %p243, %s21, 0
      %s245 = scalar_lea.vmem %s2, %s244
      %s246 = smul.u32 8, %s20
      %p247 = scmp.lt.s32.totalorder %s19, 1
      %s248 = scalar_select %p247, %s19, 1
      %p249 = scmp.lt.s32.totalorder %s246, 7
      %s250 = scalar_select %p249, %s246, 7
      %p251 = scmp.lt.s32.totalorder %s21, 0
      %s252 = scalar_select %p251, %s21, 0
      %s253 = sadd.s32 %s252, %s250
      %s254 = smul.addr %s248, 8
      %s255 = sadd.s32 %s253, %s254
      %s256 = smul.addr %s255, 8
      %s257 = scalar_lea.vmem %s3, %s256
      %s258 = smul.u32 8, %s20
      %v260 = vld [vmem:[%s237] sm:$0xff]
      %v261 = vld [vmem:[%s237 + $0x8] sm:$0xff]
      %v262 = vld [vmem:[%s237 + $0x10] sm:$0xff]
      %v263 = vld [vmem:[%s237 + $0x18] sm:$0xf]
      %v264 = vld [vmem:[%s237 + $0x1c] sm:$0xff]
      %v265 = vld [vmem:[%s237 + $0x24] sm:$0xff]
      %v266 = vld [vmem:[%s237 + $0x2c] sm:$0xff]
      %v267 = vld [vmem:[%s237 + $0x34] sm:$0xf]
      %v268 = vld [vmem:[%s237 + $0x38] sm:$0xff]
      %v269 = vld [vmem:[%s237 + $0x40] sm:$0xff]
      %v270 = vld [vmem:[%s237 + $0x48] sm:$0xff]
      %v271 = vld [vmem:[%s237 + $0x50] sm:$0xf]
      %v272 = vld [vmem:[%s237 + $0x54] sm:$0xff]
      %v273 = vld [vmem:[%s237 + $0x5c] sm:$0xff]
      %v274 = vld [vmem:[%s237 + $0x64] sm:$0xff]
      %v275 = vld [vmem:[%s237 + $0x6c] sm:$0xf]
      %v276 = vld [vmem:[%s237 + $0x70] sm:$0xff]
      %v277 = vld [vmem:[%s237 + $0x78] sm:$0xff]
      %v278 = vld [vmem:[%s237 + $0x80] sm:$0xff]
      %v279 = vld [vmem:[%s237 + $0x88] sm:$0xf]
      %v280 = vld [vmem:[%s237 + $0x8c] sm:$0xff]
      %v281 = vld [vmem:[%s237 + $0x94] sm:$0xff]
      %v282 = vld [vmem:[%s237 + $0x9c] sm:$0xff]
      %v283 = vld [vmem:[%s237 + $0xa4] sm:$0xf]
      %v284 = vld [vmem:[%s237 + $0xa8] sm:$0xff]
      %v285 = vld [vmem:[%s237 + $0xb0] sm:$0xff]
      %v286 = vld [vmem:[%s237 + $0xb8] sm:$0xff]
      %v287 = vld [vmem:[%s237 + $0xc0] sm:$0xf]
      %v288 = vld [vmem:[%s237 + $0xc4] sm:$0xff]
      %v289 = vld [vmem:[%s237 + $0xcc] sm:$0xff]
      %v290 = vld [vmem:[%s237 + $0xd4] sm:$0xff]
      %v291 = vld [vmem:[%s237 + $0xdc] sm:$0xf]
      %v292 = vld [vmem:[%s242] sm:$0xf]
      %v293 = vld [vmem:[%s242 + $0x4] sm:$0xf]
      %v294 = vld [vmem:[%s242 + $0x8] sm:$0xf]
      %v295 = vld [vmem:[%s242 + $0xc] sm:$0xf]
      %v296 = vld [vmem:[%s242 + $0x10] sm:$0xf]
      %v297 = vld [vmem:[%s242 + $0x14] sm:$0xf]
      %v298 = vld [vmem:[%s242 + $0x18] sm:$0xf]
      %v299 = vld [vmem:[%s242 + $0x1c] sm:$0xf]
      %v300 = vld [vmem:[%s242 + $0x20] sm:$0xf]
      %v301 = vld [vmem:[%s242 + $0x24] sm:$0xf]
      %v302 = vld [vmem:[%s242 + $0x28] sm:$0xf]
      %v303 = vld [vmem:[%s242 + $0x2c] sm:$0xf]
      %v304 = vld [vmem:[%s242 + $0x30] sm:$0xf]
      %v305 = vld [vmem:[%s242 + $0x34] sm:$0xf]
      %v306 = vld [vmem:[%s242 + $0x38] sm:$0xf]
      %v307 = vld [vmem:[%s242 + $0x3c] sm:$0xf]
      %v308 = vld [vmem:[%s242 + $0x40] sm:$0xf]
      %v309 = vld [vmem:[%s242 + $0x44] sm:$0xf]
      %v310 = vld [vmem:[%s242 + $0x48] sm:$0xf]
      %v311 = vld [vmem:[%s242 + $0x4c] sm:$0xf]
      %v312 = vld [vmem:[%s242 + $0x50] sm:$0xf]
      %v313 = vld [vmem:[%s242 + $0x54] sm:$0xf]
      %v314 = vld [vmem:[%s242 + $0x58] sm:$0xf]
      %v315 = vld [vmem:[%s242 + $0x5c] sm:$0xf]
      %v316 = vld [vmem:[%s242 + $0x60] sm:$0xf]
      %v317 = vld [vmem:[%s242 + $0x64] sm:$0xf]
      %v318 = vld [vmem:[%s242 + $0x68] sm:$0xf]
      %v319 = vld [vmem:[%s242 + $0x6c] sm:$0xf]
      %v320 = vld [vmem:[%s242 + $0x70] sm:$0xf]
      %v321 = vld [vmem:[%s242 + $0x74] sm:$0xf]
      %v322 = vld [vmem:[%s242 + $0x78] sm:$0xf]
      %v323 = vld [vmem:[%s242 + $0x7c] sm:$0xf]
      %v324 = vld [vmem:[%s242 + $0x80] sm:$0xf]
      %v325 = vld [vmem:[%s242 + $0x84] sm:$0xf]
      %v326 = vld [vmem:[%s242 + $0x88] sm:$0xf]
      %v327 = vld [vmem:[%s242 + $0x8c] sm:$0xf]
      %v328 = vld [vmem:[%s242 + $0x90] sm:$0xf]
      %v329 = vld [vmem:[%s242 + $0x94] sm:$0xf]
      %v330 = vld [vmem:[%s242 + $0x98] sm:$0xf]
      %v331 = vld [vmem:[%s242 + $0x9c] sm:$0xf]
      %v332 = vld [vmem:[%s242 + $0xa0] sm:$0xf]
      %v333 = vld [vmem:[%s242 + $0xa4] sm:$0xf]
      %v334 = vld [vmem:[%s242 + $0xa8] sm:$0xf]
      %v335 = vld [vmem:[%s242 + $0xac] sm:$0xf]
      %v336 = vld [vmem:[%s242 + $0xb0] sm:$0xf]
      %v337 = vld [vmem:[%s242 + $0xb4] sm:$0xf]
      %v338 = vld [vmem:[%s242 + $0xb8] sm:$0xf]
      %v339 = vld [vmem:[%s242 + $0xbc] sm:$0xf]
      %v340 = vld [vmem:[%s242 + $0xc0] sm:$0xf]
      %v341 = vld [vmem:[%s242 + $0xc4] sm:$0xf]
      %v342 = vld [vmem:[%s242 + $0xc8] sm:$0xf]
      %v343 = vld [vmem:[%s242 + $0xcc] sm:$0xf]
      %v344 = vld [vmem:[%s242 + $0xd0] sm:$0xf]
      %v345 = vld [vmem:[%s242 + $0xd4] sm:$0xf]
      %v346 = vld [vmem:[%s242 + $0xd8] sm:$0xf]
      %v347 = vld [vmem:[%s242 + $0xdc] sm:$0xf]
      %v348 = vld [vmem:[%s242 + $0xe0] sm:$0xf]
      %v349 = vld [vmem:[%s242 + $0xe4] sm:$0xf]
      %v350 = vld [vmem:[%s242 + $0xe8] sm:$0xf]
      %v351 = vld [vmem:[%s242 + $0xec] sm:$0xf]
      %v352 = vld [vmem:[%s242 + $0xf0] sm:$0xf]
      %v353 = vld [vmem:[%s242 + $0xf4] sm:$0xf]
      %v354 = vld [vmem:[%s242 + $0xf8] sm:$0xf]
      %v355 = vld [vmem:[%s242 + $0xfc] sm:$0xf]
      %v356 = vld [vmem:[%s242 + $0x100] sm:$0xf]
      %v357 = vld [vmem:[%s242 + $0x104] sm:$0xf]
      %v358 = vld [vmem:[%s242 + $0x108] sm:$0xf]
      %v359 = vld [vmem:[%s242 + $0x10c] sm:$0xf]
      %v360 = vld [vmem:[%s242 + $0x110] sm:$0xf]
      %v361 = vld [vmem:[%s242 + $0x114] sm:$0xf]
      %v362 = vld [vmem:[%s242 + $0x118] sm:$0xf]
      %v363 = vld [vmem:[%s242 + $0x11c] sm:$0xf]
      %v364 = vld [vmem:[%s242 + $0x120] sm:$0xf]
      %v365 = vld [vmem:[%s242 + $0x124] sm:$0xf]
      %v366 = vld [vmem:[%s242 + $0x128] sm:$0xf]
      %v367 = vld [vmem:[%s242 + $0x12c] sm:$0xf]
      %v368 = vld [vmem:[%s242 + $0x130] sm:$0xf]
      %v369 = vld [vmem:[%s242 + $0x134] sm:$0xf]
      %v370 = vld [vmem:[%s242 + $0x138] sm:$0xf]
      %v371 = vld [vmem:[%s242 + $0x13c] sm:$0xf]
      %v372 = vld [vmem:[%s242 + $0x140] sm:$0xf]
      %v373 = vld [vmem:[%s242 + $0x144] sm:$0xf]
      %v374 = vld [vmem:[%s242 + $0x148] sm:$0xf]
      %v375 = vld [vmem:[%s242 + $0x14c] sm:$0xf]
      %v376 = vld [vmem:[%s242 + $0x150] sm:$0xf]
      %v377 = vld [vmem:[%s242 + $0x154] sm:$0xf]
      %v378 = vld [vmem:[%s242 + $0x158] sm:$0xf]
      %v379 = vld [vmem:[%s242 + $0x15c] sm:$0xf]
      %v380 = vld [vmem:[%s242 + $0x160] sm:$0xf]
      %v381 = vld [vmem:[%s242 + $0x164] sm:$0xf]
      %v382 = vld [vmem:[%s242 + $0x168] sm:$0xf]
      %v383 = vld [vmem:[%s242 + $0x16c] sm:$0xf]
      %v384 = vld [vmem:[%s242 + $0x170] sm:$0xf]
      %v385 = vld [vmem:[%s242 + $0x174] sm:$0xf]
      %v386 = vld [vmem:[%s242 + $0x178] sm:$0xf]
      %v387 = vld [vmem:[%s242 + $0x17c] sm:$0xf]
      %v388 = vld [vmem:[%s242 + $0x180] sm:$0xf]
      %v389 = vld [vmem:[%s242 + $0x184] sm:$0xf]
      %v390 = vld [vmem:[%s242 + $0x188] sm:$0xf]
      %v391 = vld [vmem:[%s242 + $0x18c] sm:$0xf]
      %v392 = vld [vmem:[%s242 + $0x190] sm:$0xf]
      %v393 = vld [vmem:[%s242 + $0x194] sm:$0xf]
      %v394 = vld [vmem:[%s242 + $0x198] sm:$0xf]
      %v395 = vld [vmem:[%s242 + $0x19c] sm:$0xf]
      %v396 = vld [vmem:[%s242 + $0x1a0] sm:$0xf]
      %v397 = vld [vmem:[%s242 + $0x1a4] sm:$0xf]
      %v398 = vld [vmem:[%s242 + $0x1a8] sm:$0xf]
      %v399 = vld [vmem:[%s242 + $0x1ac] sm:$0xf]
      %v400 = vld [vmem:[%s245] sm:$0x1]
      %v402 = vlaneseq
      %v403 = vshrl.u32 %v402, 7
      %v404 = vsub.s32 0, %v403
      %v405 = vrot.slane %v400, %v404
      %v439 = vunpack.c.l.b16 %v260
      %v440 = vunpack.c.h.b16 %v260
      %v441 = vunpack.c.l.b16 %v261
      %v442 = vunpack.c.h.b16 %v261
      %v443 = vunpack.c.l.b16 %v262
      %v444 = vunpack.c.h.b16 %v262
      %v445 = vunpack.c.l.b16 %v263
      %v446 = vunpack.c.l.b16 %v264
      %v447 = vunpack.c.h.b16 %v264
      %v448 = vunpack.c.l.b16 %v265
      %v449 = vunpack.c.h.b16 %v265
      %v450 = vunpack.c.l.b16 %v266
      %v451 = vunpack.c.h.b16 %v266
      %v452 = vunpack.c.l.b16 %v267
      %v453 = vunpack.c.l.b16 %v268
      %v454 = vunpack.c.h.b16 %v268
      %v455 = vunpack.c.l.b16 %v269
      %v456 = vunpack.c.h.b16 %v269
      %v457 = vunpack.c.l.b16 %v270
      %v458 = vunpack.c.h.b16 %v270
      %v459 = vunpack.c.l.b16 %v271
      %v460 = vunpack.c.l.b16 %v272
      %v461 = vunpack.c.h.b16 %v272
      %v462 = vunpack.c.l.b16 %v273
      %v463 = vunpack.c.h.b16 %v273
      %v464 = vunpack.c.l.b16 %v274
      %v465 = vunpack.c.h.b16 %v274
      %v466 = vunpack.c.l.b16 %v275
      %v467 = vunpack.c.l.b16 %v276
      %v468 = vunpack.c.h.b16 %v276
      %v469 = vunpack.c.l.b16 %v277
      %v470 = vunpack.c.h.b16 %v277
      %v471 = vunpack.c.l.b16 %v278
      %v472 = vunpack.c.h.b16 %v278
      %v473 = vunpack.c.l.b16 %v279
      %v474 = vunpack.c.l.b16 %v280
      %v475 = vunpack.c.h.b16 %v280
      %v476 = vunpack.c.l.b16 %v281
      %v477 = vunpack.c.h.b16 %v281
      %v478 = vunpack.c.l.b16 %v282
      %v479 = vunpack.c.h.b16 %v282
      %v480 = vunpack.c.l.b16 %v283
      %v481 = vunpack.c.l.b16 %v284
      %v482 = vunpack.c.h.b16 %v284
      %v483 = vunpack.c.l.b16 %v285
      %v484 = vunpack.c.h.b16 %v285
      %v485 = vunpack.c.l.b16 %v286
      %v486 = vunpack.c.h.b16 %v286
      %v487 = vunpack.c.l.b16 %v287
      %v488 = vunpack.c.l.b16 %v288
      %v489 = vunpack.c.h.b16 %v288
      %v490 = vunpack.c.l.b16 %v289
      %v491 = vunpack.c.h.b16 %v289
      %v492 = vunpack.c.l.b16 %v290
      %v493 = vunpack.c.h.b16 %v290
      %v494 = vunpack.c.l.b16 %v291
      %v495 = vpack.c.b16 %v446, %v439
      %v496 = vpack.c.b16 %v447, %v440
      %v497 = vpack.c.b16 %v448, %v441
      %v498 = vpack.c.b16 %v449, %v442
      %v499 = vpack.c.b16 %v450, %v443
      %v500 = vpack.c.b16 %v451, %v444
      %v501 = vpack.c.b16 %v452, %v445
      %v502 = vpack.c.b16 %v460, %v453
      %v503 = vpack.c.b16 %v461, %v454
      %v504 = vpack.c.b16 %v462, %v455
      %v505 = vpack.c.b16 %v463, %v456
      %v506 = vpack.c.b16 %v464, %v457
      %v507 = vpack.c.b16 %v465, %v458
      %v508 = vpack.c.b16 %v466, %v459
      %v509 = vpack.c.b16 %v474, %v467
      %v510 = vpack.c.b16 %v475, %v468
      %v511 = vpack.c.b16 %v476, %v469
      %v512 = vpack.c.b16 %v477, %v470
      %v513 = vpack.c.b16 %v478, %v471
      %v514 = vpack.c.b16 %v479, %v472
      %v515 = vpack.c.b16 %v480, %v473
      %v516 = vpack.c.b16 %v488, %v481
      %v517 = vpack.c.b16 %v489, %v482
      %v518 = vpack.c.b16 %v490, %v483
      %v519 = vpack.c.b16 %v491, %v484
      %v520 = vpack.c.b16 %v492, %v485
      %v521 = vpack.c.b16 %v493, %v486
      %v522 = vpack.c.b16 %v494, %v487
      %v655 = vunpack.c.l.b16 %v292
      %v656 = vunpack.c.l.b16 %v293
      %v657 = vunpack.c.l.b16 %v294
      %v658 = vunpack.c.l.b16 %v295
      %v659 = vunpack.c.l.b16 %v296
      %v660 = vunpack.c.l.b16 %v297
      %v661 = vunpack.c.l.b16 %v298
      %v662 = vunpack.c.l.b16 %v299
      %v663 = vunpack.c.l.b16 %v300
      %v664 = vunpack.c.l.b16 %v301
      %v665 = vunpack.c.l.b16 %v302
      %v666 = vunpack.c.l.b16 %v303
      %v667 = vunpack.c.l.b16 %v304
      %v668 = vunpack.c.l.b16 %v305
      %v669 = vunpack.c.l.b16 %v306
      %v670 = vunpack.c.l.b16 %v307
      %v671 = vunpack.c.l.b16 %v308
      %v672 = vunpack.c.l.b16 %v309
      %v673 = vunpack.c.l.b16 %v310
      %v674 = vunpack.c.l.b16 %v311
      %v675 = vunpack.c.l.b16 %v312
      %v676 = vunpack.c.l.b16 %v313
      %v677 = vunpack.c.l.b16 %v314
      %v678 = vunpack.c.l.b16 %v315
      %v679 = vunpack.c.l.b16 %v316
      %v680 = vunpack.c.l.b16 %v317
      %v681 = vunpack.c.l.b16 %v318
      %v682 = vunpack.c.l.b16 %v319
      %v683 = vunpack.c.l.b16 %v320
      %v684 = vunpack.c.l.b16 %v321
      %v685 = vunpack.c.l.b16 %v322
      %v686 = vunpack.c.l.b16 %v323
      %v687 = vunpack.c.l.b16 %v324
      %v688 = vunpack.c.l.b16 %v325
      %v689 = vunpack.c.l.b16 %v326
      %v690 = vunpack.c.l.b16 %v327
      %v691 = vunpack.c.l.b16 %v328
      %v692 = vunpack.c.l.b16 %v329
      %v693 = vunpack.c.l.b16 %v330
      %v694 = vunpack.c.l.b16 %v331
      %v695 = vunpack.c.l.b16 %v332
      %v696 = vunpack.c.l.b16 %v333
      %v697 = vunpack.c.l.b16 %v334
      %v698 = vunpack.c.l.b16 %v335
      %v699 = vunpack.c.l.b16 %v336
      %v700 = vunpack.c.l.b16 %v337
      %v701 = vunpack.c.l.b16 %v338
      %v702 = vunpack.c.l.b16 %v339
      %v703 = vunpack.c.l.b16 %v340
      %v704 = vunpack.c.l.b16 %v341
      %v705 = vunpack.c.l.b16 %v342
      %v706 = vunpack.c.l.b16 %v343
      %v707 = vunpack.c.l.b16 %v344
      %v708 = vunpack.c.l.b16 %v345
      %v709 = vunpack.c.l.b16 %v346
      %v710 = vunpack.c.l.b16 %v347
      %v711 = vunpack.c.l.b16 %v348
      %v712 = vunpack.c.l.b16 %v349
      %v713 = vunpack.c.l.b16 %v350
      %v714 = vunpack.c.l.b16 %v351
      %v715 = vunpack.c.l.b16 %v352
      %v716 = vunpack.c.l.b16 %v353
      %v717 = vunpack.c.l.b16 %v354
      %v718 = vunpack.c.l.b16 %v355
      %v719 = vunpack.c.l.b16 %v356
      %v720 = vunpack.c.l.b16 %v357
      %v721 = vunpack.c.l.b16 %v358
      %v722 = vunpack.c.l.b16 %v359
      %v723 = vunpack.c.l.b16 %v360
      %v724 = vunpack.c.l.b16 %v361
      %v725 = vunpack.c.l.b16 %v362
      %v726 = vunpack.c.l.b16 %v363
      %v727 = vunpack.c.l.b16 %v364
      %v728 = vunpack.c.l.b16 %v365
      %v729 = vunpack.c.l.b16 %v366
      %v730 = vunpack.c.l.b16 %v367
      %v731 = vunpack.c.l.b16 %v368
      %v732 = vunpack.c.l.b16 %v369
      %v733 = vunpack.c.l.b16 %v370
      %v734 = vunpack.c.l.b16 %v371
      %v735 = vunpack.c.l.b16 %v372
      %v736 = vunpack.c.l.b16 %v373
      %v737 = vunpack.c.l.b16 %v374
      %v738 = vunpack.c.l.b16 %v375
      %v739 = vunpack.c.l.b16 %v376
      %v740 = vunpack.c.l.b16 %v377
      %v741 = vunpack.c.l.b16 %v378
      %v742 = vunpack.c.l.b16 %v379
      %v743 = vunpack.c.l.b16 %v380
      %v744 = vunpack.c.l.b16 %v381
      %v745 = vunpack.c.l.b16 %v382
      %v746 = vunpack.c.l.b16 %v383
      %v747 = vunpack.c.l.b16 %v384
      %v748 = vunpack.c.l.b16 %v385
      %v749 = vunpack.c.l.b16 %v386
      %v750 = vunpack.c.l.b16 %v387
      %v751 = vunpack.c.l.b16 %v388
      %v752 = vunpack.c.l.b16 %v389
      %v753 = vunpack.c.l.b16 %v390
      %v754 = vunpack.c.l.b16 %v391
      %v755 = vunpack.c.l.b16 %v392
      %v756 = vunpack.c.l.b16 %v393
      %v757 = vunpack.c.l.b16 %v394
      %v758 = vunpack.c.l.b16 %v395
      %v759 = vunpack.c.l.b16 %v396
      %v760 = vunpack.c.l.b16 %v397
      %v761 = vunpack.c.l.b16 %v398
      %v762 = vunpack.c.l.b16 %v399
      %v763 = vpack.c.b16 %v656, %v655
      %v764 = vpack.c.b16 %v658, %v657
      %v765 = vpack.c.b16 %v660, %v659
      %v766 = vpack.c.b16 %v662, %v661
      %v767 = vpack.c.b16 %v664, %v663
      %v768 = vpack.c.b16 %v666, %v665
      %v769 = vpack.c.b16 %v668, %v667
      %v770 = vpack.c.b16 %v670, %v669
      %v771 = vpack.c.b16 %v672, %v671
      %v772 = vpack.c.b16 %v674, %v673
      %v773 = vpack.c.b16 %v676, %v675
      %v774 = vpack.c.b16 %v678, %v677
      %v775 = vpack.c.b16 %v680, %v679
      %v776 = vpack.c.b16 %v682, %v681
      %v777 = vpack.c.b16 %v684, %v683
      %v778 = vpack.c.b16 %v686, %v685
      %v779 = vpack.c.b16 %v688, %v687
      %v780 = vpack.c.b16 %v690, %v689
      %v781 = vpack.c.b16 %v692, %v691
      %v782 = vpack.c.b16 %v694, %v693
      %v783 = vpack.c.b16 %v696, %v695
      %v784 = vpack.c.b16 %v698, %v697
      %v785 = vpack.c.b16 %v700, %v699
      %v786 = vpack.c.b16 %v702, %v701
      %v787 = vpack.c.b16 %v704, %v703
      %v788 = vpack.c.b16 %v706, %v705
      %v789 = vpack.c.b16 %v708, %v707
      %v790 = vpack.c.b16 %v710, %v709
      %v791 = vpack.c.b16 %v712, %v711
      %v792 = vpack.c.b16 %v714, %v713
      %v793 = vpack.c.b16 %v716, %v715
      %v794 = vpack.c.b16 %v718, %v717
      %v795 = vpack.c.b16 %v720, %v719
      %v796 = vpack.c.b16 %v722, %v721
      %v797 = vpack.c.b16 %v724, %v723
      %v798 = vpack.c.b16 %v726, %v725
      %v799 = vpack.c.b16 %v728, %v727
      %v800 = vpack.c.b16 %v730, %v729
      %v801 = vpack.c.b16 %v732, %v731
      %v802 = vpack.c.b16 %v734, %v733
      %v803 = vpack.c.b16 %v736, %v735
      %v804 = vpack.c.b16 %v738, %v737
      %v805 = vpack.c.b16 %v740, %v739
      %v806 = vpack.c.b16 %v742, %v741
      %v807 = vpack.c.b16 %v744, %v743
      %v808 = vpack.c.b16 %v746, %v745
      %v809 = vpack.c.b16 %v748, %v747
      %v810 = vpack.c.b16 %v750, %v749
      %v811 = vpack.c.b16 %v752, %v751
      %v812 = vpack.c.b16 %v754, %v753
      %v813 = vpack.c.b16 %v756, %v755
      %v814 = vpack.c.b16 %v758, %v757
      %v815 = vpack.c.b16 %v760, %v759
      %v816 = vpack.c.b16 %v762, %v761
      %vm871 = vcmask 785408
      %v873 = vsel %vm871, %v501, 0
      %v876 = vsel %vm871, %v508, 0
      %v879 = vsel %vm871, %v515, 0
      %v882 = vsel %vm871, %v522, 0
      %884 = vmatprep.subr.bf16.mxu0 0
      %885 = vmatpush1.bf16.msra.mxu0 %v763
      %886 = vmatprep.subr.bf16.mxu0 0
      %887 = vmatpush1.bf16.msra.mxu0 %v764
      %888 = vmatprep.subr.bf16.mxu0 0
      %889 = vmatpush1.bf16.msra.mxu0 %v765
      %890 = vmatprep.subr.bf16.mxu0 0
      %891 = vmatpush1.bf16.msra.mxu0 %v766
      %892 = vmatprep.subr.bf16.mxu0 0
      %893 = vmatpush1.bf16.msra.mxu0 %v767
      %894 = vmatprep.subr.bf16.mxu0 0
      %895 = vmatpush1.bf16.msra.mxu0 %v768
      %896 = vmatprep.subr.bf16.mxu0 0
      %897 = vmatpush1.bf16.msra.mxu0 %v769
      %898 = vmatprep.subr.bf16.mxu0 0
      %899 = vmatpush1.bf16.msra.mxu0 %v770
      %900 = vmatprep.subr.bf16.mxu0 0
      %901 = vmatpush1.bf16.msra.mxu0 %v771
      %902 = vmatprep.subr.bf16.mxu0 0
      %903 = vmatpush1.bf16.msra.mxu0 %v772
      %904 = vmatprep.subr.bf16.mxu0 0
      %905 = vmatpush1.bf16.msra.mxu0 %v773
      %906 = vmatprep.subr.bf16.mxu0 0
      %907 = vmatpush1.bf16.msra.mxu0 %v774
      %908 = vmatprep.subr.bf16.mxu0 0
      %909 = vmatpush1.bf16.msra.mxu0 %v775
      %910 = vmatprep.subr.bf16.mxu0 0
      %911 = vmatpush1.bf16.msra.mxu0 %v776
      %912 = vmatprep.subr.bf16.mxu0 0
      %913 = vmatpush1.bf16.msra.mxu0 %v777
      %914 = vmatprep.subr.bf16.mxu0 0
      %915 = vmatpush1.bf16.msra.mxu0 %v778
      %916 = vmatprep.mubr.bf16.mxu0 %v496
      %917 = vmatmul.mubr.bf16.gmra.mrb[0].mxu0 %v495
      %v918 = vpop.f32.mrb[0].mxu0
      %v919 = vadd.f32 %v405, %v918
      %v920 = vpop.f32.mrb[0].mxu0
      %v921 = vpop.f32.mrb[0].mxu0
      %v922 = vadd.f32 %v405, %v921
      %v923 = vpop.f32.mrb[0].mxu0
      %924 = vmatprep.mubr.bf16.mxu0 %v503
      %925 = vmatmul.mubr.bf16.gmra.mrb[0].mxu0 %v502
      %v926 = vpop.f32.mrb[0].mxu0
      %v927 = vadd.f32 %v405, %v926
      %v928 = vpop.f32.mrb[0].mxu0
      %v929 = vpop.f32.mrb[0].mxu0
      %v930 = vadd.f32 %v405, %v929
      %v931 = vpop.f32.mrb[0].mxu0
      %932 = vmatprep.mubr.bf16.mxu0 %v510
      %933 = vmatmul.mubr.bf16.gmra.mrb[0].mxu0 %v509
      %v934 = vpop.f32.mrb[0].mxu0
      %v935 = vadd.f32 %v405, %v934
      %v936 = vpop.f32.mrb[0].mxu0
      %v937 = vpop.f32.mrb[0].mxu0
      %v938 = vadd.f32 %v405, %v937
      %v939 = vpop.f32.mrb[0].mxu0
      %940 = vmatprep.mubr.bf16.mxu0 %v517
      %941 = vmatmul.mubr.bf16.gmra.mrb[0].mxu0 %v516
      %v942 = vpop.f32.mrb[0].mxu0
      %v943 = vadd.f32 %v405, %v942
      %v944 = vpop.f32.mrb[0].mxu0
      %v945 = vpop.f32.mrb[0].mxu0
      %v946 = vadd.f32 %v405, %v945
      %v947 = vpop.f32.mrb[0].mxu0
      %948 = vdwg.mxu0
      %949 = vmatprep.subr.bf16.mxu0 0
      %950 = vmatpush1.bf16.msra.mxu0 %v779
      %951 = vmatprep.subr.bf16.mxu0 0
      %952 = vmatpush1.bf16.msra.mxu0 %v780
      %953 = vmatprep.subr.bf16.mxu0 0
      %954 = vmatpush1.bf16.msra.mxu0 %v781
      %955 = vmatprep.subr.bf16.mxu0 0
      %956 = vmatpush1.bf16.msra.mxu0 %v782
      %957 = vmatprep.subr.bf16.mxu0 0
      %958 = vmatpush1.bf16.msra.mxu0 %v783
      %959 = vmatprep.subr.bf16.mxu0 0
      %960 = vmatpush1.bf16.msra.mxu0 %v784
      %961 = vmatprep.subr.bf16.mxu0 0
      %962 = vmatpush1.bf16.msra.mxu0 %v785
      %963 = vmatprep.subr.bf16.mxu0 0
      %964 = vmatpush1.bf16.msra.mxu0 %v786
      %965 = vmatprep.subr.bf16.mxu0 0
      %966 = vmatpush1.bf16.msra.mxu0 %v787
      %967 = vmatprep.subr.bf16.mxu0 0
      %968 = vmatpush1.bf16.msra.mxu0 %v788
      %969 = vmatprep.subr.bf16.mxu0 0
      %970 = vmatpush1.bf16.msra.mxu0 %v789
      %971 = vmatprep.subr.bf16.mxu0 0
      %972 = vmatpush1.bf16.msra.mxu0 %v790
      %973 = vmatprep.subr.bf16.mxu0 0
      %974 = vmatpush1.bf16.msra.mxu0 %v791
      %975 = vmatprep.subr.bf16.mxu0 0
      %976 = vmatpush1.bf16.msra.mxu0 %v792
      %977 = vmatprep.subr.bf16.mxu0 0
      %978 = vmatpush1.bf16.msra.mxu0 %v793
      %979 = vmatprep.subr.bf16.mxu0 0
      %980 = vmatpush1.bf16.msra.mxu0 %v794
      %981 = vmatprep.mubr.bf16.mxu0 %v498
      %982 = vmatmul.mubr.bf16.gmra.mrb[0].mxu0 %v497
      %v983 = vpop.f32.mrb[0].mxu0
      %v984 = vadd.f32 %v919, %v983
      %v985 = vpop.f32.mrb[0].mxu0
      %v986 = vpop.f32.mrb[0].mxu0
      %v987 = vadd.f32 %v922, %v986
      %v988 = vpop.f32.mrb[0].mxu0
      %989 = vmatprep.mubr.bf16.mxu0 %v505
      %990 = vmatmul.mubr.bf16.gmra.mrb[0].mxu0 %v504
      %v991 = vpop.f32.mrb[0].mxu0
      %v992 = vadd.f32 %v927, %v991
      %v993 = vpop.f32.mrb[0].mxu0
      %v994 = vpop.f32.mrb[0].mxu0
      %v995 = vadd.f32 %v930, %v994
      %v996 = vpop.f32.mrb[0].mxu0
      %997 = vmatprep.mubr.bf16.mxu0 %v512
      %998 = vmatmul.mubr.bf16.gmra.mrb[0].mxu0 %v511
      %v999 = vpop.f32.mrb[0].mxu0
      %v1000 = vadd.f32 %v935, %v999
      %v1001 = vpop.f32.mrb[0].mxu0
      %v1002 = vpop.f32.mrb[0].mxu0
      %v1003 = vadd.f32 %v938, %v1002
      %v1004 = vpop.f32.mrb[0].mxu0
      %1005 = vmatprep.mubr.bf16.mxu0 %v519
      %1006 = vmatmul.mubr.bf16.gmra.mrb[0].mxu0 %v518
      %v1007 = vpop.f32.mrb[0].mxu0
      %v1008 = vadd.f32 %v943, %v1007
      %v1009 = vpop.f32.mrb[0].mxu0
      %v1010 = vpop.f32.mrb[0].mxu0
      %v1011 = vadd.f32 %v946, %v1010
      %v1012 = vpop.f32.mrb[0].mxu0
      %1013 = vdwg.mxu0
      %1014 = vmatprep.subr.bf16.mxu0 0
      %1015 = vmatpush1.bf16.msra.mxu0 %v795
      %1016 = vmatprep.subr.bf16.mxu0 0
      %1017 = vmatpush1.bf16.msra.mxu0 %v796
      %1018 = vmatprep.subr.bf16.mxu0 0
      %1019 = vmatpush1.bf16.msra.mxu0 %v797
      %1020 = vmatprep.subr.bf16.mxu0 0
      %1021 = vmatpush1.bf16.msra.mxu0 %v798
      %1022 = vmatprep.subr.bf16.mxu0 0
      %1023 = vmatpush1.bf16.msra.mxu0 %v799
      %1024 = vmatprep.subr.bf16.mxu0 0
      %1025 = vmatpush1.bf16.msra.mxu0 %v800
      %1026 = vmatprep.subr.bf16.mxu0 0
      %1027 = vmatpush1.bf16.msra.mxu0 %v801
      %1028 = vmatprep.subr.bf16.mxu0 0
      %1029 = vmatpush1.bf16.msra.mxu0 %v802
      %1030 = vmatprep.subr.bf16.mxu0 0
      %1031 = vmatpush1.bf16.msra.mxu0 %v803
      %1032 = vmatprep.subr.bf16.mxu0 0
      %1033 = vmatpush1.bf16.msra.mxu0 %v804
      %1034 = vmatprep.subr.bf16.mxu0 0
      %1035 = vmatpush1.bf16.msra.mxu0 %v805
      %1036 = vmatprep.subr.bf16.mxu0 0
      %1037 = vmatpush1.bf16.msra.mxu0 %v806
      %1038 = vmatprep.subr.bf16.mxu0 0
      %1039 = vmatpush1.bf16.msra.mxu0 %v807
      %1040 = vmatprep.subr.bf16.mxu0 0
      %1041 = vmatpush1.bf16.msra.mxu0 %v808
      %1042 = vmatprep.subr.bf16.mxu0 0
      %1043 = vmatpush1.bf16.msra.mxu0 %v809
      %1044 = vmatprep.subr.bf16.mxu0 0
      %1045 = vmatpush1.bf16.msra.mxu0 %v810
      %1046 = vmatprep.mubr.bf16.mxu0 %v500
      %1047 = vmatmul.mubr.bf16.gmra.mrb[0].mxu0 %v499
      %v1048 = vpop.f32.mrb[0].mxu0
      %v1049 = vadd.f32 %v984, %v1048
      %v1050 = vpop.f32.mrb[0].mxu0
      %v1051 = vpop.f32.mrb[0].mxu0
      %v1052 = vadd.f32 %v987, %v1051
      %v1053 = vpop.f32.mrb[0].mxu0
      %1054 = vmatprep.mubr.bf16.mxu0 %v507
      %1055 = vmatmul.mubr.bf16.gmra.mrb[0].mxu0 %v506
      %v1056 = vpop.f32.mrb[0].mxu0
      %v1057 = vadd.f32 %v992, %v1056
      %v1058 = vpop.f32.mrb[0].mxu0
      %v1059 = vpop.f32.mrb[0].mxu0
      %v1060 = vadd.f32 %v995, %v1059
      %v1061 = vpop.f32.mrb[0].mxu0
      %1062 = vmatprep.mubr.bf16.mxu0 %v514
      %1063 = vmatmul.mubr.bf16.gmra.mrb[0].mxu0 %v513
      %v1064 = vpop.f32.mrb[0].mxu0
      %v1065 = vadd.f32 %v1000, %v1064
      %v1066 = vpop.f32.mrb[0].mxu0
      %v1067 = vpop.f32.mrb[0].mxu0
      %v1068 = vadd.f32 %v1003, %v1067
      %v1069 = vpop.f32.mrb[0].mxu0
      %1070 = vmatprep.mubr.bf16.mxu0 %v521
      %1071 = vmatmul.mubr.bf16.gmra.mrb[0].mxu0 %v520
      %v1072 = vpop.f32.mrb[0].mxu0
      %v1073 = vadd.f32 %v1008, %v1072
      %v1074 = vpop.f32.mrb[0].mxu0
      %v1075 = vpop.f32.mrb[0].mxu0
      %v1076 = vadd.f32 %v1011, %v1075
      %v1077 = vpop.f32.mrb[0].mxu0
      %1078 = vdwg.mxu0
      %1079 = vmatprep.subr.bf16.mxu0 0
      %1080 = vmatpush1.bf16.msra.mxu0 %v811
      %1081 = vmatprep.subr.bf16.mxu0 0
      %1082 = vmatpush1.bf16.msra.mxu0 %v812
      %1083 = vmatprep.subr.bf16.mxu0 0
      %1084 = vmatpush1.bf16.msra.mxu0 %v813
      %1085 = vmatprep.subr.bf16.mxu0 0
      %1086 = vmatpush1.bf16.msra.mxu0 %v814
      %1087 = vmatprep.subr.bf16.mxu0 0
      %1088 = vmatpush1.bf16.msra.mxu0 %v815
      %1089 = vmatprep.subr.bf16.mxu0 0
      %1090 = vmatpush1.bf16.msra.mxu0 %v816
      %1091 = vmatprep.subr.bf16.mxu0 0
      %1092 = vmatpush1.bf16.msra.mxu0 0
      %1093 = vmatprep.subr.bf16.mxu0 0
      %1094 = vmatpush1.bf16.msra.mxu0 0
      %1095 = vmatprep.subr.bf16.mxu0 0
      %1096 = vmatpush1.bf16.msra.mxu0 0
      %1097 = vmatprep.subr.bf16.mxu0 0
      %1098 = vmatpush1.bf16.msra.mxu0 0
      %1099 = vmatprep.subr.bf16.mxu0 0
      %1100 = vmatpush1.bf16.msra.mxu0 0
      %1101 = vmatprep.subr.bf16.mxu0 0
      %1102 = vmatpush1.bf16.msra.mxu0 0
      %1103 = vmatprep.subr.bf16.mxu0 0
      %1104 = vmatpush1.bf16.msra.mxu0 0
      %1105 = vmatprep.subr.bf16.mxu0 0
      %1106 = vmatpush1.bf16.msra.mxu0 0
      %1107 = vmatprep.subr.bf16.mxu0 0
      %1108 = vmatpush1.bf16.msra.mxu0 0
      %1109 = vmatprep.subr.bf16.mxu0 0
      %1110 = vmatpush1.bf16.msra.mxu0 0
      %1111 = vmatprep.mubr.bf16.mxu0 0
      %1112 = vmatmul.mubr.bf16.gmra.mrb[0].mxu0 %v873
      %v1113 = vpop.f32.mrb[0].mxu0
      %v1114 = vadd.f32 %v1049, %v1113
      %v1115 = vpop.f32.mrb[0].mxu0
      %v1116 = vpop.f32.mrb[0].mxu0
      %v1117 = vadd.f32 %v1052, %v1116
      %v1118 = vpop.f32.mrb[0].mxu0
      %1119 = vmatprep.mubr.bf16.mxu0 0
      %1120 = vmatmul.mubr.bf16.gmra.mrb[0].mxu0 %v876
      %v1121 = vpop.f32.mrb[0].mxu0
      %v1122 = vadd.f32 %v1057, %v1121
      %v1123 = vpop.f32.mrb[0].mxu0
      %v1124 = vpop.f32.mrb[0].mxu0
      %v1125 = vadd.f32 %v1060, %v1124
      %v1126 = vpop.f32.mrb[0].mxu0
      %1127 = vmatprep.mubr.bf16.mxu0 0
      %1128 = vmatmul.mubr.bf16.gmra.mrb[0].mxu0 %v879
      %v1129 = vpop.f32.mrb[0].mxu0
      %v1130 = vadd.f32 %v1065, %v1129
      %v1131 = vpop.f32.mrb[0].mxu0
      %v1132 = vpop.f32.mrb[0].mxu0
      %v1133 = vadd.f32 %v1068, %v1132
      %v1134 = vpop.f32.mrb[0].mxu0
      %1135 = vmatprep.mubr.bf16.mxu0 0
      %1136 = vmatmul.mubr.bf16.gmra.mrb[0].mxu0 %v882
      %v1137 = vpop.f32.mrb[0].mxu0
      %v1138 = vadd.f32 %v1073, %v1137
      %v1139 = vpop.f32.mrb[0].mxu0
      %v1140 = vpop.f32.mrb[0].mxu0
      %v1141 = vadd.f32 %v1076, %v1140
      %v1142 = vpop.f32.mrb[0].mxu0
      %1143 = vdwg.mxu0
      %v1144 = vmax.f32 %v1114, 0.0
      %v1145 = vmax.f32 %v1117, 0.0
      %v1146 = vmax.f32 %v1122, 0.0
      %v1147 = vmax.f32 %v1125, 0.0
      %v1148 = vmax.f32 %v1130, 0.0
      %v1149 = vmax.f32 %v1133, 0.0
      %v1150 = vmax.f32 %v1138, 0.0
      %v1151 = vmax.f32 %v1141, 0.0
      %1152 = vst [vmem:[%s257] sm:$0xff] %v1144
      %1153 = vst [vmem:[%s257 + $0x8] sm:$0xff] %v1145
      %1154 = vst [vmem:[%s257 + $0x10] sm:$0xff] %v1146
      %1155 = vst [vmem:[%s257 + $0x18] sm:$0xff] %v1147
      %1156 = vst [vmem:[%s257 + $0x20] sm:$0xff] %v1148
      %1157 = vst [vmem:[%s257 + $0x28] sm:$0xff] %v1149
      %1158 = vst [vmem:[%s257 + $0x30] sm:$0xff] %v1150
      %1159 = vst [vmem:[%s257 + $0x38] sm:$0xff] %v1151
      %s1160 = smul.u32 8, %s20
      %p1161 = scmp.lt.s32.totalorder %s19, 1
      %s1162 = scalar_select %p1161, %s19, 1
      %p1163 = scmp.lt.s32.totalorder %s1160, 7
      %s1164 = scalar_select %p1163, %s1160, 7
      %p1165 = scmp.lt.s32.totalorder %s21, 0
      %s1166 = scalar_select %p1165, %s21, 0
      %s1167 = sadd.s32 %s1166, %s1164
      %s1168 = smul.addr %s1162, 8
      %s1169 = sadd.s32 %s1167, %s1168
      %s1170 = smul.addr %s1169, 8
      %s1171 = scalar_lea.vmem %s3, %s1170
      // Predicated region
      $region33: #{inception_b_forward.8} parent=31 // pred_check
        %p1172 = pneg %p135
      $region34: #{inception_b_forward.8} parent=31 // pred_check_branch
        %1174 = sbr.rel (%p1172) target = $region36
      $region35: #{inception_b_forward.8} parent=31 // pred_region
        %s1175 = smul.u32 8, %s20
      $region36: #{inception_b_forward.8} parent=31 // pred_fallthru
        _
    $region32: #{inception_b_forward.8} parent=5 // pred_fallthru
      _
    %p1176 = scmp.le.s32.totalorder 2, %s9
    // Predicated region
    $region37: #{inception_b_forward.8} parent=5 // pred_check
      %p1177 = pneg %p1176
    $region38: #{inception_b_forward.8} parent=5 // pred_check_branch
      %1179 = sbr.rel (%p1177) target = $region40
    $region39: #{inception_b_forward.8} parent=5 // pred_region
      %s1180 = ssub.s32 %s9, 2
      // Predicated region
      $region41: #{inception_b_forward.8} parent=39 // pred_check
        %p1181 = pneg %p141
      $region42: #{inception_b_forward.8} parent=39 // pred_check_branch
        %1183 = sbr.rel (%p1181) target = $region44
      $region43: #{inception_b_forward.8} parent=39 // pred_region
        %s1184 = smul.u32 8, %s23
        %p1185 = scmp.lt.s32.totalorder %s22, 1
        %s1186 = scalar_select %p1185, %s22, 1
        %p1187 = scmp.lt.s32.totalorder %s1184, 7
        %s1188 = scalar_select %p1187, %s1184, 7
        %p1189 = scmp.lt.s32.totalorder %s24, 0
        %s1190 = scalar_select %p1189, %s24, 0
        %s1191 = sadd.s32 %s1190, %s1188
        %s1192 = smul.addr %s1186, 8
        %s1193 = sadd.s32 %s1191, %s1192
        %s1194 = smul.addr %s1193, 8
        %s1195 = scalar_lea.vmem %s3, %s1194
      $region44: #{inception_b_forward.8} parent=39 // pred_fallthru
        _
    $region40: #{inception_b_forward.8} parent=5 // pred_fallthru
      _
  $region6: #{inception_b_forward.8} parent=0 // loop_footer
    %s13 = sadd.s32 1, %s9
  $region7: #{inception_b_forward.8} parent=0 // loop_footer_branch
    %8 = sbr.rel target = $region3
  $region8: #{inception_b_forward.8} parent=0 // loop_exit
    _

// kernel: inception_b_forward.5
$region0: #{inception_b_forward.5}
  #allocation0 [shape = 'u32[]', space=smem, size = 0x4, offset = 0x4, fixed_abs, tag = 'smem constant byte address 0x4 - core index']
  #allocation1 [shape = 'u32[144,128]{1,0:T(1,128)}', space=vmem, size = 0x12000, scoped, tag = 'internal scratch']
  %s0 = inlined_call_operand.vmem [shape: bf16[2,64,36], index: 0, kind: input, shape index: {}]
  %s1 = inlined_call_operand.vmem [shape: bf16[36,384], index: 1, kind: input, shape index: {}]
  %s2 = inlined_call_operand.vmem [shape: f32[1,384], index: 2, kind: input, shape index: {}]
  %s3 = inlined_call_operand.vmem [shape: f32[2,64,384], index: 3, kind: output, shape index: {}]
  %s4 = sld [smem:[#allocation0]]
  $region120: #{inception_b_forward.5} parent=0
    _
  %s6 = ssub.s32 1, %s4
  %s7 = scalar_select 0, %s6, %s4
  $region1: #{inception_b_forward.5} parent=0
    #allocation2 [shape = 'u8[20480]{0}', space=vmem, size = 0x5000, scoped, tag = 'input window, operand 1']
    #allocation3 [shape = 'u8[65536]{0}', space=vmem, size = 0x10000, scoped, tag = 'output window, operand 0']
    loop: start=0, step=1, limit=8
    $region2: #{inception_b_forward.5} parent=1 // loop_pre_header
      _
    $region3: #{inception_b_forward.5} parent=1 // loop_header
      %s9 = sphi 0, %s13
      %p10 = scmp.ge.s32.totalorder %s9, 8
      %s16 = sphi 0, %s35
      %s17 = sphi 0, %s31
      %s18 = sphi 0, %s27
      %s19 = sphi 0, %s16
      %s20 = sphi 0, %s17
      %s21 = sphi 0, %s18
      %s22 = sphi 0, %s19
      %s23 = sphi 0, %s20
      %s24 = sphi 0, %s21
      %s40 = sphi 0, %s42
      %s43 = sphi 0, %s40
      %s44 = sphi 0, %s43
      %s60 = sphi 0, %s44
      %s66 = sphi 0, %s68
      %s69 = sphi 0, %s66
      %s70 = sphi 0, %s69
      %s86 = sphi 0, %s70
      %s92 = sphi 0, %s94
      %s95 = sphi 0, %s92
      %s96 = sphi 0, %s95
      %s112 = sphi 0, %s96
      %s122 = sphi 0, %s124
      %s125 = sphi 0, %s122
      %s126 = sphi 0, %s125
      %s142 = sphi 0, %s126
    $region4: #{inception_b_forward.5} parent=1 // loop_header_branch
      %12 = sbr.rel (%p10) target = $region8
    $region5: #{inception_b_forward.5} parent=1 // loop_body
      %s14 = ssub.s32 %s9, 1
      %s15 = ssub.s32 %s9, 2
      %s25 = sadd.s32 1, %s18
      %p26 = scmp.ge.s32.totalorder %s25, 3
      %s27 = scalar_select %p26, 0, %s25
      %s28 = sadd.s32 1, %s17
      %s29 = scalar_select %p26, %s28, %s17
      %p30 = scmp.ge.s32.totalorder %s29, 1
      %s31 = scalar_select %p30, 0, %s29
      %s32 = sadd.s32 1, %s16
      %s33 = scalar_select %p30, %s32, %s16
      %p34 = scmp.ge.s32.totalorder %s33, 2
      %s35 = scalar_select %p34, 0, %s33
      %s36 = ssub.s32 %s16, %s35
      %s37 = ssub.s32 %s17, %s31
      %s38 = sor.u32 %s36, %s37
      %p39 = scmp.eq.s32.totalorder %s38, 0
      %s41 = sadd.s32 %s40, 1
      %s42 = scalar_select %p39, %s40, %s41
      %p45 = pneg %p39
      %p46 = scmp.eq.s32.totalorder %s9, 5
      %p47 = por %p45, %p46
      %p48 = scmp.ne.s32.totalorder %s40, %s43
      %p49 = scmp.eq.s32.totalorder %s9, 0
      %p50 = por %p48, %p49
      %p51 = scmp.ne.s32.totalorder %s40, %s43
      %p52 = scmp.eq.s32.totalorder %s14, 5
      %p53 = por %p51, %p52
      %p54 = scmp.ne.s32.totalorder %s43, %s44
      %p55 = scmp.eq.s32.totalorder %s14, 0
      %p56 = por %p54, %p55
      %p57 = scmp.ne.s32.totalorder %s43, %s44
      %p58 = scmp.eq.s32.totalorder %s15, 5
      %p59 = por %p57, %p58
      %p61 = scmp.ne.s32.totalorder %s44, %s60
      %p62 = scmp.eq.s32.totalorder %s15, 0
      %p63 = por %p61, %p62
      %s64 = ssub.s32 %s18, %s27
      %p65 = scmp.eq.s32.totalorder %s64, 0
      %s67 = sadd.s32 %s66, 1
      %s68 = scalar_select %p65, %s66, %s67
      %p71 = pneg %p65
      %p72 = scmp.eq.s32.totalorder %s9, 5
      %p73 = por %p71, %p72
      %p74 = scmp.ne.s32.totalorder %s66, %s69
      %p75 = scmp.eq.s32.totalorder %s9, 0
      %p76 = por %p74, %p75
      %p77 = scmp.ne.s32.totalorder %s66, %s69
      %p78 = scmp.eq.s32.totalorder %s14, 5
      %p79 = por %p77, %p78
      %p80 = scmp.ne.s32.totalorder %s69, %s70
      %p81 = scmp.eq.s32.totalorder %s14, 0
      %p82 = por %p80, %p81
      %p83 = scmp.ne.s32.totalorder %s69, %s70
      %p84 = scmp.eq.s32.totalorder %s15, 5
      %p85 = por %p83, %p84
      %p87 = scmp.ne.s32.totalorder %s70, %s86
      %p88 = scmp.eq.s32.totalorder %s15, 0
      %p89 = por %p87, %p88
      %s90 = ssub.s32 %s18, %s27
      %p91 = scmp.eq.s32.totalorder %s90, 0
      %s93 = sadd.s32 %s92, 1
      %s94 = scalar_select %p91, %s92, %s93
      %p97 = pneg %p91
      %p98 = scmp.eq.s32.totalorder %s9, 5
      %p99 = por %p97, %p98
      %p100 = scmp.ne.s32.totalorder %s92, %s95
      %p101 = scmp.eq.s32.totalorder %s9, 0
      %p102 = por %p100, %p101
      %p103 = scmp.ne.s32.totalorder %s92, %s95
      %p104 = scmp.eq.s32.totalorder %s14, 5
      %p105 = por %p103, %p104
      %p106 = scmp.ne.s32.totalorder %s95, %s96
      %p107 = scmp.eq.s32.totalorder %s14, 0
      %p108 = por %p106, %p107
      %p109 = scmp.ne.s32.totalorder %s95, %s96
      %p110 = scmp.eq.s32.totalorder %s15, 5
      %p111 = por %p109, %p110
      %p113 = scmp.ne.s32.totalorder %s96, %s112
      %p114 = scmp.eq.s32.totalorder %s15, 0
      %p115 = por %p113, %p114
      %s116 = ssub.s32 %s16, %s35
      %s117 = ssub.s32 %s17, %s31
      %s118 = sor.u32 %s116, %s117
      %s119 = ssub.s32 %s18, %s27
      %s120 = sor.u32 %s118, %s119
      %p121 = scmp.eq.s32.totalorder %s120, 0
      %s123 = sadd.s32 %s122, 1
      %s124 = scalar_select %p121, %s122, %s123
      %p127 = pneg %p121
      %p128 = scmp.eq.s32.totalorder %s9, 5
      %p129 = por %p127, %p128
      %p130 = scmp.ne.s32.totalorder %s122, %s125
      %p131 = scmp.eq.s32.totalorder %s9, 0
      %p132 = por %p130, %p131
      %p133 = scmp.ne.s32.totalorder %s122, %s125
      %p134 = scmp.eq.s32.totalorder %s14, 5
      %p135 = por %p133, %p134
      %p136 = scmp.ne.s32.totalorder %s125, %s126
      %p137 = scmp.eq.s32.totalorder %s14, 0
      %p138 = por %p136, %p137
      %p139 = scmp.ne.s32.totalorder %s125, %s126
      %p140 = scmp.eq.s32.totalorder %s15, 5
      %p141 = por %p139, %p140
      %p143 = scmp.ne.s32.totalorder %s126, %s142
      %p144 = scmp.eq.s32.totalorder %s15, 0
      %p145 = por %p143, %p144
      %p146 = scmp.le.s32.totalorder 1, %s9
      %p147 = scmp.lt.s32.totalorder %s9, 7
      %p148 = pnand %p146, %p147
      %p149 = pneg %p148
      // Predicated region
      $region9: #{inception_b_forward.5} parent=5 // pred_check
        _
      $region10: #{inception_b_forward.5} parent=5 // pred_check_branch
        %151 = sbr.rel (%p148) target = $region12
      $region11: #{inception_b_forward.5} parent=5 // pred_region
        %s152 = ssub.s32 %s9, 1
      $region12: #{inception_b_forward.5} parent=5 // pred_fallthru
        _
      %p153 = scmp.lt.s32.totalorder %s9, 6
      // Predicated region
      $region13: #{inception_b_forward.5} parent=5 // pred_check
        %p154 = pneg %p153
      $region14: #{inception_b_forward.5} parent=5 // pred_check_branch
        %156 = sbr.rel (%p154) target = $region16
      $region15: #{inception_b_forward.5} parent=5 // pred_region
        // Predicated region
        $region17: #{inception_b_forward.5} parent=15 // pred_check
          %p157 = pneg %p50
        $region18: #{inception_b_forward.5} parent=15 // pred_check_branch
          %159 = sbr.rel (%p157) target = $region20
        $region19: #{inception_b_forward.5} parent=15 // pred_region
          %s160 = smul.u32 8, %s17
          %p161 = scmp.lt.s32.totalorder %s16, 1
          %s162 = scalar_select %p161, %s16, 1
          %p163 = scmp.lt.s32.totalorder %s160, 7
          %s164 = scalar_select %p163, %s160, 7
          %s165 = smul.addr %s162, 8
          %s166 = sadd.s32 %s164, %s165
          %s167 = smul.addr %s166, 4
          %s168 = scalar_lea.vmem %s0, %s167
          %s169 = smul.u32 8, %s17
        $region20: #{inception_b_forward.5} parent=15 // pred_fallthru
          _
        // Predicated region
        $region21: #{inception_b_forward.5} parent=15 // pred_check
          %p170 = pneg %p76
        $region22: #{inception_b_forward.5} parent=15 // pred_check_branch
          %172 = sbr.rel (%p170) target = $region24
        $region23: #{inception_b_forward.5} parent=15 // pred_region
          %s173 = sand.u32 %s66, 1
          %s174 = sand.u32 %s66, 1
          %s175 = smul.addr %s174, 20
          %s176 = scalar_lea.vmem [#allocation2], %s175
          %s177 = smul.addr %s18, 4
          %s178 = scalar_lea.vmem %s1, %s177
          // Predicated region
          $region25: #{inception_b_forward.5} parent=23 // pred_check
            _
          $region26: #{inception_b_forward.5} parent=23 // pred_check_branch
            %180 = sbr.rel (0) target = $region28
          $region27: #{inception_b_forward.5} parent=23 // pred_region
            // Predicated region
            $region29: #{inception_b_forward.5} parent=27 // pred_check
              _
            $region30: #{inception_b_forward.5} parent=27 // pred_check_branch
              %182 = sbr.rel target = $region32
            $region31: #{inception_b_forward.5} parent=27 // pred_region
              // Predicated region
              $region44: #{inception_b_forward.5} parent=31 // pred_check
                _
              $region45: #{inception_b_forward.5} parent=31 // pred_check_branch
                %205 = sbr.rel (0) target = $region47
              $region46: #{inception_b_forward.5} parent=31 // pred_region
                loop: start=0, step=1, limit=1
                $region48: #{inception_b_forward.5} parent=46 // loop_pre_header
                  _
                $region49: #{inception_b_forward.5} parent=46 // loop_header
                  %s207 = sphi 0, %s211
                  %p208 = scmp.ge.s32.totalorder %s207, 1
                  %s212 = sphi %s178, %s178
                  %s213 = sphi %s176, %s176
                $region50: #{inception_b_forward.5} parent=46 // loop_header_branch
                  %210 = sbr.rel (%p208) target = $region54
                $region51: #{inception_b_forward.5} parent=46 // loop_body
                  _
                $region52: #{inception_b_forward.5} parent=46 // loop_footer
                  %s211 = sadd.s32 1, %s207
                $region53: #{inception_b_forward.5} parent=46 // loop_footer_branch
                  %206 = sbr.rel target = $region49
                $region54: #{inception_b_forward.5} parent=46 // loop_exit
                  _
                loop: start=0, step=1, limit=1
                $region55: #{inception_b_forward.5} parent=46 // loop_pre_header
                  _
                $region56: #{inception_b_forward.5} parent=46 // loop_header
                  %s216 = sphi 0, %s220
                  %p217 = scmp.ge.s32.totalorder %s216, 1
                  %s221 = sphi %s178, %s178
                  %s222 = sphi %s176, %s176
                $region57: #{inception_b_forward.5} parent=46 // loop_header_branch
                  %219 = sbr.rel (%p217) target = $region61
                $region58: #{inception_b_forward.5} parent=46 // loop_body
                  %v223 = vld [vmem:[%s221] sm:$0xf]
                  %224 = vst [vmem:[%s222] sm:$0xf] %v223
                  %v225 = vld [vmem:[%s221 + $0xc] sm:$0xf]
                  %226 = vst [vmem:[%s222 + $0x4] sm:$0xf] %v225
                  %v227 = vld [vmem:[%s221 + $0x18] sm:$0xf]
                  %228 = vst [vmem:[%s222 + $0x8] sm:$0xf] %v227
                  %v229 = vld [vmem:[%s221 + $0x24] sm:$0xf]
                  %230 = vst [vmem:[%s222 + $0xc] sm:$0xf] %v229
                  %v231 = vld [vmem:[%s221 + $0x30] sm:$0xf]
                  %232 = vst [vmem:[%s222 + $0x10] sm:$0xf] %v231
                $region59: #{inception_b_forward.5} parent=46 // loop_footer
                  %s220 = sadd.s32 1, %s216
                $region60: #{inception_b_forward.5} parent=46 // loop_footer_branch
                  %215 = sbr.rel target = $region56
                $region61: #{inception_b_forward.5} parent=46 // loop_exit
                  _
              $region47: #{inception_b_forward.5} parent=31 // pred_fallthru
                _
            $region32: #{inception_b_forward.5} parent=27 // pred_fallthru
              _
            // Predicated region
            $region33: #{inception_b_forward.5} parent=27 // pred_check
              _
            $region34: #{inception_b_forward.5} parent=27 // pred_check_branch
              %184 = sbr.rel (0) target = $region36
            $region35: #{inception_b_forward.5} parent=27 // pred_region
              loop: start=0, step=1, limit=1
              $region37: #{inception_b_forward.5} parent=35 // loop_pre_header
                _
              $region38: #{inception_b_forward.5} parent=35 // loop_header
                %s187 = sphi 0, %s191
                %p188 = scmp.ge.s32.totalorder %s187, 1
                %s192 = sphi %s178, %s178
                %s193 = sphi %s176, %s176
              $region39: #{inception_b_forward.5} parent=35 // loop_header_branch
                %190 = sbr.rel (%p188) target = $region43
              $region40: #{inception_b_forward.5} parent=35 // loop_body
                %v194 = vld [vmem:[%s192] sm:$0xf]
                %195 = vst [vmem:[%s193] sm:$0xf] %v194
                %v196 = vld [vmem:[%s192 + $0xc] sm:$0xf]
                %197 = vst [vmem:[%s193 + $0x4] sm:$0xf] %v196
                %v198 = vld [vmem:[%s192 + $0x18] sm:$0xf]
                %199 = vst [vmem:[%s193 + $0x8] sm:$0xf] %v198
                %v200 = vld [vmem:[%s192 + $0x24] sm:$0xf]
                %201 = vst [vmem:[%s193 + $0xc] sm:$0xf] %v200
                %v202 = vld [vmem:[%s192 + $0x30] sm:$0xf]
                %203 = vst [vmem:[%s193 + $0x10] sm:$0xf] %v202
              $region41: #{inception_b_forward.5} parent=35 // loop_footer
                %s191 = sadd.s32 1, %s187
              $region42: #{inception_b_forward.5} parent=35 // loop_footer_branch
                %186 = sbr.rel target = $region38
              $region43: #{inception_b_forward.5} parent=35 // loop_exit
                _
            $region36: #{inception_b_forward.5} parent=27 // pred_fallthru
              _
          $region28: #{inception_b_forward.5} parent=23 // pred_fallthru
            _
          %233 = vnop
        $region24: #{inception_b_forward.5} parent=15 // pred_fallthru
          _
        // Predicated region
        $region62: #{inception_b_forward.5} parent=15 // pred_check
          %p234 = pneg %p102
        $region63: #{inception_b_forward.5} parent=15 // pred_check_branch
          %236 = sbr.rel (%p234) target = $region65
        $region64: #{inception_b_forward.5} parent=15 // pred_region
          %p237 = scmp.lt.s32.totalorder %s18, 2
          %s238 = scalar_select %p237, %s18, 2
          %s239 = scalar_lea.vmem %s2, %s238
        $region65: #{inception_b_forward.5} parent=15 // pred_fallthru
          _
      $region16: #{inception_b_forward.5} parent=5 // pred_fallthru
        _
      %p240 = scmp.le.s32.totalorder 1, %s9
      %p241 = scmp.lt.s32.totalorder %s9, 7
      %p242 = pnand %p240, %p241
      %p243 = pneg %p242
      // Predicated region
      $region66: #{inception_b_forward.5} parent=5 // pred_check
        _
      $region67: #{inception_b_forward.5} parent=5 // pred_check_branch
        %245 = sbr.rel (%p242) target = $region69
      $region68: #{inception_b_forward.5} parent=5 // pred_region
        %s246 = ssub.s32 %s9, 1
        %s247 = sand.u32 %s69, 1
        %s248 = sand.u32 %s69, 1
        %s249 = smul.addr %s248, 20
        %s250 = scalar_lea.vmem [#allocation2], %s249
        // Predicated region
        $region70: #{inception_b_forward.5} parent=68 // pred_check
          %p251 = pneg %p82
        $region71: #{inception_b_forward.5} parent=68 // pred_check_branch
          %253 = sbr.rel (%p251) target = $region73
        $region72: #{inception_b_forward.5} parent=68 // pred_region
          _
        $region73: #{inception_b_forward.5} parent=68 // pred_fallthru
          _
        %s254 = smul.u32 8, %s20
        %p255 = scmp.lt.s32.totalorder %s19, 1
        %s256 = scalar_select %p255, %s19, 1
        %p257 = scmp.lt.s32.totalorder %s254, 7
        %s258 = scalar_select %p257, %s254, 7
        %s259 = smul.addr %s256, 8
        %s260 = sadd.s32 %s258, %s259
        %s261 = smul.addr %s260, 4
        %s262 = scalar_lea.vmem %s0, %s261
        %p263 = pneg %p56
        %p264 = pneg %p53
        %s265 = sand.u32 %s69, 1
        %s266 = sand.u32 %s69, 1
        %s267 = smul.addr %s266, 20
        %s268 = scalar_lea.vmem [#allocation2], %s267
        %p269 = pneg %p82
        %p270 = pneg %p79
        %p271 = scmp.lt.s32.totalorder %s21, 2
        %s272 = scalar_select %p271, %s21, 2
        %s273 = scalar_lea.vmem %s2, %s272
        %p274 = pneg %p108
        %p275 = pneg %p105
        %p276 = pneg %p138
        %p277 = pneg %p135
        %s278 = sand.u32 %s125, 1
        %s279 = sand.u32 %s125, 1
        %s280 = smul.addr %s279, 64
        %s281 = scalar_lea.vmem [#allocation3], %s280
        %s282 = smul.u32 8, %s20
        %p283 = scmp.lt.s32.totalorder %s19, 1
        %s284 = scalar_select %p283, %s19, 1
        %p285 = scmp.lt.s32.totalorder %s282, 7
        %s286 = scalar_select %p285, %s282, 7
        %s287 = smul.addr %s284, 8
        %s288 = sadd.s32 %s286, %s287
        %s289 = smul.addr %s288, 4
        %s290 = scalar_lea.vmem %s0, %s289
        %s291 = smul.u32 8, %s20
        %p292 = scmp.lt.s32.totalorder %s21, 2
        %s293 = scalar_select %p292, %s21, 2
        %s294 = scalar_lea.vmem %s2, %s293
        %s295 = smul.u32 8, %s20
        %v297 = vld [vmem:[%s290] sm:$0xf]
        %v298 = vld [vmem:[%s290 + $0x4] sm:$0xf]
        %v299 = vld [vmem:[%s290 + $0x8] sm:$0xf]
        %v300 = vld [vmem:[%s290 + $0xc] sm:$0xf]
        %v301 = vld [vmem:[%s290 + $0x10] sm:$0xf]
        %v302 = vld [vmem:[%s290 + $0x14] sm:$0xf]
        %v303 = vld [vmem:[%s290 + $0x18] sm:$0xf]
        %v304 = vld [vmem:[%s290 + $0x1c] sm:$0xf]
        %v305 = vld [vmem:[%s250] sm:$0xf]
        %v306 = vld [vmem:[%s250 + $0x4] sm:$0xf]
        %v307 = vld [vmem:[%s250 + $0x8] sm:$0xf]
        %v308 = vld [vmem:[%s250 + $0xc] sm:$0xf]
        %v309 = vld [vmem:[%s250 + $0x10] sm:$0x3]
        %v310 = vld [vmem:[%s294] sm:$0x1]
        %v312 = vlaneseq
        %v313 = vshrl.u32 %v312, 7
        %v314 = vsub.s32 0, %v313
        %v315 = vrot.slane %v310, %v314
        %v325 = vunpack.c.l.b16 %v297
        %v326 = vunpack.c.l.b16 %v298
        %v327 = vunpack.c.l.b16 %v299
        %v328 = vunpack.c.l.b16 %v300
        %v329 = vunpack.c.l.b16 %v301
        %v330 = vunpack.c.l.b16 %v302
        %v331 = vunpack.c.l.b16 %v303
        %v332 = vunpack.c.l.b16 %v304
        %v333 = vpack.c.b16 %v326, %v325
        %v334 = vpack.c.b16 %v328, %v327
        %v335 = vpack.c.b16 %v330, %v329
        %v336 = vpack.c.b16 %v332, %v331
        %v342 = vunpack.c.l.b16 %v305
        %v343 = vunpack.c.l.b16 %v306
        %v344 = vunpack.c.l.b16 %v307
        %v345 = vunpack.c.l.b16 %v308
        %v346 = vunpack.c.l.b16 %v309
        %v347 = vpack.c.b16 %v343, %v342
        %v348 = vpack.c.b16 %v345, %v344
        %v349 = vpack.c.b16 %v346, %v346
        %vm352 = vcmask 293888
        %v354 = vsel %vm352, %v333, 0
        %v357 = vsel %vm352, %v334, 0
        %v360 = vsel %vm352, %v335, 0
        %v363 = vsel %vm352, %v336, 0
        %vm365 = vcmask 1041408
        %v367 = vsel %vm365, %v349, 0
        %369 = vmatprep.subr.bf16.mxu0 0
        %370 = vmatpush1.bf16.msra.mxu0 %v347
        %371 = vmatprep.subr.bf16.mxu0 0
        %372 = vmatpush1.bf16.msra.mxu0 %v348
        %373 = vmatprep.subr.bf16.mxu0 0
        %374 = vmatpush1.bf16.msra.mxu0 %v367
        %375 = vmatprep.subr.bf16.mxu0 0
        %376 = vmatpush1.bf16.msra.mxu0 0
        %377 = vmatprep.subr.bf16.mxu0 0
        %378 = vmatpush1.bf16.msra.mxu0 0
        %379 = vmatprep.subr.bf16.mxu0 0
        %380 = vmatpush1.bf16.msra.mxu0 0
        %381 = vmatprep.subr.bf16.mxu0 0
        %382 = vmatpush1.bf16.msra.mxu0 0
        %383 = vmatprep.subr.bf16.mxu0 0
        %384 = vmatpush1.bf16.msra.mxu0 0
        %385 = vmatprep.subr.bf16.mxu0 0
        %386 = vmatpush1.bf16.msra.mxu0 0
        %387 = vmatprep.subr.bf16.mxu0 0
        %388 = vmatpush1.bf16.msra.mxu0 0
        %389 = vmatprep.subr.bf16.mxu0 0
        %390 = vmatpush1.bf16.msra.mxu0 0
        %391 = vmatprep.subr.bf16.mxu0 0
        %392 = vmatpush1.bf16.msra.mxu0 0
        %393 = vmatprep.subr.bf16.mxu0 0
        %394 = vmatpush1.bf16.msra.mxu0 0
        %395 = vmatprep.subr.bf16.mxu0 0
        %396 = vmatpush1.bf16.msra.mxu0 0
        %397 = vmatprep.subr.bf16.mxu0 0
        %398 = vmatpush1.bf16.msra.mxu0 0
        %399 = vmatprep.subr.bf16.mxu0 0
        %400 = vmatpush1.bf16.msra.mxu0 0
        %401 = vmatprep.mubr.bf16.mxu0 0
        %402 = vmatmul.mubr.bf16.gmra.mrb[0].mxu0 %v354
        %v403 = vpop.f32.mrb[0].mxu0
        %v404 = vadd.f32 %v315, %v403
        %v405 = vpop.f32.mrb[0].mxu0
        %v406 = vpop.f32.mrb[0].mxu0
        %v407 = vadd.f32 %v315, %v406
        %v408 = vpop.f32.mrb[0].mxu0
        %409 = vmatprep.mubr.bf16.mxu0 0
        %410 = vmatmul.mubr.bf16.gmra.mrb[0].mxu0 %v357
        %v411 = vpop.f32.mrb[0].mxu0
        %v412 = vadd.f32 %v315, %v411
        %v413 = vpop.f32.mrb[0].mxu0
        %v414 = vpop.f32.mrb[0].mxu0
        %v415 = vadd.f32 %v315, %v414
        %v416 = vpop.f32.mrb[0].mxu0
        %417 = vmatprep.mubr.bf16.mxu0 0
        %418 = vmatmul.mubr.bf16.gmra.mrb[0].mxu0 %v360
        %v419 = vpop.f32.mrb[0].mxu0
        %v420 = vadd.f32 %v315, %v419
        %v421 = vpop.f32.mrb[0].mxu0
        %v422 = vpop.f32.mrb[0].mxu0
        %v423 = vadd.f32 %v315, %v422
        %v424 = vpop.f32.mrb[0].mxu0
        %425 = vmatprep.mubr.bf16.mxu0 0
        %426 = vmatmul.mubr.bf16.gmra.mrb[0].mxu0 %v363
        %v427 = vpop.f32.mrb[0].mxu0
        %v428 = vadd.f32 %v315, %v427
        %v429 = vpop.f32.mrb[0].mxu0
        %v430 = vpop.f32.mrb[0].mxu0
        %v431 = vadd.f32 %v315, %v430
        %v432 = vpop.f32.mrb[0].mxu0
        %433 = vdwg.mxu0
        %v434 = vmax.f32 %v404, 0.0
        %v435 = vmax.f32 %v407, 0.0
        %v436 = vmax.f32 %v412, 0.0
        %v437 = vmax.f32 %v415, 0.0
        %v438 = vmax.f32 %v420, 0.0
        %v439 = vmax.f32 %v423, 0.0
        %v440 = vmax.f32 %v428, 0.0
        %v441 = vmax.f32 %v431, 0.0
        %442 = vst [vmem:[%s281] sm:$0xff] %v434
        %443 = vst [vmem:[%s281 + $0x8] sm:$0xff] %v435
        %444 = vst [vmem:[%s281 + $0x10] sm:$0xff] %v436
        %445 = vst [vmem:[%s281 + $0x18] sm:$0xff] %v437
        %446 = vst [vmem:[%s281 + $0x20] sm:$0xff] %v438
        %447 = vst [vmem:[%s281 + $0x28] sm:$0xff] %v439
        %448 = vst [vmem:[%s281 + $0x30] sm:$0xff] %v440
        %449 = vst [vmem:[%s281 + $0x38] sm:$0xff] %v441
        %s450 = sand.u32 %s125, 1
        %s451 = sand.u32 %s125, 1
        %s452 = smul.addr %s451, 64
        %s453 = scalar_lea.vmem [#allocation3], %s452
        // Predicated region
        $region74: #{inception_b_forward.5} parent=68 // pred_check
          %p454 = pneg %p135
        $region75: #{inception_b_forward.5} parent=68 // pred_check_branch
          %456 = sbr.rel (%p454) target = $region77
        $region76: #{inception_b_forward.5} parent=68 // pred_region
          %s457 = smul.u32 8, %s20
          %s458 = smul.addr %s457, 3
          %s459 = sadd.s32 %s21, %s458
          %s460 = smul.addr %s19, 24
          %s461 = sadd.s32 %s459, %s460
          %s462 = smul.addr %s461, 8
          %s463 = scalar_lea.vmem %s3, %s462
          // Predicated region
          $region78: #{inception_b_forward.5} parent=76 // pred_check
            _
          $region79: #{inception_b_forward.5} parent=76 // pred_check_branch
            %465 = sbr.rel (0) target = $region81
          $region80: #{inception_b_forward.5} parent=76 // pred_region
            // Predicated region
            $region82: #{inception_b_forward.5} parent=80 // pred_check
              _
            $region83: #{inception_b_forward.5} parent=80 // pred_check_branch
              %467 = sbr.rel (0) target = $region85
            $region84: #{inception_b_forward.5} parent=80 // pred_region
              // Predicated region
              $region97: #{inception_b_forward.5} parent=84 // pred_check
                _
              $region98: #{inception_b_forward.5} parent=84 // pred_check_branch
                %496 = sbr.rel (0) target = $region100
              $region99: #{inception_b_forward.5} parent=84 // pred_region
                loop: start=0, step=1, limit=1
                $region101: #{inception_b_forward.5} parent=99 // loop_pre_header
                  _
                $region102: #{inception_b_forward.5} parent=99 // loop_header
                  %s498 = sphi 0, %s502
                  %p499 = scmp.ge.s32.totalorder %s498, 1
                  %s503 = sphi %s453, %s453
                  %s504 = sphi %s463, %s463
                $region103: #{inception_b_forward.5} parent=99 // loop_header_branch
                  %501 = sbr.rel (%p499) target = $region107
                $region104: #{inception_b_forward.5} parent=99 // loop_body
                  %v505 = vld [vmem:[%s503] sm:$0xff]
                  %506 = vst [vmem:[%s504] sm:$0xff] %v505
                  %v507 = vld [vmem:[%s503 + $0x8] sm:$0xff]
                  %508 = vst [vmem:[%s504 + $0x18] sm:$0xff] %v507
                  %v509 = vld [vmem:[%s503 + $0x10] sm:$0xff]
                  %510 = vst [vmem:[%s504 + $0x30] sm:$0xff] %v509
                  %v511 = vld [vmem:[%s503 + $0x18] sm:$0xff]
                  %512 = vst [vmem:[%s504 + $0x48] sm:$0xff] %v511
                  %v513 = vld [vmem:[%s503 + $0x20] sm:$0xff]
                  %514 = vst [vmem:[%s504 + $0x60] sm:$0xff] %v513
                  %v515 = vld [vmem:[%s503 + $0x28] sm:$0xff]
                  %516 = vst [vmem:[%s504 + $0x78] sm:$0xff] %v515
                  %v517 = vld [vmem:[%s503 + $0x30] sm:$0xff]
                  %518 = vst [vmem:[%s504 + $0x90] sm:$0xff] %v517
                  %v519 = vld [vmem:[%s503 + $0x38] sm:$0xff]
                  %520 = vst [vmem:[%s504 + $0xa8] sm:$0xff] %v519
                $region105: #{inception_b_forward.5} parent=99 // loop_footer
                  %s502 = sadd.s32 1, %s498
                $region106: #{inception_b_forward.5} parent=99 // loop_footer_branch
                  %497 = sbr.rel target = $region102
                $region107: #{inception_b_forward.5} parent=99 // loop_exit
                  _
              $region100: #{inception_b_forward.5} parent=84 // pred_fallthru
                _
              // Predicated region
              $region108: #{inception_b_forward.5} parent=84 // pred_check
                _
              $region109: #{inception_b_forward.5} parent=84 // pred_check_branch
                %522 = sbr.rel target = $region111
              $region110: #{inception_b_forward.5} parent=84 // pred_region
                _
              $region111: #{inception_b_forward.5} parent=84 // pred_fallthru
                _
            $region85: #{inception_b_forward.5} parent=80 // pred_fallthru
              _
            // Predicated region
            $region86: #{inception_b_forward.5} parent=80 // pred_check
              _
            $region87: #{inception_b_forward.5} parent=80 // pred_check_branch
              %469 = sbr.rel target = $region89
            $region88: #{inception_b_forward.5} parent=80 // pred_region
              loop: start=0, step=1, limit=1
              $region90: #{inception_b_forward.5} parent=88 // loop_pre_header
                _
              $region91: #{inception_b_forward.5} parent=88 // loop_header
                %s472 = sphi 0, %s476
                %p473 = scmp.ge.s32.totalorder %s472, 1
                %s477 = sphi %s453, %s453
                %s478 = sphi %s463, %s463
              $region92: #{inception_b_forward.5} parent=88 // loop_header_branch
                %475 = sbr.rel (%p473) target = $region96
              $region93: #{inception_b_forward.5} parent=88 // loop_body
                %v479 = vld [vmem:[%s477] sm:$0xff]
                %480 = vst [vmem:[%s478] sm:$0xff] %v479
                %v481 = vld [vmem:[%s477 + $0x8] sm:$0xff]
                %482 = vst [vmem:[%s478 + $0x18] sm:$0xff] %v481
                %v483 = vld [vmem:[%s477 + $0x10] sm:$0xff]
                %484 = vst [vmem:[%s478 + $0x30] sm:$0xff] %v483
                %v485 = vld [vmem:[%s477 + $0x18] sm:$0xff]
                %486 = vst [vmem:[%s478 + $0x48] sm:$0xff] %v485
                %v487 = vld [vmem:[%s477 + $0x20] sm:$0xff]
                %488 = vst [vmem:[%s478 + $0x60] sm:$0xff] %v487
                %v489 = vld [vmem:[%s477 + $0x28] sm:$0xff]
                %490 = vst [vmem:[%s478 + $0x78] sm:$0xff] %v489
                %v491 = vld [vmem:[%s477 + $0x30] sm:$0xff]
                %492 = vst [vmem:[%s478 + $0x90] sm:$0xff] %v491
                %v493 = vld [vmem:[%s477 + $0x38] sm:$0xff]
                %494 = vst [vmem:[%s478 + $0xa8] sm:$0xff] %v493
              $region94: #{inception_b_forward.5} parent=88 // loop_footer
                %s476 = sadd.s32 1, %s472
              $region95: #{inception_b_forward.5} parent=88 // loop_footer_branch
                %471 = sbr.rel target = $region91
              $region96: #{inception_b_forward.5} parent=88 // loop_exit
                _
            $region89: #{inception_b_forward.5} parent=80 // pred_fallthru
              _
          $region81: #{inception_b_forward.5} parent=76 // pred_fallthru
            _
          %523 = vnop
        $region77: #{inception_b_forward.5} parent=68 // pred_fallthru
          _
      $region69: #{inception_b_forward.5} parent=5 // pred_fallthru
        _
      %p524 = scmp.le.s32.totalorder 2, %s9
      // Predicated region
      $region112: #{inception_b_forward.5} parent=5 // pred_check
        %p525 = pneg %p524
      $region113: #{inception_b_forward.5} parent=5 // pred_check_branch
        %527 = sbr.rel (%p525) target = $region115
      $region114: #{inception_b_forward.5} parent=5 // pred_region
        %s528 = ssub.s32 %s9, 2
        // Predicated region
        $region116: #{inception_b_forward.5} parent=114 // pred_check
          %p529 = pneg %p141
        $region117: #{inception_b_forward.5} parent=114 // pred_check_branch
          %531 = sbr.rel (%p529) target = $region119
        $region118: #{inception_b_forward.5} parent=114 // pred_region
          %s532 = sand.u32 %s126, 1
          %s533 = sand.u32 %s126, 1
          %s534 = smul.addr %s533, 64
          %s535 = scalar_lea.vmem [#allocation3], %s534
        $region119: #{inception_b_forward.5} parent=114 // pred_fallthru
          _
      $region115: #{inception_b_forward.5} parent=5 // pred_fallthru
        _
    $region6: #{inception_b_forward.5} parent=1 // loop_footer
      %s13 = sadd.s32 1, %s9
    $region7: #{inception_b_forward.5} parent=1 // loop_footer_branch
      %8 = sbr.rel target = $region3
    $region8: #{inception_b_forward.5} parent=1 // loop_exit
      _

// kernel: inception_b_forward.9
$region0: #{inception_b_forward.9}
  #allocation0 [shape = 'u32[]', space=smem, size = 0x4, offset = 0x4, fixed_abs, tag = 'smem constant byte address 0x4 - core index']
  #allocation1 [shape = 'u32[144,128]{1,0:T(1,128)}', space=vmem, size = 0x12000, scoped, tag = 'internal scratch']
  %s0 = inlined_call_operand.vmem [shape: f32[2,4,9,9,4], index: 0, kind: input, shape index: {}]
  %s1 = inlined_call_operand.vmem [shape: f32[2,8,8,4], index: 1, kind: output, shape index: {}]
  %s2 = sld [smem:[#allocation0]]
  $region37: #{inception_b_forward.9} parent=0
    _
  %s4 = ssub.s32 1, %s2
  %s5 = scalar_select 0, %s4, %s2
  loop: start=0, step=1, limit=4
  $region2: #{inception_b_forward.9} parent=0 // loop_pre_header
    _
  $region3: #{inception_b_forward.9} parent=0 // loop_header
    %s7 = sphi 0, %s11
    %p8 = scmp.ge.s32.totalorder %s7, 4
    %s17 = sphi 0, %s19
    %s20 = sphi 0, %s17
    %s21 = sphi 0, %s20
    %s37 = sphi 0, %s21
    %s43 = sphi 0, %s45
    %s46 = sphi 0, %s43
    %s47 = sphi 0, %s46
    %s63 = sphi 0, %s47
  $region4: #{inception_b_forward.9} parent=0 // loop_header_branch
    %10 = sbr.rel (%p8) target = $region8
  $region5: #{inception_b_forward.9} parent=0 // loop_body
    %s12 = ssub.s32 %s7, 1
    %s13 = ssub.s32 %s7, 2
    %s14 = sadd.s32 %s7, 1
    %s15 = ssub.s32 %s7, %s14
    %p16 = scmp.eq.s32.totalorder %s15, 0
    %s18 = sadd.s32 %s17, 1
    %s19 = scalar_select %p16, %s17, %s18
    %p22 = pneg %p16
    %p23 = scmp.eq.s32.totalorder %s7, 1
    %p24 = por %p22, %p23
    %p25 = scmp.ne.s32.totalorder %s17, %s20
    %p26 = scmp.eq.s32.totalorder %s7, 0
    %p27 = por %p25, %p26
    %p28 = scmp.ne.s32.totalorder %s17, %s20
    %p29 = scmp.eq.s32.totalorder %s12, 1
    %p30 = por %p28, %p29
    %p31 = scmp.ne.s32.totalorder %s20, %s21
    %p32 = scmp.eq.s32.totalorder %s12, 0
    %p33 = por %p31, %p32
    %p34 = scmp.ne.s32.totalorder %s20, %s21
    %p35 = scmp.eq.s32.totalorder %s13, 1
    %p36 = por %p34, %p35
    %p38 = scmp.ne.s32.totalorder %s21, %s37
    %p39 = scmp.eq.s32.totalorder %s13, 0
    %p40 = por %p38, %p39
    %s41 = ssub.s32 %s7, %s14
    %p42 = scmp.eq.s32.totalorder %s41, 0
    %s44 = sadd.s32 %s43, 1
    %s45 = scalar_select %p42, %s43, %s44
    %p48 = pneg %p42
    %p49 = scmp.eq.s32.totalorder %s7, 1
    %p50 = por %p48, %p49
    %p51 = scmp.ne.s32.totalorder %s43, %s46
    %p52 = scmp.eq.s32.totalorder %s7, 0
    %p53 = por %p51, %p52
    %p54 = scmp.ne.s32.totalorder %s43, %s46
    %p55 = scmp.eq.s32.totalorder %s12, 1
    %p56 = por %p54, %p55
    %p57 = scmp.ne.s32.totalorder %s46, %s47
    %p58 = scmp.eq.s32.totalorder %s12, 0
    %p59 = por %p57, %p58
    %p60 = scmp.ne.s32.totalorder %s46, %s47
    %p61 = scmp.eq.s32.totalorder %s13, 1
    %p62 = por %p60, %p61
    %p64 = scmp.ne.s32.totalorder %s47, %s63
    %p65 = scmp.eq.s32.totalorder %s13, 0
    %p66 = por %p64, %p65
    %p67 = scmp.le.s32.totalorder 1, %s7
    %p68 = scmp.lt.s32.totalorder %s7, 3
    %p69 = pnand %p67, %p68
    %p70 = pneg %p69
    // Predicated region
    $region9: #{inception_b_forward.9} parent=5 // pred_check
      _
    $region10: #{inception_b_forward.9} parent=5 // pred_check_branch
      %72 = sbr.rel (%p69) target = $region12
    $region11: #{inception_b_forward.9} parent=5 // pred_region
      %s73 = ssub.s32 %s7, 1
    $region12: #{inception_b_forward.9} parent=5 // pred_fallthru
      _
    %p74 = scmp.lt.s32.totalorder %s7, 2
    // Predicated region
    $region13: #{inception_b_forward.9} parent=5 // pred_check
      %p75 = pneg %p74
    $region14: #{inception_b_forward.9} parent=5 // pred_check_branch
      %77 = sbr.rel (%p75) target = $region16
    $region15: #{inception_b_forward.9} parent=5 // pred_region
      // Predicated region
      $region17: #{inception_b_forward.9} parent=15 // pred_check
        %p78 = pneg %p27
      $region18: #{inception_b_forward.9} parent=15 // pred_check_branch
        %80 = sbr.rel (%p78) target = $region20
      $region19: #{inception_b_forward.9} parent=15 // pred_region
        %p81 = scmp.lt.s32.totalorder %s7, 1
        %s82 = scalar_select %p81, %s7, 1
        %s83 = smul.addr %s82, 72
        %s84 = smul.addr %s83, 8
        %s85 = scalar_lea.vmem %s0, %s84
      $region20: #{inception_b_forward.9} parent=15 // pred_fallthru
        _
    $region16: #{inception_b_forward.9} parent=5 // pred_fallthru
      _
    %p86 = scmp.le.s32.totalorder 1, %s7
    %p87 = scmp.lt.s32.totalorder %s7, 3
    %p88 = pnand %p86, %p87
    %p89 = pneg %p88
    // Predicated region
    $region21: #{inception_b_forward.9} parent=5 // pred_check
      _
    $region22: #{inception_b_forward.9} parent=5 // pred_check_branch
      %91 = sbr.rel (%p88) target = $region24
    $region23: #{inception_b_forward.9} parent=5 // pred_region
      %s92 = ssub.s32 %s7, 1
      %p93 = scmp.lt.s32.totalorder %s12, 1
      %s94 = scalar_select %p93, %s12, 1
      %s95 = smul.addr %s94, 72
      %s96 = smul.addr %s95, 8
      %s97 = scalar_lea.vmem %s0, %s96
      %p98 = pneg %p33
      %p99 = pneg %p30
      %p100 = pneg %p59
      %p101 = pneg %p56
      %p102 = scmp.lt.s32.totalorder %s12, 1
      %s103 = scalar_select %p102, %s12, 1
      %s104 = smul.addr %s103, 8
      %s105 = smul.addr %s104, 8
      %s106 = scalar_lea.vmem %s1, %s105
      %p107 = scmp.lt.s32.totalorder %s12, 1
      %s108 = scalar_select %p107, %s12, 1
      %s109 = smul.addr %s108, 72
      %s110 = smul.addr %s109, 8
      %s111 = scalar_lea.vmem %s0, %s110
      %p112 = scmp.lt.s32.totalorder %s12, 1
      %s113 = scalar_select %p112, %s12, 1
      %s114 = smul.addr %s113, 8
      %s115 = smul.addr %s114, 8
      %s116 = scalar_lea.vmem %s1, %s115
      %v117 = vld [vmem:[%s111] sm:$0xff]
      %v118 = vld [vmem:[%s111 + $0x10] sm:$0xff]
      %v119 = vld [vmem:[%s111 + $0x20] sm:$0xff]
      %v120 = vld [vmem:[%s111 + $0x30] sm:$0xff]
      %v121 = vld [vmem:[%s111 + $0x40] sm:$0xff]
      %v122 = vld [vmem:[%s111 + $0x50] sm:$0xff]
      %v123 = vld [vmem:[%s111 + $0x60] sm:$0xff]
      %v124 = vld [vmem:[%s111 + $0x70] sm:$0xff]
      %s125 = scalar_lea.vmem %s111, 144
      %v126 = vld [vmem:[%s125] sm:$0xff]
      %v127 = vld [vmem:[%s125 + $0x10] sm:$0xff]
      %v128 = vld [vmem:[%s125 + $0x20] sm:$0xff]
      %v129 = vld [vmem:[%s125 + $0x30] sm:$0xff]
      %v130 = vld [vmem:[%s125 + $0x40] sm:$0xff]
      %v131 = vld [vmem:[%s125 + $0x50] sm:$0xff]
      %v132 = vld [vmem:[%s125 + $0x60] sm:$0xff]
      %v133 = vld [vmem:[%s125 + $0x70] sm:$0xff]
      %v134 = vmax.f32 %v117, %v126
      %v135 = vmax.f32 %v118, %v127
      %v136 = vmax.f32 %v119, %v128
      %v137 = vmax.f32 %v120, %v129
      %v138 = vmax.f32 %v121, %v130
      %v139 = vmax.f32 %v122, %v131
      %v140 = vmax.f32 %v123, %v132
      %v141 = vmax.f32 %v124, %v133
      %v142 = vld [vmem:[%s111 + $0x1] sm:$0xff]
      %v143 = vld [vmem:[%s111 + $0x11] sm:$0xff]
      %v144 = vld [vmem:[%s111 + $0x21] sm:$0xff]
      %v145 = vld [vmem:[%s111 + $0x31] sm:$0xff]
      %v146 = vld [vmem:[%s111 + $0x41] sm:$0xff]
      %v147 = vld [vmem:[%s111 + $0x51] sm:$0xff]
      %v148 = vld [vmem:[%s111 + $0x61] sm:$0xff]
      %v149 = vld [vmem:[%s111 + $0x71] sm:$0xff]
      %v150 = vmax.f32 %v134, %v142
      %v151 = vmax.f32 %v135, %v143
      %v152 = vmax.f32 %v136, %v144
      %v153 = vmax.f32 %v137, %v145
      %v154 = vmax.f32 %v138, %v146
      %v155 = vmax.f32 %v139, %v147
      %v156 = vmax.f32 %v140, %v148
      %v157 = vmax.f32 %v141, %v149
      %s158 = scalar_lea.vmem %s111, 288
      %v159 = vld [vmem:[%s158] sm:$0xff]
      %v160 = vld [vmem:[%s158 + $0x10] sm:$0xff]
      %v161 = vld [vmem:[%s158 + $0x20] sm:$0xff]
      %v162 = vld [vmem:[%s158 + $0x30] sm:$0xff]
      %v163 = vld [vmem:[%s158 + $0x40] sm:$0xff]
      %v164 = vld [vmem:[%s158 + $0x50] sm:$0xff]
      %v165 = vld [vmem:[%s158 + $0x60] sm:$0xff]
      %v166 = vld [vmem:[%s158 + $0x70] sm:$0xff]
      %v167 = vmax.f32 %v150, %v159
      %v168 = vmax.f32 %v151, %v160
      %v169 = vmax.f32 %v152, %v161
      %v170 = vmax.f32 %v153, %v162
      %v171 = vmax.f32 %v154, %v163
      %v172 = vmax.f32 %v155, %v164
      %v173 = vmax.f32 %v156, %v165
      %v174 = vmax.f32 %v157, %v166
      %s175 = scalar_lea.vmem %s111, 432
      %v176 = vld [vmem:[%s175] sm:$0xff]
      %v177 = vld [vmem:[%s175 + $0x10] sm:$0xff]
      %v178 = vld [vmem:[%s175 + $0x20] sm:$0xff]
      %v179 = vld [vmem:[%s175 + $0x30] sm:$0xff]
      %v180 = vld [vmem:[%s175 + $0x40] sm:$0xff]
      %v181 = vld [vmem:[%s175 + $0x50] sm:$0xff]
      %v182 = vld [vmem:[%s175 + $0x60] sm:$0xff]
      %v183 = vld [vmem:[%s175 + $0x70] sm:$0xff]
      %v184 = vmax.f32 %v167, %v176
      %v185 = vmax.f32 %v168, %v177
      %v186 = vmax.f32 %v169, %v178
      %v187 = vmax.f32 %v170, %v179
      %v188 = vmax.f32 %v171, %v180
      %v189 = vmax.f32 %v172, %v181
      %v190 = vmax.f32 %v173, %v182
      %v191 = vmax.f32 %v174, %v183
      %v192 = vld [vmem:[%s158 + $0x1] sm:$0xff]
      %v193 = vld [vmem:[%s158 + $0x11] sm:$0xff]
      %v194 = vld [vmem:[%s158 + $0x21] sm:$0xff]
      %v195 = vld [vmem:[%s158 + $0x31] sm:$0xff]
      %v196 = vld [vmem:[%s158 + $0x41] sm:$0xff]
      %v197 = vld [vmem:[%s158 + $0x51] sm:$0xff]
      %v198 = vld [vmem:[%s158 + $0x61] sm:$0xff]
      %v199 = vld [vmem:[%s158 + $0x71] sm:$0xff]
      %v200 = vmax.f32 %v184, %v192
      %v201 = vmax.f32 %v185, %v193
      %v202 = vmax.f32 %v186, %v194
      %v203 = vmax.f32 %v187, %v195
      %v204 = vmax.f32 %v188, %v196
      %v205 = vmax.f32 %v189, %v197
      %v206 = vmax.f32 %v190, %v198
      %v207 = vmax.f32 %v191, %v199
      %s208 = scalar_lea.vmem %s111, 16
      %v209 = vld [vmem:[%s208] sm:$0xff]
      %v210 = vld [vmem:[%s208 + $0x10] sm:$0xff]
      %v211 = vld [vmem:[%s208 + $0x20] sm:$0xff]
      %v212 = vld [vmem:[%s208 + $0x30] sm:$0xff]
      %v213 = vld [vmem:[%s208 + $0x40] sm:$0xff]
      %v214 = vld [vmem:[%s208 + $0x50] sm:$0xff]
      %v215 = vld [vmem:[%s208 + $0x60] sm:$0xff]
      %v216 = vld [vmem:[%s208 + $0x70] sm:$0xff]
      %v217 = vmax.f32 %v200, %v209
      %v218 = vmax.f32 %v201, %v210
      %v219 = vmax.f32 %v202, %v211
      %v220 = vmax.f32 %v203, %v212
      %v221 = vmax.f32 %v204, %v213
      %v222 = vmax.f32 %v205, %v214
      %v223 = vmax.f32 %v206, %v215
      %v224 = vmax.f32 %v207, %v216
      %s225 = scalar_lea.vmem %s111, 160
      %v226 = vld [vmem:[%s225] sm:$0xff]
      %v227 = vld [vmem:[%s225 + $0x10] sm:$0xff]
      %v228 = vld [vmem:[%s225 + $0x20] sm:$0xff]
      %v229 = vld [vmem:[%s225 + $0x30] sm:$0xff]
      %v230 = vld [vmem:[%s225 + $0x40] sm:$0xff]
      %v231 = vld [vmem:[%s225 + $0x50] sm:$0xff]
      %v232 = vld [vmem:[%s225 + $0x60] sm:$0xff]
      %v233 = vld [vmem:[%s225 + $0x70] sm:$0xff]
      %v234 = vmax.f32 %v217, %v226
      %v235 = vmax.f32 %v218, %v227
      %v236 = vmax.f32 %v219, %v228
      %v237 = vmax.f32 %v220, %v229
      %v238 = vmax.f32 %v221, %v230
      %v239 = vmax.f32 %v222, %v231
      %v240 = vmax.f32 %v223, %v232
      %v241 = vmax.f32 %v224, %v233
      %v242 = vld [vmem:[%s208 + $0x1] sm:$0xff]
      %v243 = vld [vmem:[%s208 + $0x11] sm:$0xff]
      %v244 = vld [vmem:[%s208 + $0x21] sm:$0xff]
      %v245 = vld [vmem:[%s208 + $0x31] sm:$0xff]
      %v246 = vld [vmem:[%s208 + $0x41] sm:$0xff]
      %v247 = vld [vmem:[%s208 + $0x51] sm:$0xff]
      %v248 = vld [vmem:[%s208 + $0x61] sm:$0xff]
      %v249 = vld [vmem:[%s208 + $0x71] sm:$0xff]
      %v250 = vmax.f32 %v234, %v242
      %v251 = vmax.f32 %v235, %v243
      %v252 = vmax.f32 %v236, %v244
      %v253 = vmax.f32 %v237, %v245
      %v254 = vmax.f32 %v238, %v246
      %v255 = vmax.f32 %v239, %v247
      %v256 = vmax.f32 %v240, %v248
      %v257 = vmax.f32 %v241, %v249
      %vm258 = vcmask 31744
      %259 = vst.msk [vmem:[%s116] sm:$0xff] %vm258, %v250
      %260 = vst.msk [vmem:[%s116 + $0x8] sm:$0xff] %vm258, %v251
      %261 = vst.msk [vmem:[%s116 + $0x10] sm:$0xff] %vm258, %v252
      %262 = vst.msk [vmem:[%s116 + $0x18] sm:$0xff] %vm258, %v253
      %263 = vst.msk [vmem:[%s116 + $0x20] sm:$0xff] %vm258, %v254
      %264 = vst.msk [vmem:[%s116 + $0x28] sm:$0xff] %vm258, %v255
      %265 = vst.msk [vmem:[%s116 + $0x30] sm:$0xff] %vm258, %v256
      %266 = vst.msk [vmem:[%s116 + $0x38] sm:$0xff] %vm258, %v257
      %p267 = scmp.lt.s32.totalorder %s12, 1
      %s268 = scalar_select %p267, %s12, 1
      %s269 = smul.addr %s268, 8
      %s270 = smul.addr %s269, 8
      %s271 = scalar_lea.vmem %s1, %s270
      // Predicated region
      $region25: #{inception_b_forward.9} parent=23 // pred_check
        %p272 = pneg %p56
      $region26: #{inception_b_forward.9} parent=23 // pred_check_branch
        %274 = sbr.rel (%p272) target = $region28
      $region27: #{inception_b_forward.9} parent=23 // pred_region
        _
      $region28: #{inception_b_forward.9} parent=23 // pred_fallthru
        _
    $region24: #{inception_b_forward.9} parent=5 // pred_fallthru
      _
    %p275 = scmp.le.s32.totalorder 2, %s7
    // Predicated region
    $region29: #{inception_b_forward.9} parent=5 // pred_check
      %p276 = pneg %p275
    $region30: #{inception_b_forward.9} parent=5 // pred_check_branch
      %278 = sbr.rel (%p276) target = $region32
    $region31: #{inception_b_forward.9} parent=5 // pred_region
      %s279 = ssub.s32 %s7, 2
      // Predicated region
      $region33: #{inception_b_forward.9} parent=31 // pred_check
        %p280 = pneg %p62
      $region34: #{inception_b_forward.9} parent=31 // pred_check_branch
        %282 = sbr.rel (%p280) target = $region36
      $region35: #{inception_b_forward.9} parent=31 // pred_region
        %p283 = scmp.lt.s32.totalorder %s13, 1
        %s284 = scalar_select %p283, %s13, 1
        %s285 = smul.addr %s284, 8
        %s286 = smul.addr %s285, 8
        %s287 = scalar_lea.vmem %s1, %s286
      $region36: #{inception_b_forward.9} parent=31 // pred_fallthru
        _
    $region32: #{inception_b_forward.9} parent=5 // pred_fallthru
      _
  $region6: #{inception_b_forward.9} parent=0 // loop_footer
    %s11 = sadd.s32 1, %s7
  $region7: #{inception_b_forward.9} parent=0 // loop_footer_branch
    %6 = sbr.rel target = $region3
  $region8: #{inception_b_forward.9} parent=0 // loop_exit
    _

</llo_original>
